<compile_context>
chip_gen: v5e
topology: v5e:2x2
jax: 0.10.0
libtpu: 0.0.40
codegen_flags: <defaults>
</compile_context>

<pallas_src>
import functools

import jax
import jax.numpy as jnp
from jax.experimental import pallas as pl
from jax.experimental.pallas import tpu as pltpu


# ----------------------------------------------------------------------------- #
# Small helpers
# ----------------------------------------------------------------------------- #
def _round_up(x, m):
    return (x + m - 1) // m * m


@functools.lru_cache(maxsize=None)
def _vmem_cap_bytes():
    """~75% of physical VMEM (compiler headroom): ~96 MiB v5e/v6e, ~48 MiB v7x."""
    phys = 64 * 1024 * 1024                     # conservative default (v7x is smallest)
    try:
        info = pltpu.get_tpu_info()
        cap = int(getattr(info, "vmem_capacity_bytes", 0))
        if cap >= 32 * 1024 * 1024:
            phys = cap
    except Exception:
        pass
    return phys * 3 // 4


def _vmem_limit(requested_bytes):
    """Never below the 32 MiB default scoped limit, never above ~75% of physical."""
    return int(min(max(requested_bytes, 32 * 1024 * 1024), _vmem_cap_bytes()))


def _sigmoid(x):
    # One EUP push (tanh) per gate instead of exp + reciprocal.
    return 0.5 * (jnp.tanh(0.5 * x) + 1.0)


def _pad_gate_weight(w, d_pad, h_pad):
    """(d_in, 4H) with gate blocks [i|f|g|o] -> (d_pad, 4*h_pad), zero padded per gate."""
    d_in, four_h = w.shape
    h = four_h // 4
    w = w.reshape(d_in, 4, h)
    w = jnp.pad(w, ((0, d_pad - d_in), (0, 0), (0, h_pad - h)))
    return w.reshape(d_pad, 4 * h_pad)


def _pad_gate_bias(b, h_pad):
    """(1, 4H) -> (1, 4*h_pad), zero padded per gate."""
    h = b.shape[-1] // 4
    b = b.reshape(4, h)
    b = jnp.pad(b, ((0, 0), (0, h_pad - h)))
    return b.reshape(1, 4 * h_pad)


def _pick_batch_blocking(b):
    """Returns (b_pad, b_block).  Batch rows pad to sublane multiples; when there
    is enough batch, split into >=2 blocks so the 'parallel' batch axis can be
    sharded across v7x's two TensorCores (single-core chips pay only a small
    MXU M-underfill).  b_block is capped at 128 (256 on v6e/v7x is a possible
    further tweak, kept generation-neutral here)."""
    if b > 128:
        return _round_up(b, 128), 128
    b_pad = _round_up(b, 8)
    if b_pad >= 16:
        half = _round_up(b_pad // 2, 8)
        while b_pad % half:
            half -= 8
        return b_pad, max(half, 8)
    return b_pad, b_pad


def _pick_t_chunk(t, hp, b_block, cap_bytes, max_chunk=16):
    """Timesteps per grid step (amortizes ~0.35us/step grid overhead and makes
    the seq writeback lane/sublane dense).  Shrunk if a double-buffered chunk
    plus the resident W_hh would overflow the VMEM budget (matters for very
    large H on v7x)."""
    tc = min(max_chunk, t)
    whh_bytes = 2 * hp * 4 * hp * 2            # double-buffered bf16 W_hh
    carry_bytes = b_block * hp * (2 + 4)       # bf16 h + f32 c
    while tc > 1:
        chunk_bytes = 2 * tc * b_block * (4 * hp + hp) * 2   # xp + seq, bf16, 2 bufs
        if whh_bytes + chunk_bytes + carry_bytes + (2 << 20) <= cap_bytes:
            break
        tc //= 2
    return max(tc, 1)


# ----------------------------------------------------------------------------- #
# Pallas kernels
# ----------------------------------------------------------------------------- #
def _matmul_bias_kernel(x_ref, w_ref, b_ref, o_ref):
    acc = jnp.dot(x_ref[...], w_ref[...], preferred_element_type=jnp.float32)
    o_ref[...] = (acc + b_ref[...]).astype(o_ref.dtype)


def _lstm_recurrent_kernel(xp_ref, whh_ref, seq_ref, hfin_ref, h_scr, c_scr,
                           *, t_true, t_pad):
    """One grid step == one chunk of timesteps for one batch block.

    xp_ref  : (Tc, Bblk, 4Hp) bf16  precomputed x @ W_ih + b for this chunk
    whh_ref : (Hp, 4Hp)       bf16  resident weight (constant block index -> one DMA/core)
    seq_ref : (Tc, Bblk, Hp)  bf16  hidden-sequence output (feeds next layer)
    hfin_ref: (Bblk, Hp)      f32   revisited block -> final hidden state
    h_scr   : (Bblk, Hp)      bf16  h carry (only consumed as bf16 MXU operand)
    c_scr   : (Bblk, Hp)      f32   c carry
    """
    ti = pl.program_id(1)

    @pl.when(ti == 0)
    def _():
        # Reset the carries at the start of every batch block's time sweep.
        h_scr[...] = jnp.zeros_like(h_scr)
        c_scr[...] = jnp.zeros_like(c_scr)

    tc = xp_ref.shape[0]           # static chunk length
    blk = xp_ref.shape[1]          # static batch-block rows
    hp = c_scr.shape[-1]           # static padded hidden size (multiple of 128)
    w_hh = whh_ref[...]            # (Hp, 4Hp) bf16, loop-invariant, resident

    n_chunks = t_pad // tc                      # static
    valid_in_last = t_true - (n_chunks - 1) * tc  # static: real steps in last chunk
    if valid_in_last < tc:
        # Padded tail steps only exist in the last time chunk; freeze carries there.
        live_tail = jnp.full((blk, hp), ti, jnp.int32) != (n_chunks - 1)

    h = h_scr[...]                 # bf16
    c = c_scr[...]                 # f32
    # Fully unrolled chunk (tc is a Python int): static ref indices, dense
    # per-chunk writeback, LLO gets the whole chunk to schedule.
    for k in range(tc):
        gates = xp_ref[k].astype(jnp.float32) + jnp.dot(
            h, w_hh, preferred_element_type=jnp.float32)
        # TODO(synk): if bundle dumps show spills at very large Hp, split the
        # recurrent dot per gate so only one (B, Hp) gate block is live at a time.
        i_g = _sigmoid(gates[:, 0 * hp:1 * hp])   # lane-aligned slices (Hp % 128 == 0)
        f_g = _sigmoid(gates[:, 1 * hp:2 * hp])
        g_g = jnp.tanh(gates[:, 2 * hp:3 * hp])
        o_g = _sigmoid(gates[:, 3 * hp:4 * hp])
        c_new = f_g * c + i_g * g_g
        h_new = (o_g * jnp.tanh(c_new)).astype(jnp.bfloat16)
        if k < valid_in_last:
            # Real timestep in every chunk.
            c, h = c_new, h_new
        else:
            # Real timestep only when this is not the padded last chunk.
            c = jnp.where(live_tail, c_new, c)
            h = jnp.where(live_tail, h_new, h)
        seq_ref[k] = h.astype(seq_ref.dtype)

    h_scr[...] = h
    c_scr[...] = c

    @pl.when(ti == n_chunks - 1)
    def _():
        # Revisited output block (index map constant along the time axis):
        # written once per batch block, after the last chunk == final hidden.
        hfin_ref[...] = h.astype(hfin_ref.dtype)


# ----------------------------------------------------------------------------- #
# Wrappers
# ----------------------------------------------------------------------------- #
def matmul_bias_pallas(x, w, b, out_dtype, *, tm_cap=512, tn_cap=1024):
    """x: (M, K); w: (K, N); b: (1, N) f32 -> (M, N) out_dtype.

    Tiled over M (<=512 rows) and N (<=1024 lanes), both 'parallel'; K is kept
    whole (at most the padded hidden size for this model).  M is padded to the
    tile size so realistic T*B row counts pipeline through VMEM.
    """
    m, k = x.shape
    n = w.shape[1]
    assert n % 128 == 0 and b.shape == (1, n)

    if m > tm_cap:
        tm = tm_cap
        m_pad = _round_up(m, tm)
    else:
        m_pad = _round_up(m, 8)
        tm = m_pad
    if m_pad != m:
        x = jnp.pad(x, ((0, m_pad - m), (0, 0)))

    if n <= tn_cap:
        tn = n
    else:
        tn = next(c for c in (1024, 512, 256, 128) if n % c == 0)

    out_size = jnp.dtype(out_dtype).itemsize
    vmem_req = (2 * (tm * k * x.dtype.itemsize + k * tn * w.dtype.itemsize + tn * 4)
                + 2 * tm * tn * out_size + tm * tn * 4)

    out = pl.pallas_call(
        _matmul_bias_kernel,
        out_shape=jax.ShapeDtypeStruct((m_pad, n), out_dtype),
        grid=(m_pad // tm, n // tn),
        in_specs=[
            pl.BlockSpec((tm, k), lambda i, j: (i, 0)),
            pl.BlockSpec((k, tn), lambda i, j: (0, j)),
            pl.BlockSpec((1, tn), lambda i, j: (0, j)),
        ],
        out_specs=pl.BlockSpec((tm, tn), lambda i, j: (i, j)),
        compiler_params=pltpu.CompilerParams(
            dimension_semantics=("parallel", "parallel"),
            vmem_limit_bytes=_vmem_limit(int(vmem_req * 1.5) + (2 << 20)),
        ),
        cost_estimate=pl.CostEstimate(
            flops=2 * m_pad * k * n,
            transcendentals=0,
            bytes_accessed=(m_pad * k * x.dtype.itemsize + k * n * w.dtype.itemsize
                            + n * 4 + m_pad * n * out_size),
        ),
    )(x, w, b)
    return out[:m] if m_pad != m else out


def lstm_recurrent_pallas(x_proj, w_hh, *, t_true, t_chunk, b_block):
    """x_proj: (T_pad, B_pad, 4Hp) bf16 (already x@W_ih + b); w_hh: (Hp, 4Hp) bf16.
    Returns (hidden sequence (T_pad, B_pad, Hp) bf16, final hidden (B_pad, Hp) f32)."""
    t_pad, b_pad, four_hp = x_proj.shape
    hp = four_hp // 4
    assert t_pad % t_chunk == 0 and b_pad % b_block == 0 and t_true <= t_pad
    n_bblk = b_pad // b_block
    n_chunks = t_pad // t_chunk

    # Explicit VMEM budget: double-buffered pipeline buffers + scratch carries,
    # capped well below physical VMEM of the smallest generation (v7x: 64 MiB).
    bytes_whh = 2 * hp * four_hp * 2
    bytes_xp = 2 * t_chunk * b_block * four_hp * 2
    bytes_seq = 2 * t_chunk * b_block * hp * 2
    bytes_hfin = 2 * b_block * hp * 4
    bytes_scr = b_block * hp * (2 + 4)
    budget = bytes_whh + bytes_xp + bytes_seq + bytes_hfin + bytes_scr

    kernel = functools.partial(_lstm_recurrent_kernel, t_true=t_true, t_pad=t_pad)

    return pl.pallas_call(
        kernel,
        out_shape=(
            jax.ShapeDtypeStruct((t_pad, b_pad, hp), jnp.bfloat16),
            jax.ShapeDtypeStruct((b_pad, hp), jnp.float32),
        ),
        grid_spec=pltpu.PrefetchScalarGridSpec(
            num_scalar_prefetch=0,
            grid=(n_bblk, n_chunks),
            in_specs=[
                pl.BlockSpec((t_chunk, b_block, four_hp),
                             lambda bi, ti: (ti, bi, 0)),
                # W_hh: constant block index -> fetched once per core by the
                # pipeline, resident for the whole grid (no per-block reload).
                pl.BlockSpec((hp, four_hp), lambda bi, ti: (0, 0)),
            ],
            out_specs=[
                pl.BlockSpec((t_chunk, b_block, hp), lambda bi, ti: (ti, bi, 0)),
                pl.BlockSpec((b_block, hp), lambda bi, ti: (bi, 0)),
            ],
            scratch_shapes=[
                pltpu.VMEM((b_block, hp), jnp.bfloat16),   # h carry (bf16 MXU operand)
                pltpu.VMEM((b_block, hp), jnp.float32),    # c carry
            ],
        ),
        compiler_params=pltpu.CompilerParams(
            # batch blocks are independent (megacore shardable on v7x);
            # the time axis is a serial recurrence.
            dimension_semantics=("parallel", "arbitrary"),
            vmem_limit_bytes=_vmem_limit(int(budget * 1.5) + (4 << 20)),
        ),
        cost_estimate=pl.CostEstimate(
            flops=2 * t_pad * b_pad * hp * four_hp,
            transcendentals=5 * t_pad * b_pad * hp,
            bytes_accessed=(t_pad * b_pad * four_hp * 2 + hp * four_hp * 2
                            + t_pad * b_pad * hp * 2 + b_pad * hp * 4),
        ),
    )(x_proj, w_hh)


# ----------------------------------------------------------------------------- #
# Parameters
# ----------------------------------------------------------------------------- #
def init_params(key, num_classes, input_size, hidden_size, num_layers):
    """Uniform(-1/sqrt(H), 1/sqrt(H)) init, PyTorch layout (combined bias)."""
    bound = 1.0 / jnp.sqrt(jnp.float32(hidden_size))
    params = {"lstm": [], "fc": None}
    for layer in range(num_layers):
        d_in = input_size if layer == 0 else hidden_size
        key, k1, k2, k3, k4 = jax.random.split(key, 5)
        w_ih = jax.random.uniform(k1, (d_in, 4 * hidden_size), jnp.float32, -bound, bound)
        w_hh = jax.random.uniform(k2, (hidden_size, 4 * hidden_size), jnp.float32, -bound, bound)
        b_ih = jax.random.uniform(k3, (4 * hidden_size,), jnp.float32, -bound, bound)
        b_hh = jax.random.uniform(k4, (4 * hidden_size,), jnp.float32, -bound, bound)
        params["lstm"].append((w_ih, w_hh, (b_ih + b_hh).reshape(1, -1)))
    key, k1, k2 = jax.random.split(key, 3)
    w_fc = jax.random.uniform(k1, (hidden_size, num_classes), jnp.float32, -bound, bound)
    b_fc = jax.random.uniform(k2, (num_classes,), jnp.float32, -bound, bound).reshape(1, -1)
    params["fc"] = (w_fc, b_fc)
    return params


def prepare_kernel_params(params):
    """Pad to lane-aligned kernel layout (H -> multiple of 128, per-gate) and
    cast matmul weights to bf16; biases stay f32."""
    lstm_p = []
    for idx, (w_ih, w_hh, b) in enumerate(params["lstm"]):
        h = w_hh.shape[0]
        hp = _round_up(h, 128)
        d_in = w_ih.shape[0]
        d_pad = d_in if idx == 0 else hp      # layer>0 input is the padded hidden seq
        lstm_p.append((
            _pad_gate_weight(w_ih, d_pad, hp).astype(jnp.bfloat16),
            _pad_gate_weight(w_hh, hp, hp).astype(jnp.bfloat16),
            _pad_gate_bias(b, hp).astype(jnp.float32),
        ))
    w_fc, b_fc = params["fc"]
    h, c = w_fc.shape
    hp = _round_up(h, 128)
    cp = _round_up(c, 128)
    w_fc_p = jnp.pad(w_fc, ((0, hp - h), (0, cp - c))).astype(jnp.float32)
    b_fc_p = jnp.pad(b_fc, ((0, 0), (0, cp - c))).astype(jnp.float32)
    return {"lstm": lstm_p, "fc": (w_fc_p, b_fc_p)}


# ----------------------------------------------------------------------------- #
# Forward pass (mirrors LSTM.forward: fc(h_out.view(-1, H)) -> (L*B, C))
# ----------------------------------------------------------------------------- #
@functools.partial(jax.jit, static_argnames=("num_classes",))
def lstm_forward(x_btd, kparams, *, num_classes):
    b, t, _ = x_btd.shape
    hp = kparams["lstm"][0][1].shape[0]                          # padded hidden size
    b_pad, b_block = _pick_batch_blocking(b)
    t_chunk = _pick_t_chunk(t, hp, b_block, _vmem_cap_bytes())
    t_pad = _round_up(t, t_chunk)

    # time-major, sublane-padded batch, chunk-padded time, bf16 activations
    x = jnp.transpose(x_btd, (1, 0, 2)).astype(jnp.bfloat16)     # (T, B, D)
    x = jnp.pad(x, ((0, t_pad - t), (0, b_pad - b), (0, 0)))     # (T_pad, B_pad, D)

    layer_in = x
    h_finals = []
    for (w_ih, w_hh, bias) in kparams["lstm"]:
        tt, bp, d_in = layer_in.shape
        # Hoisted input projection: one big tiled MXU matmul over all T*B rows.
        xp = matmul_bias_pallas(layer_in.reshape(tt * bp, d_in), w_ih, bias,
                                jnp.bfloat16)
        xp = xp.reshape(tt, bp, -1)                              # (T_pad, B_pad, 4Hp)
        seq, h_fin = lstm_recurrent_pallas(
            xp, w_hh, t_true=t, t_chunk=t_chunk, b_block=b_block)
        h_finals.append(h_fin)                                   # (B_pad, Hp) f32
        layer_in = seq                                           # (T_pad, B_pad, Hp) bf16

    h_out = jnp.stack(h_finals, axis=0)                          # (L, B_pad, Hp)
    n_layers = h_out.shape[0]
    h_flat = h_out.reshape(n_layers * b_pad, -1)                 # (L*B_pad, Hp)

    w_fc, b_fc = kparams["fc"]
    out_p = matmul_bias_pallas(h_flat, w_fc, b_fc, jnp.float32)  # (L*B_pad, Cp)
    cp = out_p.shape[-1]
    out = out_p.reshape(n_layers, b_pad, cp)[:, :b, :num_classes]
    return out.reshape(n_layers * b, num_classes)


# ----------------------------------------------------------------------------- #
# Pure-JAX reference mimicking the kernel's dtype strategy (correctness check)
# ----------------------------------------------------------------------------- #
def lstm_forward_ref(x_btd, kparams, *, num_classes):
    b, t, _ = x_btd.shape
    x = jnp.transpose(x_btd, (1, 0, 2)).astype(jnp.bfloat16)     # (T, B, D), no padding
    layer_in = x
    h_finals = []
    for (w_ih, w_hh, bias) in kparams["lstm"]:
        tt, bb, d_in = layer_in.shape
        hp = w_hh.shape[0]
        xp = (jnp.dot(layer_in.reshape(tt * bb, d_in), w_ih,
                      preferred_element_type=jnp.float32) + bias)
        xp = xp.astype(jnp.bfloat16).reshape(tt, bb, 4 * hp)
        h = jnp.zeros((bb, hp), jnp.bfloat16)
        c = jnp.zeros((bb, hp), jnp.float32)
        outs = []
        for ti in range(tt):
            gates = xp[ti].astype(jnp.float32) + jnp.dot(
                h, w_hh, preferred_element_type=jnp.float32)
            i_g = _sigmoid(gates[:, 0 * hp:1 * hp])
            f_g = _sigmoid(gates[:, 1 * hp:2 * hp])
            g_g = jnp.tanh(gates[:, 2 * hp:3 * hp])
            o_g = _sigmoid(gates[:, 3 * hp:4 * hp])
            c = f_g * c + i_g * g_g
            h = (o_g * jnp.tanh(c)).astype(jnp.bfloat16)
            outs.append(h)
        h_finals.append(h.astype(jnp.float32))
        layer_in = jnp.stack(outs, axis=0)
    h_out = jnp.stack(h_finals, axis=0)                          # (L, B, Hp)
    n_layers = h_out.shape[0]
    h_flat = h_out.reshape(n_layers * b, -1)
    w_fc, b_fc = kparams["fc"]
    out_p = jnp.dot(h_flat, w_fc, preferred_element_type=jnp.float32) + b_fc
    return out_p[:, :num_classes]


# ----------------------------------------------------------------------------- #
if __name__ == "__main__":
    def run_case(num_classes, input_size, hidden_size, num_layers, seq_length,
                 batch, seed):
        key = jax.random.PRNGKey(seed)
        key, kx, kp = jax.random.split(key, 3)
        x = jax.random.normal(kx, (batch, seq_length, input_size), jnp.float32)
        params = init_params(kp, num_classes, input_size, hidden_size, num_layers)
        kparams = prepare_kernel_params(params)

        out = jax.block_until_ready(lstm_forward(x, kparams, num_classes=num_classes))
        assert out.shape == (num_layers * batch, num_classes), out.shape

        ref = lstm_forward_ref(x, kparams, num_classes=num_classes)
        err = float(jnp.max(jnp.abs(out - ref)))
        assert jnp.allclose(out, ref, atol=3e-2, rtol=3e-2), f"max abs err {err}"

    # Shapes consistent with LSTM(num_classes, input_size, hidden, layers, seq).
    run_case(num_classes=4, input_size=8, hidden_size=32, num_layers=2,
             seq_length=8, batch=2, seed=0)
    # Second config exercises time-chunk padding (T=20 -> one chunk of 16 plus a
    # masked tail) and multiple batch blocks (B_pad=24 -> 3 blocks of 8).
    run_case(num_classes=4, input_size=8, hidden_size=32, num_layers=2,
             seq_length=20, batch=18, seed=1)

    print("KERNEL_OK")
</pallas_src>

<mosaic_0001>
module attributes {stable_mosaic.version = 11 : i64} {
  func.func @_matmul_bias_kernel(%arg0: i32, %arg1: i32, %arg2: memref<64x8xbf16, #tpu.memory_space<vmem>>, %arg3: memref<8x512xbf16, #tpu.memory_space<vmem>>, %arg4: memref<1x512xf32, #tpu.memory_space<vmem>>, %arg5: memref<64x512xbf16, #tpu.memory_space<vmem>>) attributes {dimension_semantics = [#tpu.dimension_semantics<parallel>, #tpu.dimension_semantics<parallel>], iteration_bounds = array<i64: 1, 1>, scalar_prefetch = 0 : i64, scratch_operands = 0 : i64, tpu.core_type = #tpu.core_type<tc>, window_params = [{transform_indices = @transform_0, window_bounds = array<i64: 64, 8>}, {transform_indices = @transform_1, window_bounds = array<i64: 8, 512>}, {transform_indices = @transform_2, window_bounds = array<i64: 1, 512>}, {transform_indices = @transform_3, window_bounds = array<i64: 64, 512>}]} {
    %c0 = arith.constant 0 : index
    %c0_0 = arith.constant 0 : index
    %0 = vector.load %arg2[%c0, %c0_0] : memref<64x8xbf16, #tpu.memory_space<vmem>>, vector<64x8xbf16>
    %c0_1 = arith.constant 0 : index
    %c0_2 = arith.constant 0 : index
    %1 = vector.load %arg3[%c0_1, %c0_2] : memref<8x512xbf16, #tpu.memory_space<vmem>>, vector<8x512xbf16>
    %cst = arith.constant dense<0.000000e+00> : vector<64x512xf32>
    %2 = tpu.matmul %0, %1, %cst {dimension_numbers = #tpu.dot_dimension_numbers<[1], [0], [0], [1], [0, 0, 1, 1], [], []>} : vector<64x8xbf16>, vector<8x512xbf16>, vector<64x512xf32> -> vector<64x512xf32>
    %c0_3 = arith.constant 0 : index
    %c0_4 = arith.constant 0 : index
    %3 = vector.load %arg4[%c0_3, %c0_4] : memref<1x512xf32, #tpu.memory_space<vmem>>, vector<1x512xf32>
    %4 = vector.broadcast %3 : vector<1x512xf32> to vector<64x512xf32>
    %5 = arith.addf %2, %4 : vector<64x512xf32>
    %6 = arith.truncf %5 : vector<64x512xf32> to vector<64x512xbf16>
    %c0_5 = arith.constant 0 : index
    %c0_6 = arith.constant 0 : index
    %7 = vector.load %arg5[%c0_5, %c0_6] : memref<64x512xbf16, #tpu.memory_space<vmem>>, vector<64x512xbf16>
    tpu.vector_store %arg5[%c0_5, %c0_6], %6 {strides = array<i32>} : memref<64x512xbf16, #tpu.memory_space<vmem>>, vector<64x512xbf16>,
    return
  }
  func.func @transform_0(%arg0: i32, %arg1: i32) -> (i32, i32) {
    %c0_i32 = arith.constant 0 : i32
    %c0_i32_0 = arith.constant 0 : i32
    return %arg0, %c0_i32 : i32, i32
  }
  func.func @transform_1(%arg0: i32, %arg1: i32) -> (i32, i32) {
    %c0_i32 = arith.constant 0 : i32
    %c0_i32_0 = arith.constant 0 : i32
    return %c0_i32, %arg1 : i32, i32
  }
  func.func @transform_2(%arg0: i32, %arg1: i32) -> (i32, i32) {
    %c0_i32 = arith.constant 0 : i32
    %c0_i32_0 = arith.constant 0 : i32
    return %c0_i32, %arg1 : i32, i32
  }
  func.func @transform_3(%arg0: i32, %arg1: i32) -> (i32, i32) {
    %c0_i32 = arith.constant 0 : i32
    return %arg0, %arg1 : i32, i32
  }
}

module attributes {stable_mosaic.version = 11 : i64} {
  func.func @_matmul_bias_kernel(%arg0: i32, %arg1: i32, %arg2: memref<64x128xbf16, #tpu.memory_space<vmem>>, %arg3: memref<128x512xbf16, #tpu.memory_space<vmem>>, %arg4: memref<1x512xf32, #tpu.memory_space<vmem>>, %arg5: memref<64x512xbf16, #tpu.memory_space<vmem>>) attributes {dimension_semantics = [#tpu.dimension_semantics<parallel>, #tpu.dimension_semantics<parallel>], iteration_bounds = array<i64: 1, 1>, scalar_prefetch = 0 : i64, scratch_operands = 0 : i64, tpu.core_type = #tpu.core_type<tc>, window_params = [{transform_indices = @transform_0, window_bounds = array<i64: 64, 128>}, {transform_indices = @transform_1, window_bounds = array<i64: 128, 512>}, {transform_indices = @transform_2, window_bounds = array<i64: 1, 512>}, {transform_indices = @transform_3, window_bounds = array<i64: 64, 512>}]} {
    %c0 = arith.constant 0 : index
    %c0_0 = arith.constant 0 : index
    %0 = vector.load %arg2[%c0, %c0_0] : memref<64x128xbf16, #tpu.memory_space<vmem>>, vector<64x128xbf16>
    %c0_1 = arith.constant 0 : index
    %c0_2 = arith.constant 0 : index
    %1 = vector.load %arg3[%c0_1, %c0_2] : memref<128x512xbf16, #tpu.memory_space<vmem>>, vector<128x512xbf16>
    %cst = arith.constant dense<0.000000e+00> : vector<64x512xf32>
    %2 = tpu.matmul %0, %1, %cst {dimension_numbers = #tpu.dot_dimension_numbers<[1], [0], [0], [1], [0, 0, 1, 1], [], []>} : vector<64x128xbf16>, vector<128x512xbf16>, vector<64x512xf32> -> vector<64x512xf32>
    %c0_3 = arith.constant 0 : index
    %c0_4 = arith.constant 0 : index
    %3 = vector.load %arg4[%c0_3, %c0_4] : memref<1x512xf32, #tpu.memory_space<vmem>>, vector<1x512xf32>
    %4 = vector.broadcast %3 : vector<1x512xf32> to vector<64x512xf32>
    %5 = arith.addf %2, %4 : vector<64x512xf32>
    %6 = arith.truncf %5 : vector<64x512xf32> to vector<64x512xbf16>
    %c0_5 = arith.constant 0 : index
    %c0_6 = arith.constant 0 : index
    %7 = vector.load %arg5[%c0_5, %c0_6] : memref<64x512xbf16, #tpu.memory_space<vmem>>, vector<64x512xbf16>
    tpu.vector_store %arg5[%c0_5, %c0_6], %6 {strides = array<i32>} : memref<64x512xbf16, #tpu.memory_space<vmem>>, vector<64x512xbf16>,
    return
  }
  func.func @transform_0(%arg0: i32, %arg1: i32) -> (i32, i32) {
    %c0_i32 = arith.constant 0 : i32
    %c0_i32_0 = arith.constant 0 : i32
    return %arg0, %c0_i32 : i32, i32
  }
  func.func @transform_1(%arg0: i32, %arg1: i32) -> (i32, i32) {
    %c0_i32 = arith.constant 0 : i32
    %c0_i32_0 = arith.constant 0 : i32
    return %c0_i32, %arg1 : i32, i32
  }
  func.func @transform_2(%arg0: i32, %arg1: i32) -> (i32, i32) {
    %c0_i32 = arith.constant 0 : i32
    %c0_i32_0 = arith.constant 0 : i32
    return %c0_i32, %arg1 : i32, i32
  }
  func.func @transform_3(%arg0: i32, %arg1: i32) -> (i32, i32) {
    %c0_i32 = arith.constant 0 : i32
    return %arg0, %arg1 : i32, i32
  }
}

module attributes {stable_mosaic.version = 11 : i64} {
  func.func @_lstm_recurrent_kernel(%arg0: i32, %arg1: i32, %arg2: memref<8x8x512xbf16, #tpu.memory_space<vmem>>, %arg3: memref<128x512xbf16, #tpu.memory_space<vmem>>, %arg4: memref<8x8x128xbf16, #tpu.memory_space<vmem>>, %arg5: memref<8x128xf32, #tpu.memory_space<vmem>>, %arg6: memref<8x128xbf16, #tpu.memory_space<vmem>>, %arg7: memref<8x128xf32, #tpu.memory_space<vmem>>) attributes {dimension_semantics = [#tpu.dimension_semantics<parallel>, #tpu.dimension_semantics<arbitrary>], iteration_bounds = array<i64: 1, 1>, scalar_prefetch = 0 : i64, scratch_operands = 2 : i64, tpu.core_type = #tpu.core_type<tc>, window_params = [{transform_indices = @transform_0, window_bounds = array<i64: 8, 8, 512>}, {pipeline_mode = #tpu.pipeline_mode<synchronous>, transform_indices = @transform_1, window_bounds = array<i64: 128, 512>}, {transform_indices = @transform_2, window_bounds = array<i64: 8, 8, 128>}, {transform_indices = @transform_3, window_bounds = array<i64: 8, 128>}]} {
    %c0_i32 = arith.constant 0 : i32
    %0 = arith.cmpi eq, %arg1, %c0_i32 : i32
    %1 = arith.extui %0 : i1 to i32
    %c0_i32_0 = arith.constant 0 : i32
    %2 = arith.cmpi ne, %1, %c0_i32_0 : i32
    scf.if %2 {
      %cst_132 = arith.constant 0.000000e+00 : bf16
      %331 = vector.broadcast %cst_132 : bf16 to vector<8x128xbf16>
      %c0_133 = arith.constant 0 : index
      %c0_134 = arith.constant 0 : index
      %332 = vector.load %arg6[%c0_133, %c0_134] : memref<8x128xbf16, #tpu.memory_space<vmem>>, vector<8x128xbf16>
      tpu.vector_store %arg6[%c0_133, %c0_134], %331 {strides = array<i32>} : memref<8x128xbf16, #tpu.memory_space<vmem>>, vector<8x128xbf16>,
      %cst_135 = arith.constant 0.000000e+00 : f32
      %333 = vector.broadcast %cst_135 : f32 to vector<8x128xf32>
      %c0_136 = arith.constant 0 : index
      %c0_137 = arith.constant 0 : index
      %334 = vector.load %arg7[%c0_136, %c0_137] : memref<8x128xf32, #tpu.memory_space<vmem>>, vector<8x128xf32>
      tpu.vector_store %arg7[%c0_136, %c0_137], %333 {strides = array<i32>} : memref<8x128xf32, #tpu.memory_space<vmem>>, vector<8x128xf32>,
    } else {
    }
    %c0 = arith.constant 0 : index
    %c0_1 = arith.constant 0 : index
    %3 = vector.load %arg3[%c0, %c0_1] : memref<128x512xbf16, #tpu.memory_space<vmem>>, vector<128x512xbf16>
    %c0_2 = arith.constant 0 : index
    %c0_3 = arith.constant 0 : index
    %4 = vector.load %arg6[%c0_2, %c0_3] : memref<8x128xbf16, #tpu.memory_space<vmem>>, vector<8x128xbf16>
    %c0_4 = arith.constant 0 : index
    %c0_5 = arith.constant 0 : index
    %5 = vector.load %arg7[%c0_4, %c0_5] : memref<8x128xf32, #tpu.memory_space<vmem>>, vector<8x128xf32>
    %c0_6 = arith.constant 0 : index
    %c0_7 = arith.constant 0 : index
    %c0_8 = arith.constant 0 : index
    %6 = vector.load %arg2[%c0_6, %c0_7, %c0_8] : memref<8x8x512xbf16, #tpu.memory_space<vmem>>, vector<1x8x512xbf16>
    %7 = vector.shape_cast %6 : vector<1x8x512xbf16> to vector<8x512xbf16>
    %8 = arith.extf %7 : vector<8x512xbf16> to vector<8x512xf32>
    %cst = arith.constant dense<0.000000e+00> : vector<8x512xf32>
    %9 = tpu.matmul %4, %3, %cst {dimension_numbers = #tpu.dot_dimension_numbers<[1], [0], [0], [1], [0, 0, 1, 1], [], []>} : vector<8x128xbf16>, vector<128x512xbf16>, vector<8x512xf32> -> vector<8x512xf32>
    %10 = arith.addf %8, %9 : vector<8x512xf32>
    %11 = vector.extract_strided_slice %10 {offsets = [0, 0], sizes = [8, 128], strides = [1, 1]} : vector<8x512xf32> to vector<8x128xf32>
    %cst_9 = arith.constant 5.000000e-01 : f32
    %12 = vector.broadcast %cst_9 : f32 to vector<8x128xf32>
    %13 = arith.mulf %12, %11 : vector<8x128xf32>
    %14 = math.tanh %13 : vector<8x128xf32>
    %cst_10 = arith.constant 1.000000e+00 : f32
    %15 = vector.broadcast %cst_10 : f32 to vector<8x128xf32>
    %16 = arith.addf %14, %15 : vector<8x128xf32>
    %cst_11 = arith.constant 5.000000e-01 : f32
    %17 = vector.broadcast %cst_11 : f32 to vector<8x128xf32>
    %18 = arith.mulf %17, %16 : vector<8x128xf32>
    %19 = vector.extract_strided_slice %10 {offsets = [0, 128], sizes = [8, 128], strides = [1, 1]} : vector<8x512xf32> to vector<8x128xf32>
    %cst_12 = arith.constant 5.000000e-01 : f32
    %20 = vector.broadcast %cst_12 : f32 to vector<8x128xf32>
    %21 = arith.mulf %20, %19 : vector<8x128xf32>
    %22 = math.tanh %21 : vector<8x128xf32>
    %cst_13 = arith.constant 1.000000e+00 : f32
    %23 = vector.broadcast %cst_13 : f32 to vector<8x128xf32>
    %24 = arith.addf %22, %23 : vector<8x128xf32>
    %cst_14 = arith.constant 5.000000e-01 : f32
    %25 = vector.broadcast %cst_14 : f32 to vector<8x128xf32>
    %26 = arith.mulf %25, %24 : vector<8x128xf32>
    %27 = vector.extract_strided_slice %10 {offsets = [0, 256], sizes = [8, 128], strides = [1, 1]} : vector<8x512xf32> to vector<8x128xf32>
    %28 = math.tanh %27 : vector<8x128xf32>
    %29 = vector.extract_strided_slice %10 {offsets = [0, 384], sizes = [8, 128], strides = [1, 1]} : vector<8x512xf32> to vector<8x128xf32>
    %cst_15 = arith.constant 5.000000e-01 : f32
    %30 = vector.broadcast %cst_15 : f32 to vector<8x128xf32>
    %31 = arith.mulf %30, %29 : vector<8x128xf32>
    %32 = math.tanh %31 : vector<8x128xf32>
    %cst_16 = arith.constant 1.000000e+00 : f32
    %33 = vector.broadcast %cst_16 : f32 to vector<8x128xf32>
    %34 = arith.addf %32, %33 : vector<8x128xf32>
    %cst_17 = arith.constant 5.000000e-01 : f32
    %35 = vector.broadcast %cst_17 : f32 to vector<8x128xf32>
    %36 = arith.mulf %35, %34 : vector<8x128xf32>
    %37 = arith.mulf %26, %5 : vector<8x128xf32>
    %38 = arith.mulf %18, %28 : vector<8x128xf32>
    %39 = arith.addf %37, %38 : vector<8x128xf32>
    %40 = math.tanh %39 : vector<8x128xf32>
    %41 = arith.mulf %36, %40 : vector<8x128xf32>
    %42 = arith.truncf %41 : vector<8x128xf32> to vector<8x128xbf16>
    %c0_18 = arith.constant 0 : index
    %c0_19 = arith.constant 0 : index
    %c0_20 = arith.constant 0 : index
    %43 = vector.load %arg4[%c0_18, %c0_19, %c0_20] : memref<8x8x128xbf16, #tpu.memory_space<vmem>>, vector<1x8x128xbf16>
    %44 = vector.shape_cast %43 : vector<1x8x128xbf16> to vector<8x128xbf16>
    %45 = vector.shape_cast %42 : vector<8x128xbf16> to vector<1x8x128xbf16>
    tpu.vector_store %arg4[%c0_18, %c0_19, %c0_20], %45 {strides = array<i32>} : memref<8x8x128xbf16, #tpu.memory_space<vmem>>, vector<1x8x128xbf16>,
    %c1 = arith.constant 1 : index
    %c0_21 = arith.constant 0 : index
    %c0_22 = arith.constant 0 : index
    %46 = vector.load %arg2[%c1, %c0_21, %c0_22] : memref<8x8x512xbf16, #tpu.memory_space<vmem>>, vector<1x8x512xbf16>
    %47 = vector.shape_cast %46 : vector<1x8x512xbf16> to vector<8x512xbf16>
    %48 = arith.extf %47 : vector<8x512xbf16> to vector<8x512xf32>
    %cst_23 = arith.constant dense<0.000000e+00> : vector<8x512xf32>
    %49 = tpu.matmul %42, %3, %cst_23 {dimension_numbers = #tpu.dot_dimension_numbers<[1], [0], [0], [1], [0, 0, 1, 1], [], []>} : vector<8x128xbf16>, vector<128x512xbf16>, vector<8x512xf32> -> vector<8x512xf32>
    %50 = arith.addf %48, %49 : vector<8x512xf32>
    %51 = vector.extract_strided_slice %50 {offsets = [0, 0], sizes = [8, 128], strides = [1, 1]} : vector<8x512xf32> to vector<8x128xf32>
    %cst_24 = arith.constant 5.000000e-01 : f32
    %52 = vector.broadcast %cst_24 : f32 to vector<8x128xf32>
    %53 = arith.mulf %52, %51 : vector<8x128xf32>
    %54 = math.tanh %53 : vector<8x128xf32>
    %cst_25 = arith.constant 1.000000e+00 : f32
    %55 = vector.broadcast %cst_25 : f32 to vector<8x128xf32>
    %56 = arith.addf %54, %55 : vector<8x128xf32>
    %cst_26 = arith.constant 5.000000e-01 : f32
    %57 = vector.broadcast %cst_26 : f32 to vector<8x128xf32>
    %58 = arith.mulf %57, %56 : vector<8x128xf32>
    %59 = vector.extract_strided_slice %50 {offsets = [0, 128], sizes = [8, 128], strides = [1, 1]} : vector<8x512xf32> to vector<8x128xf32>
    %cst_27 = arith.constant 5.000000e-01 : f32
    %60 = vector.broadcast %cst_27 : f32 to vector<8x128xf32>
    %61 = arith.mulf %60, %59 : vector<8x128xf32>
    %62 = math.tanh %61 : vector<8x128xf32>
    %cst_28 = arith.constant 1.000000e+00 : f32
    %63 = vector.broadcast %cst_28 : f32 to vector<8x128xf32>
    %64 = arith.addf %62, %63 : vector<8x128xf32>
    %cst_29 = arith.constant 5.000000e-01 : f32
    %65 = vector.broadcast %cst_29 : f32 to vector<8x128xf32>
    %66 = arith.mulf %65, %64 : vector<8x128xf32>
    %67 = vector.extract_strided_slice %50 {offsets = [0, 256], sizes = [8, 128], strides = [1, 1]} : vector<8x512xf32> to vector<8x128xf32>
    %68 = math.tanh %67 : vector<8x128xf32>
    %69 = vector.extract_strided_slice %50 {offsets = [0, 384], sizes = [8, 128], strides = [1, 1]} : vector<8x512xf32> to vector<8x128xf32>
    %cst_30 = arith.constant 5.000000e-01 : f32
    %70 = vector.broadcast %cst_30 : f32 to vector<8x128xf32>
    %71 = arith.mulf %70, %69 : vector<8x128xf32>
    %72 = math.tanh %71 : vector<8x128xf32>
    %cst_31 = arith.constant 1.000000e+00 : f32
    %73 = vector.broadcast %cst_31 : f32 to vector<8x128xf32>
    %74 = arith.addf %72, %73 : vector<8x128xf32>
    %cst_32 = arith.constant 5.000000e-01 : f32
    %75 = vector.broadcast %cst_32 : f32 to vector<8x128xf32>
    %76 = arith.mulf %75, %74 : vector<8x128xf32>
    %77 = arith.mulf %66, %39 : vector<8x128xf32>
    %78 = arith.mulf %58, %68 : vector<8x128xf32>
    %79 = arith.addf %77, %78 : vector<8x128xf32>
    %80 = math.tanh %79 : vector<8x128xf32>
    %81 = arith.mulf %76, %80 : vector<8x128xf32>
    %82 = arith.truncf %81 : vector<8x128xf32> to vector<8x128xbf16>
    %c1_33 = arith.constant 1 : index
    %c0_34 = arith.constant 0 : index
    %c0_35 = arith.constant 0 : index
    %83 = vector.load %arg4[%c1_33, %c0_34, %c0_35] : memref<8x8x128xbf16, #tpu.memory_space<vmem>>, vector<1x8x128xbf16>
    %84 = vector.shape_cast %83 : vector<1x8x128xbf16> to vector<8x128xbf16>
    %85 = vector.shape_cast %82 : vector<8x128xbf16> to vector<1x8x128xbf16>
    tpu.vector_store %arg4[%c1_33, %c0_34, %c0_35], %85 {strides = array<i32>} : memref<8x8x128xbf16, #tpu.memory_space<vmem>>, vector<1x8x128xbf16>,
    %c2 = arith.constant 2 : index
    %c0_36 = arith.constant 0 : index
    %c0_37 = arith.constant 0 : index
    %86 = vector.load %arg2[%c2, %c0_36, %c0_37] : memref<8x8x512xbf16, #tpu.memory_space<vmem>>, vector<1x8x512xbf16>
    %87 = vector.shape_cast %86 : vector<1x8x512xbf16> to vector<8x512xbf16>
    %88 = arith.extf %87 : vector<8x512xbf16> to vector<8x512xf32>
    %cst_38 = arith.constant dense<0.000000e+00> : vector<8x512xf32>
    %89 = tpu.matmul %82, %3, %cst_38 {dimension_numbers = #tpu.dot_dimension_numbers<[1], [0], [0], [1], [0, 0, 1, 1], [], []>} : vector<8x128xbf16>, vector<128x512xbf16>, vector<8x512xf32> -> vector<8x512xf32>
    %90 = arith.addf %88, %89 : vector<8x512xf32>
    %91 = vector.extract_strided_slice %90 {offsets = [0, 0], sizes = [8, 128], strides = [1, 1]} : vector<8x512xf32> to vector<8x128xf32>
    %cst_39 = arith.constant 5.000000e-01 : f32
    %92 = vector.broadcast %cst_39 : f32 to vector<8x128xf32>
    %93 = arith.mulf %92, %91 : vector<8x128xf32>
    %94 = math.tanh %93 : vector<8x128xf32>
    %cst_40 = arith.constant 1.000000e+00 : f32
    %95 = vector.broadcast %cst_40 : f32 to vector<8x128xf32>
    %96 = arith.addf %94, %95 : vector<8x128xf32>
    %cst_41 = arith.constant 5.000000e-01 : f32
    %97 = vector.broadcast %cst_41 : f32 to vector<8x128xf32>
    %98 = arith.mulf %97, %96 : vector<8x128xf32>
    %99 = vector.extract_strided_slice %90 {offsets = [0, 128], sizes = [8, 128], strides = [1, 1]} : vector<8x512xf32> to vector<8x128xf32>
    %cst_42 = arith.constant 5.000000e-01 : f32
    %100 = vector.broadcast %cst_42 : f32 to vector<8x128xf32>
    %101 = arith.mulf %100, %99 : vector<8x128xf32>
    %102 = math.tanh %101 : vector<8x128xf32>
    %cst_43 = arith.constant 1.000000e+00 : f32
    %103 = vector.broadcast %cst_43 : f32 to vector<8x128xf32>
    %104 = arith.addf %102, %103 : vector<8x128xf32>
    %cst_44 = arith.constant 5.000000e-01 : f32
    %105 = vector.broadcast %cst_44 : f32 to vector<8x128xf32>
    %106 = arith.mulf %105, %104 : vector<8x128xf32>
    %107 = vector.extract_strided_slice %90 {offsets = [0, 256], sizes = [8, 128], strides = [1, 1]} : vector<8x512xf32> to vector<8x128xf32>
    %108 = math.tanh %107 : vector<8x128xf32>
    %109 = vector.extract_strided_slice %90 {offsets = [0, 384], sizes = [8, 128], strides = [1, 1]} : vector<8x512xf32> to vector<8x128xf32>
    %cst_45 = arith.constant 5.000000e-01 : f32
    %110 = vector.broadcast %cst_45 : f32 to vector<8x128xf32>
    %111 = arith.mulf %110, %109 : vector<8x128xf32>
    %112 = math.tanh %111 : vector<8x128xf32>
    %cst_46 = arith.constant 1.000000e+00 : f32
    %113 = vector.broadcast %cst_46 : f32 to vector<8x128xf32>
    %114 = arith.addf %112, %113 : vector<8x128xf32>
    %cst_47 = arith.constant 5.000000e-01 : f32
    %115 = vector.broadcast %cst_47 : f32 to vector<8x128xf32>
    %116 = arith.mulf %115, %114 : vector<8x128xf32>
    %117 = arith.mulf %106, %79 : vector<8x128xf32>
    %118 = arith.mulf %98, %108 : vector<8x128xf32>
    %119 = arith.addf %117, %118 : vector<8x128xf32>
    %120 = math.tanh %119 : vector<8x128xf32>
    %121 = arith.mulf %116, %120 : vector<8x128xf32>
    %122 = arith.truncf %121 : vector<8x128xf32> to vector<8x128xbf16>
    %c2_48 = arith.constant 2 : index
    %c0_49 = arith.constant 0 : index
    %c0_50 = arith.constant 0 : index
    %123 = vector.load %arg4[%c2_48, %c0_49, %c0_50] : memref<8x8x128xbf16, #tpu.memory_space<vmem>>, vector<1x8x128xbf16>
    %124 = vector.shape_cast %123 : vector<1x8x128xbf16> to vector<8x128xbf16>
    %125 = vector.shape_cast %122 : vector<8x128xbf16> to vector<1x8x128xbf16>
    tpu.vector_store %arg4[%c2_48, %c0_49, %c0_50], %125 {strides = array<i32>} : memref<8x8x128xbf16, #tpu.memory_space<vmem>>, vector<1x8x128xbf16>,
    %c3 = arith.constant 3 : index
    %c0_51 = arith.constant 0 : index
    %c0_52 = arith.constant 0 : index
    %126 = vector.load %arg2[%c3, %c0_51, %c0_52] : memref<8x8x512xbf16, #tpu.memory_space<vmem>>, vector<1x8x512xbf16>
    %127 = vector.shape_cast %126 : vector<1x8x512xbf16> to vector<8x512xbf16>
    %128 = arith.extf %127 : vector<8x512xbf16> to vector<8x512xf32>
    %cst_53 = arith.constant dense<0.000000e+00> : vector<8x512xf32>
    %129 = tpu.matmul %122, %3, %cst_53 {dimension_numbers = #tpu.dot_dimension_numbers<[1], [0], [0], [1], [0, 0, 1, 1], [], []>} : vector<8x128xbf16>, vector<128x512xbf16>, vector<8x512xf32> -> vector<8x512xf32>
    %130 = arith.addf %128, %129 : vector<8x512xf32>
    %131 = vector.extract_strided_slice %130 {offsets = [0, 0], sizes = [8, 128], strides = [1, 1]} : vector<8x512xf32> to vector<8x128xf32>
    %cst_54 = arith.constant 5.000000e-01 : f32
    %132 = vector.broadcast %cst_54 : f32 to vector<8x128xf32>
    %133 = arith.mulf %132, %131 : vector<8x128xf32>
    %134 = math.tanh %133 : vector<8x128xf32>
    %cst_55 = arith.constant 1.000000e+00 : f32
    %135 = vector.broadcast %cst_55 : f32 to vector<8x128xf32>
    %136 = arith.addf %134, %135 : vector<8x128xf32>
    %cst_56 = arith.constant 5.000000e-01 : f32
    %137 = vector.broadcast %cst_56 : f32 to vector<8x128xf32>
    %138 = arith.mulf %137, %136 : vector<8x128xf32>
    %139 = vector.extract_strided_slice %130 {offsets = [0, 128], sizes = [8, 128], strides = [1, 1]} : vector<8x512xf32> to vector<8x128xf32>
    %cst_57 = arith.constant 5.000000e-01 : f32
    %140 = vector.broadcast %cst_57 : f32 to vector<8x128xf32>
    %141 = arith.mulf %140, %139 : vector<8x128xf32>
    %142 = math.tanh %141 : vector<8x128xf32>
    %cst_58 = arith.constant 1.000000e+00 : f32
    %143 = vector.broadcast %cst_58 : f32 to vector<8x128xf32>
    %144 = arith.addf %142, %143 : vector<8x128xf32>
    %cst_59 = arith.constant 5.000000e-01 : f32
    %145 = vector.broadcast %cst_59 : f32 to vector<8x128xf32>
    %146 = arith.mulf %145, %144 : vector<8x128xf32>
    %147 = vector.extract_strided_slice %130 {offsets = [0, 256], sizes = [8, 128], strides = [1, 1]} : vector<8x512xf32> to vector<8x128xf32>
    %148 = math.tanh %147 : vector<8x128xf32>
    %149 = vector.extract_strided_slice %130 {offsets = [0, 384], sizes = [8, 128], strides = [1, 1]} : vector<8x512xf32> to vector<8x128xf32>
    %cst_60 = arith.constant 5.000000e-01 : f32
    %150 = vector.broadcast %cst_60 : f32 to vector<8x128xf32>
    %151 = arith.mulf %150, %149 : vector<8x128xf32>
    %152 = math.tanh %151 : vector<8x128xf32>
    %cst_61 = arith.constant 1.000000e+00 : f32
    %153 = vector.broadcast %cst_61 : f32 to vector<8x128xf32>
    %154 = arith.addf %152, %153 : vector<8x128xf32>
    %cst_62 = arith.constant 5.000000e-01 : f32
    %155 = vector.broadcast %cst_62 : f32 to vector<8x128xf32>
    %156 = arith.mulf %155, %154 : vector<8x128xf32>
    %157 = arith.mulf %146, %119 : vector<8x128xf32>
    %158 = arith.mulf %138, %148 : vector<8x128xf32>
    %159 = arith.addf %157, %158 : vector<8x128xf32>
    %160 = math.tanh %159 : vector<8x128xf32>
    %161 = arith.mulf %156, %160 : vector<8x128xf32>
    %162 = arith.truncf %161 : vector<8x128xf32> to vector<8x128xbf16>
    %c3_63 = arith.constant 3 : index
    %c0_64 = arith.constant 0 : index
    %c0_65 = arith.constant 0 : index
    %163 = vector.load %arg4[%c3_63, %c0_64, %c0_65] : memref<8x8x128xbf16, #tpu.memory_space<vmem>>, vector<1x8x128xbf16>
    %164 = vector.shape_cast %163 : vector<1x8x128xbf16> to vector<8x128xbf16>
    %165 = vector.shape_cast %162 : vector<8x128xbf16> to vector<1x8x128xbf16>
    tpu.vector_store %arg4[%c3_63, %c0_64, %c0_65], %165 {strides = array<i32>} : memref<8x8x128xbf16, #tpu.memory_space<vmem>>, vector<1x8x128xbf16>,
    %c4 = arith.constant 4 : index
    %c0_66 = arith.constant 0 : index
    %c0_67 = arith.constant 0 : index
    %166 = vector.load %arg2[%c4, %c0_66, %c0_67] : memref<8x8x512xbf16, #tpu.memory_space<vmem>>, vector<1x8x512xbf16>
    %167 = vector.shape_cast %166 : vector<1x8x512xbf16> to vector<8x512xbf16>
    %168 = arith.extf %167 : vector<8x512xbf16> to vector<8x512xf32>
    %cst_68 = arith.constant dense<0.000000e+00> : vector<8x512xf32>
    %169 = tpu.matmul %162, %3, %cst_68 {dimension_numbers = #tpu.dot_dimension_numbers<[1], [0], [0], [1], [0, 0, 1, 1], [], []>} : vector<8x128xbf16>, vector<128x512xbf16>, vector<8x512xf32> -> vector<8x512xf32>
    %170 = arith.addf %168, %169 : vector<8x512xf32>
    %171 = vector.extract_strided_slice %170 {offsets = [0, 0], sizes = [8, 128], strides = [1, 1]} : vector<8x512xf32> to vector<8x128xf32>
    %cst_69 = arith.constant 5.000000e-01 : f32
    %172 = vector.broadcast %cst_69 : f32 to vector<8x128xf32>
    %173 = arith.mulf %172, %171 : vector<8x128xf32>
    %174 = math.tanh %173 : vector<8x128xf32>
    %cst_70 = arith.constant 1.000000e+00 : f32
    %175 = vector.broadcast %cst_70 : f32 to vector<8x128xf32>
    %176 = arith.addf %174, %175 : vector<8x128xf32>
    %cst_71 = arith.constant 5.000000e-01 : f32
    %177 = vector.broadcast %cst_71 : f32 to vector<8x128xf32>
    %178 = arith.mulf %177, %176 : vector<8x128xf32>
    %179 = vector.extract_strided_slice %170 {offsets = [0, 128], sizes = [8, 128], strides = [1, 1]} : vector<8x512xf32> to vector<8x128xf32>
    %cst_72 = arith.constant 5.000000e-01 : f32
    %180 = vector.broadcast %cst_72 : f32 to vector<8x128xf32>
    %181 = arith.mulf %180, %179 : vector<8x128xf32>
    %182 = math.tanh %181 : vector<8x128xf32>
    %cst_73 = arith.constant 1.000000e+00 : f32
    %183 = vector.broadcast %cst_73 : f32 to vector<8x128xf32>
    %184 = arith.addf %182, %183 : vector<8x128xf32>
    %cst_74 = arith.constant 5.000000e-01 : f32
    %185 = vector.broadcast %cst_74 : f32 to vector<8x128xf32>
    %186 = arith.mulf %185, %184 : vector<8x128xf32>
    %187 = vector.extract_strided_slice %170 {offsets = [0, 256], sizes = [8, 128], strides = [1, 1]} : vector<8x512xf32> to vector<8x128xf32>
    %188 = math.tanh %187 : vector<8x128xf32>
    %189 = vector.extract_strided_slice %170 {offsets = [0, 384], sizes = [8, 128], strides = [1, 1]} : vector<8x512xf32> to vector<8x128xf32>
    %cst_75 = arith.constant 5.000000e-01 : f32
    %190 = vector.broadcast %cst_75 : f32 to vector<8x128xf32>
    %191 = arith.mulf %190, %189 : vector<8x128xf32>
    %192 = math.tanh %191 : vector<8x128xf32>
    %cst_76 = arith.constant 1.000000e+00 : f32
    %193 = vector.broadcast %cst_76 : f32 to vector<8x128xf32>
    %194 = arith.addf %192, %193 : vector<8x128xf32>
    %cst_77 = arith.constant 5.000000e-01 : f32
    %195 = vector.broadcast %cst_77 : f32 to vector<8x128xf32>
    %196 = arith.mulf %195, %194 : vector<8x128xf32>
    %197 = arith.mulf %186, %159 : vector<8x128xf32>
    %198 = arith.mulf %178, %188 : vector<8x128xf32>
    %199 = arith.addf %197, %198 : vector<8x128xf32>
    %200 = math.tanh %199 : vector<8x128xf32>
    %201 = arith.mulf %196, %200 : vector<8x128xf32>
    %202 = arith.truncf %201 : vector<8x128xf32> to vector<8x128xbf16>
    %c4_78 = arith.constant 4 : index
    %c0_79 = arith.constant 0 : index
    %c0_80 = arith.constant 0 : index
    %203 = vector.load %arg4[%c4_78, %c0_79, %c0_80] : memref<8x8x128xbf16, #tpu.memory_space<vmem>>, vector<1x8x128xbf16>
    %204 = vector.shape_cast %203 : vector<1x8x128xbf16> to vector<8x128xbf16>
    %205 = vector.shape_cast %202 : vector<8x128xbf16> to vector<1x8x128xbf16>
    tpu.vector_store %arg4[%c4_78, %c0_79, %c0_80], %205 {strides = array<i32>} : memref<8x8x128xbf16, #tpu.memory_space<vmem>>, vector<1x8x128xbf16>,
    %c5 = arith.constant 5 : index
    %c0_81 = arith.constant 0 : index
    %c0_82 = arith.constant 0 : index
    %206 = vector.load %arg2[%c5, %c0_81, %c0_82] : memref<8x8x512xbf16, #tpu.memory_space<vmem>>, vector<1x8x512xbf16>
    %207 = vector.shape_cast %206 : vector<1x8x512xbf16> to vector<8x512xbf16>
    %208 = arith.extf %207 : vector<8x512xbf16> to vector<8x512xf32>
    %cst_83 = arith.constant dense<0.000000e+00> : vector<8x512xf32>
    %209 = tpu.matmul %202, %3, %cst_83 {dimension_numbers = #tpu.dot_dimension_numbers<[1], [0], [0], [1], [0, 0, 1, 1], [], []>} : vector<8x128xbf16>, vector<128x512xbf16>, vector<8x512xf32> -> vector<8x512xf32>
    %210 = arith.addf %208, %209 : vector<8x512xf32>
    %211 = vector.extract_strided_slice %210 {offsets = [0, 0], sizes = [8, 128], strides = [1, 1]} : vector<8x512xf32> to vector<8x128xf32>
    %cst_84 = arith.constant 5.000000e-01 : f32
    %212 = vector.broadcast %cst_84 : f32 to vector<8x128xf32>
    %213 = arith.mulf %212, %211 : vector<8x128xf32>
    %214 = math.tanh %213 : vector<8x128xf32>
    %cst_85 = arith.constant 1.000000e+00 : f32
    %215 = vector.broadcast %cst_85 : f32 to vector<8x128xf32>
    %216 = arith.addf %214, %215 : vector<8x128xf32>
    %cst_86 = arith.constant 5.000000e-01 : f32
    %217 = vector.broadcast %cst_86 : f32 to vector<8x128xf32>
    %218 = arith.mulf %217, %216 : vector<8x128xf32>
    %219 = vector.extract_strided_slice %210 {offsets = [0, 128], sizes = [8, 128], strides = [1, 1]} : vector<8x512xf32> to vector<8x128xf32>
    %cst_87 = arith.constant 5.000000e-01 : f32
    %220 = vector.broadcast %cst_87 : f32 to vector<8x128xf32>
    %221 = arith.mulf %220, %219 : vector<8x128xf32>
    %222 = math.tanh %221 : vector<8x128xf32>
    %cst_88 = arith.constant 1.000000e+00 : f32
    %223 = vector.broadcast %cst_88 : f32 to vector<8x128xf32>
    %224 = arith.addf %222, %223 : vector<8x128xf32>
    %cst_89 = arith.constant 5.000000e-01 : f32
    %225 = vector.broadcast %cst_89 : f32 to vector<8x128xf32>
    %226 = arith.mulf %225, %224 : vector<8x128xf32>
    %227 = vector.extract_strided_slice %210 {offsets = [0, 256], sizes = [8, 128], strides = [1, 1]} : vector<8x512xf32> to vector<8x128xf32>
    %228 = math.tanh %227 : vector<8x128xf32>
    %229 = vector.extract_strided_slice %210 {offsets = [0, 384], sizes = [8, 128], strides = [1, 1]} : vector<8x512xf32> to vector<8x128xf32>
    %cst_90 = arith.constant 5.000000e-01 : f32
    %230 = vector.broadcast %cst_90 : f32 to vector<8x128xf32>
    %231 = arith.mulf %230, %229 : vector<8x128xf32>
    %232 = math.tanh %231 : vector<8x128xf32>
    %cst_91 = arith.constant 1.000000e+00 : f32
    %233 = vector.broadcast %cst_91 : f32 to vector<8x128xf32>
    %234 = arith.addf %232, %233 : vector<8x128xf32>
    %cst_92 = arith.constant 5.000000e-01 : f32
    %235 = vector.broadcast %cst_92 : f32 to vector<8x128xf32>
    %236 = arith.mulf %235, %234 : vector<8x128xf32>
    %237 = arith.mulf %226, %199 : vector<8x128xf32>
    %238 = arith.mulf %218, %228 : vector<8x128xf32>
    %239 = arith.addf %237, %238 : vector<8x128xf32>
    %240 = math.tanh %239 : vector<8x128xf32>
    %241 = arith.mulf %236, %240 : vector<8x128xf32>
    %242 = arith.truncf %241 : vector<8x128xf32> to vector<8x128xbf16>
    %c5_93 = arith.constant 5 : index
    %c0_94 = arith.constant 0 : index
    %c0_95 = arith.constant 0 : index
    %243 = vector.load %arg4[%c5_93, %c0_94, %c0_95] : memref<8x8x128xbf16, #tpu.memory_space<vmem>>, vector<1x8x128xbf16>
    %244 = vector.shape_cast %243 : vector<1x8x128xbf16> to vector<8x128xbf16>
    %245 = vector.shape_cast %242 : vector<8x128xbf16> to vector<1x8x128xbf16>
    tpu.vector_store %arg4[%c5_93, %c0_94, %c0_95], %245 {strides = array<i32>} : memref<8x8x128xbf16, #tpu.memory_space<vmem>>, vector<1x8x128xbf16>,
    %c6 = arith.constant 6 : index
    %c0_96 = arith.constant 0 : index
    %c0_97 = arith.constant 0 : index
    %246 = vector.load %arg2[%c6, %c0_96, %c0_97] : memref<8x8x512xbf16, #tpu.memory_space<vmem>>, vector<1x8x512xbf16>
    %247 = vector.shape_cast %246 : vector<1x8x512xbf16> to vector<8x512xbf16>
    %248 = arith.extf %247 : vector<8x512xbf16> to vector<8x512xf32>
    %cst_98 = arith.constant dense<0.000000e+00> : vector<8x512xf32>
    %249 = tpu.matmul %242, %3, %cst_98 {dimension_numbers = #tpu.dot_dimension_numbers<[1], [0], [0], [1], [0, 0, 1, 1], [], []>} : vector<8x128xbf16>, vector<128x512xbf16>, vector<8x512xf32> -> vector<8x512xf32>
    %250 = arith.addf %248, %249 : vector<8x512xf32>
    %251 = vector.extract_strided_slice %250 {offsets = [0, 0], sizes = [8, 128], strides = [1, 1]} : vector<8x512xf32> to vector<8x128xf32>
    %cst_99 = arith.constant 5.000000e-01 : f32
    %252 = vector.broadcast %cst_99 : f32 to vector<8x128xf32>
    %253 = arith.mulf %252, %251 : vector<8x128xf32>
    %254 = math.tanh %253 : vector<8x128xf32>
    %cst_100 = arith.constant 1.000000e+00 : f32
    %255 = vector.broadcast %cst_100 : f32 to vector<8x128xf32>
    %256 = arith.addf %254, %255 : vector<8x128xf32>
    %cst_101 = arith.constant 5.000000e-01 : f32
    %257 = vector.broadcast %cst_101 : f32 to vector<8x128xf32>
    %258 = arith.mulf %257, %256 : vector<8x128xf32>
    %259 = vector.extract_strided_slice %250 {offsets = [0, 128], sizes = [8, 128], strides = [1, 1]} : vector<8x512xf32> to vector<8x128xf32>
    %cst_102 = arith.constant 5.000000e-01 : f32
    %260 = vector.broadcast %cst_102 : f32 to vector<8x128xf32>
    %261 = arith.mulf %260, %259 : vector<8x128xf32>
    %262 = math.tanh %261 : vector<8x128xf32>
    %cst_103 = arith.constant 1.000000e+00 : f32
    %263 = vector.broadcast %cst_103 : f32 to vector<8x128xf32>
    %264 = arith.addf %262, %263 : vector<8x128xf32>
    %cst_104 = arith.constant 5.000000e-01 : f32
    %265 = vector.broadcast %cst_104 : f32 to vector<8x128xf32>
    %266 = arith.mulf %265, %264 : vector<8x128xf32>
    %267 = vector.extract_strided_slice %250 {offsets = [0, 256], sizes = [8, 128], strides = [1, 1]} : vector<8x512xf32> to vector<8x128xf32>
    %268 = math.tanh %267 : vector<8x128xf32>
    %269 = vector.extract_strided_slice %250 {offsets = [0, 384], sizes = [8, 128], strides = [1, 1]} : vector<8x512xf32> to vector<8x128xf32>
    %cst_105 = arith.constant 5.000000e-01 : f32
    %270 = vector.broadcast %cst_105 : f32 to vector<8x128xf32>
    %271 = arith.mulf %270, %269 : vector<8x128xf32>
    %272 = math.tanh %271 : vector<8x128xf32>
    %cst_106 = arith.constant 1.000000e+00 : f32
    %273 = vector.broadcast %cst_106 : f32 to vector<8x128xf32>
    %274 = arith.addf %272, %273 : vector<8x128xf32>
    %cst_107 = arith.constant 5.000000e-01 : f32
    %275 = vector.broadcast %cst_107 : f32 to vector<8x128xf32>
    %276 = arith.mulf %275, %274 : vector<8x128xf32>
    %277 = arith.mulf %266, %239 : vector<8x128xf32>
    %278 = arith.mulf %258, %268 : vector<8x128xf32>
    %279 = arith.addf %277, %278 : vector<8x128xf32>
    %280 = math.tanh %279 : vector<8x128xf32>
    %281 = arith.mulf %276, %280 : vector<8x128xf32>
    %282 = arith.truncf %281 : vector<8x128xf32> to vector<8x128xbf16>
    %c6_108 = arith.constant 6 : index
    %c0_109 = arith.constant 0 : index
    %c0_110 = arith.constant 0 : index
    %283 = vector.load %arg4[%c6_108, %c0_109, %c0_110] : memref<8x8x128xbf16, #tpu.memory_space<vmem>>, vector<1x8x128xbf16>
    %284 = vector.shape_cast %283 : vector<1x8x128xbf16> to vector<8x128xbf16>
    %285 = vector.shape_cast %282 : vector<8x128xbf16> to vector<1x8x128xbf16>
    tpu.vector_store %arg4[%c6_108, %c0_109, %c0_110], %285 {strides = array<i32>} : memref<8x8x128xbf16, #tpu.memory_space<vmem>>, vector<1x8x128xbf16>,
    %c7 = arith.constant 7 : index
    %c0_111 = arith.constant 0 : index
    %c0_112 = arith.constant 0 : index
    %286 = vector.load %arg2[%c7, %c0_111, %c0_112] : memref<8x8x512xbf16, #tpu.memory_space<vmem>>, vector<1x8x512xbf16>
    %287 = vector.shape_cast %286 : vector<1x8x512xbf16> to vector<8x512xbf16>
    %288 = arith.extf %287 : vector<8x512xbf16> to vector<8x512xf32>
    %cst_113 = arith.constant dense<0.000000e+00> : vector<8x512xf32>
    %289 = tpu.matmul %282, %3, %cst_113 {dimension_numbers = #tpu.dot_dimension_numbers<[1], [0], [0], [1], [0, 0, 1, 1], [], []>} : vector<8x128xbf16>, vector<128x512xbf16>, vector<8x512xf32> -> vector<8x512xf32>
    %290 = arith.addf %288, %289 : vector<8x512xf32>
    %291 = vector.extract_strided_slice %290 {offsets = [0, 0], sizes = [8, 128], strides = [1, 1]} : vector<8x512xf32> to vector<8x128xf32>
    %cst_114 = arith.constant 5.000000e-01 : f32
    %292 = vector.broadcast %cst_114 : f32 to vector<8x128xf32>
    %293 = arith.mulf %292, %291 : vector<8x128xf32>
    %294 = math.tanh %293 : vector<8x128xf32>
    %cst_115 = arith.constant 1.000000e+00 : f32
    %295 = vector.broadcast %cst_115 : f32 to vector<8x128xf32>
    %296 = arith.addf %294, %295 : vector<8x128xf32>
    %cst_116 = arith.constant 5.000000e-01 : f32
    %297 = vector.broadcast %cst_116 : f32 to vector<8x128xf32>
    %298 = arith.mulf %297, %296 : vector<8x128xf32>
    %299 = vector.extract_strided_slice %290 {offsets = [0, 128], sizes = [8, 128], strides = [1, 1]} : vector<8x512xf32> to vector<8x128xf32>
    %cst_117 = arith.constant 5.000000e-01 : f32
    %300 = vector.broadcast %cst_117 : f32 to vector<8x128xf32>
    %301 = arith.mulf %300, %299 : vector<8x128xf32>
    %302 = math.tanh %301 : vector<8x128xf32>
    %cst_118 = arith.constant 1.000000e+00 : f32
    %303 = vector.broadcast %cst_118 : f32 to vector<8x128xf32>
    %304 = arith.addf %302, %303 : vector<8x128xf32>
    %cst_119 = arith.constant 5.000000e-01 : f32
    %305 = vector.broadcast %cst_119 : f32 to vector<8x128xf32>
    %306 = arith.mulf %305, %304 : vector<8x128xf32>
    %307 = vector.extract_strided_slice %290 {offsets = [0, 256], sizes = [8, 128], strides = [1, 1]} : vector<8x512xf32> to vector<8x128xf32>
    %308 = math.tanh %307 : vector<8x128xf32>
    %309 = vector.extract_strided_slice %290 {offsets = [0, 384], sizes = [8, 128], strides = [1, 1]} : vector<8x512xf32> to vector<8x128xf32>
    %cst_120 = arith.constant 5.000000e-01 : f32
    %310 = vector.broadcast %cst_120 : f32 to vector<8x128xf32>
    %311 = arith.mulf %310, %309 : vector<8x128xf32>
    %312 = math.tanh %311 : vector<8x128xf32>
    %cst_121 = arith.constant 1.000000e+00 : f32
    %313 = vector.broadcast %cst_121 : f32 to vector<8x128xf32>
    %314 = arith.addf %312, %313 : vector<8x128xf32>
    %cst_122 = arith.constant 5.000000e-01 : f32
    %315 = vector.broadcast %cst_122 : f32 to vector<8x128xf32>
    %316 = arith.mulf %315, %314 : vector<8x128xf32>
    %317 = arith.mulf %306, %279 : vector<8x128xf32>
    %318 = arith.mulf %298, %308 : vector<8x128xf32>
    %319 = arith.addf %317, %318 : vector<8x128xf32>
    %320 = math.tanh %319 : vector<8x128xf32>
    %321 = arith.mulf %316, %320 : vector<8x128xf32>
    %322 = arith.truncf %321 : vector<8x128xf32> to vector<8x128xbf16>
    %c7_123 = arith.constant 7 : index
    %c0_124 = arith.constant 0 : index
    %c0_125 = arith.constant 0 : index
    %323 = vector.load %arg4[%c7_123, %c0_124, %c0_125] : memref<8x8x128xbf16, #tpu.memory_space<vmem>>, vector<1x8x128xbf16>
    %324 = vector.shape_cast %323 : vector<1x8x128xbf16> to vector<8x128xbf16>
    %325 = vector.shape_cast %322 : vector<8x128xbf16> to vector<1x8x128xbf16>
    tpu.vector_store %arg4[%c7_123, %c0_124, %c0_125], %325 {strides = array<i32>} : memref<8x8x128xbf16, #tpu.memory_space<vmem>>, vector<1x8x128xbf16>,
    %c0_126 = arith.constant 0 : index
    %c0_127 = arith.constant 0 : index
    %326 = vector.load %arg6[%c0_126, %c0_127] : memref<8x128xbf16, #tpu.memory_space<vmem>>, vector<8x128xbf16>
    tpu.vector_store %arg6[%c0_126, %c0_127], %322 {strides = array<i32>} : memref<8x128xbf16, #tpu.memory_space<vmem>>, vector<8x128xbf16>,
    %c0_128 = arith.constant 0 : index
    %c0_129 = arith.constant 0 : index
    %327 = vector.load %arg7[%c0_128, %c0_129] : memref<8x128xf32, #tpu.memory_space<vmem>>, vector<8x128xf32>
    tpu.vector_store %arg7[%c0_128, %c0_129], %319 {strides = array<i32>} : memref<8x128xf32, #tpu.memory_space<vmem>>, vector<8x128xf32>,
    %c0_i32_130 = arith.constant 0 : i32
    %328 = arith.cmpi eq, %arg1, %c0_i32_130 : i32
    %329 = arith.extui %328 : i1 to i32
    %c0_i32_131 = arith.constant 0 : i32
    %330 = arith.cmpi ne, %329, %c0_i32_131 : i32
    scf.if %330 {
      %331 = arith.extf %322 : vector<8x128xbf16> to vector<8x128xf32>
      %c0_132 = arith.constant 0 : index
      %c0_133 = arith.constant 0 : index
      %332 = vector.load %arg5[%c0_132, %c0_133] : memref<8x128xf32, #tpu.memory_space<vmem>>, vector<8x128xf32>
      tpu.vector_store %arg5[%c0_132, %c0_133], %331 {strides = array<i32>} : memref<8x128xf32, #tpu.memory_space<vmem>>, vector<8x128xf32>,
    } else {
    }
    return
  }
  func.func @transform_0(%arg0: i32, %arg1: i32) -> (i32, i32, i32) {
    %c0_i32 = arith.constant 0 : i32
    %c0_i32_0 = arith.constant 0 : i32
    return %arg1, %arg0, %c0_i32 : i32, i32, i32
  }
  func.func @transform_1(%arg0: i32, %arg1: i32) -> (i32, i32) {
    %c0_i32 = arith.constant 0 : i32
    %c0_i32_0 = arith.constant 0 : i32
    %c0_i32_1 = arith.constant 0 : i32
    return %c0_i32, %c0_i32_0 : i32, i32
  }
  func.func @transform_2(%arg0: i32, %arg1: i32) -> (i32, i32, i32) {
    %c0_i32 = arith.constant 0 : i32
    %c0_i32_0 = arith.constant 0 : i32
    return %arg1, %arg0, %c0_i32 : i32, i32, i32
  }
  func.func @transform_3(%arg0: i32, %arg1: i32) -> (i32, i32) {
    %c0_i32 = arith.constant 0 : i32
    %c0_i32_0 = arith.constant 0 : i32
    return %arg0, %c0_i32 : i32, i32
  }
}

module attributes {stable_mosaic.version = 11 : i64} {
  func.func @_lstm_recurrent_kernel(%arg0: i32, %arg1: i32, %arg2: memref<8x8x512xbf16, #tpu.memory_space<vmem>>, %arg3: memref<128x512xbf16, #tpu.memory_space<vmem>>, %arg4: memref<8x8x128xbf16, #tpu.memory_space<vmem>>, %arg5: memref<8x128xf32, #tpu.memory_space<vmem>>, %arg6: memref<8x128xbf16, #tpu.memory_space<vmem>>, %arg7: memref<8x128xf32, #tpu.memory_space<vmem>>) attributes {dimension_semantics = [#tpu.dimension_semantics<parallel>, #tpu.dimension_semantics<arbitrary>], iteration_bounds = array<i64: 1, 1>, scalar_prefetch = 0 : i64, scratch_operands = 2 : i64, tpu.core_type = #tpu.core_type<tc>, window_params = [{transform_indices = @transform_0, window_bounds = array<i64: 8, 8, 512>}, {pipeline_mode = #tpu.pipeline_mode<synchronous>, transform_indices = @transform_1, window_bounds = array<i64: 128, 512>}, {transform_indices = @transform_2, window_bounds = array<i64: 8, 8, 128>}, {transform_indices = @transform_3, window_bounds = array<i64: 8, 128>}]} {
    %c0_i32 = arith.constant 0 : i32
    %0 = arith.cmpi eq, %arg1, %c0_i32 : i32
    %1 = arith.extui %0 : i1 to i32
    %c0_i32_0 = arith.constant 0 : i32
    %2 = arith.cmpi ne, %1, %c0_i32_0 : i32
    scf.if %2 {
      %cst_132 = arith.constant 0.000000e+00 : bf16
      %331 = vector.broadcast %cst_132 : bf16 to vector<8x128xbf16>
      %c0_133 = arith.constant 0 : index
      %c0_134 = arith.constant 0 : index
      %332 = vector.load %arg6[%c0_133, %c0_134] : memref<8x128xbf16, #tpu.memory_space<vmem>>, vector<8x128xbf16>
      tpu.vector_store %arg6[%c0_133, %c0_134], %331 {strides = array<i32>} : memref<8x128xbf16, #tpu.memory_space<vmem>>, vector<8x128xbf16>,
      %cst_135 = arith.constant 0.000000e+00 : f32
      %333 = vector.broadcast %cst_135 : f32 to vector<8x128xf32>
      %c0_136 = arith.constant 0 : index
      %c0_137 = arith.constant 0 : index
      %334 = vector.load %arg7[%c0_136, %c0_137] : memref<8x128xf32, #tpu.memory_space<vmem>>, vector<8x128xf32>
      tpu.vector_store %arg7[%c0_136, %c0_137], %333 {strides = array<i32>} : memref<8x128xf32, #tpu.memory_space<vmem>>, vector<8x128xf32>,
    } else {
    }
    %c0 = arith.constant 0 : index
    %c0_1 = arith.constant 0 : index
    %3 = vector.load %arg3[%c0, %c0_1] : memref<128x512xbf16, #tpu.memory_space<vmem>>, vector<128x512xbf16>
    %c0_2 = arith.constant 0 : index
    %c0_3 = arith.constant 0 : index
    %4 = vector.load %arg6[%c0_2, %c0_3] : memref<8x128xbf16, #tpu.memory_space<vmem>>, vector<8x128xbf16>
    %c0_4 = arith.constant 0 : index
    %c0_5 = arith.constant 0 : index
    %5 = vector.load %arg7[%c0_4, %c0_5] : memref<8x128xf32, #tpu.memory_space<vmem>>, vector<8x128xf32>
    %c0_6 = arith.constant 0 : index
    %c0_7 = arith.constant 0 : index
    %c0_8 = arith.constant 0 : index
    %6 = vector.load %arg2[%c0_6, %c0_7, %c0_8] : memref<8x8x512xbf16, #tpu.memory_space<vmem>>, vector<1x8x512xbf16>
    %7 = vector.shape_cast %6 : vector<1x8x512xbf16> to vector<8x512xbf16>
    %8 = arith.extf %7 : vector<8x512xbf16> to vector<8x512xf32>
    %cst = arith.constant dense<0.000000e+00> : vector<8x512xf32>
    %9 = tpu.matmul %4, %3, %cst {dimension_numbers = #tpu.dot_dimension_numbers<[1], [0], [0], [1], [0, 0, 1, 1], [], []>} : vector<8x128xbf16>, vector<128x512xbf16>, vector<8x512xf32> -> vector<8x512xf32>
    %10 = arith.addf %8, %9 : vector<8x512xf32>
    %11 = vector.extract_strided_slice %10 {offsets = [0, 0], sizes = [8, 128], strides = [1, 1]} : vector<8x512xf32> to vector<8x128xf32>
    %cst_9 = arith.constant 5.000000e-01 : f32
    %12 = vector.broadcast %cst_9 : f32 to vector<8x128xf32>
    %13 = arith.mulf %12, %11 : vector<8x128xf32>
    %14 = math.tanh %13 : vector<8x128xf32>
    %cst_10 = arith.constant 1.000000e+00 : f32
    %15 = vector.broadcast %cst_10 : f32 to vector<8x128xf32>
    %16 = arith.addf %14, %15 : vector<8x128xf32>
    %cst_11 = arith.constant 5.000000e-01 : f32
    %17 = vector.broadcast %cst_11 : f32 to vector<8x128xf32>
    %18 = arith.mulf %17, %16 : vector<8x128xf32>
    %19 = vector.extract_strided_slice %10 {offsets = [0, 128], sizes = [8, 128], strides = [1, 1]} : vector<8x512xf32> to vector<8x128xf32>
    %cst_12 = arith.constant 5.000000e-01 : f32
    %20 = vector.broadcast %cst_12 : f32 to vector<8x128xf32>
    %21 = arith.mulf %20, %19 : vector<8x128xf32>
    %22 = math.tanh %21 : vector<8x128xf32>
    %cst_13 = arith.constant 1.000000e+00 : f32
    %23 = vector.broadcast %cst_13 : f32 to vector<8x128xf32>
    %24 = arith.addf %22, %23 : vector<8x128xf32>
    %cst_14 = arith.constant 5.000000e-01 : f32
    %25 = vector.broadcast %cst_14 : f32 to vector<8x128xf32>
    %26 = arith.mulf %25, %24 : vector<8x128xf32>
    %27 = vector.extract_strided_slice %10 {offsets = [0, 256], sizes = [8, 128], strides = [1, 1]} : vector<8x512xf32> to vector<8x128xf32>
    %28 = math.tanh %27 : vector<8x128xf32>
    %29 = vector.extract_strided_slice %10 {offsets = [0, 384], sizes = [8, 128], strides = [1, 1]} : vector<8x512xf32> to vector<8x128xf32>
    %cst_15 = arith.constant 5.000000e-01 : f32
    %30 = vector.broadcast %cst_15 : f32 to vector<8x128xf32>
    %31 = arith.mulf %30, %29 : vector<8x128xf32>
    %32 = math.tanh %31 : vector<8x128xf32>
    %cst_16 = arith.constant 1.000000e+00 : f32
    %33 = vector.broadcast %cst_16 : f32 to vector<8x128xf32>
    %34 = arith.addf %32, %33 : vector<8x128xf32>
    %cst_17 = arith.constant 5.000000e-01 : f32
    %35 = vector.broadcast %cst_17 : f32 to vector<8x128xf32>
    %36 = arith.mulf %35, %34 : vector<8x128xf32>
    %37 = arith.mulf %26, %5 : vector<8x128xf32>
    %38 = arith.mulf %18, %28 : vector<8x128xf32>
    %39 = arith.addf %37, %38 : vector<8x128xf32>
    %40 = math.tanh %39 : vector<8x128xf32>
    %41 = arith.mulf %36, %40 : vector<8x128xf32>
    %42 = arith.truncf %41 : vector<8x128xf32> to vector<8x128xbf16>
    %c0_18 = arith.constant 0 : index
    %c0_19 = arith.constant 0 : index
    %c0_20 = arith.constant 0 : index
    %43 = vector.load %arg4[%c0_18, %c0_19, %c0_20] : memref<8x8x128xbf16, #tpu.memory_space<vmem>>, vector<1x8x128xbf16>
    %44 = vector.shape_cast %43 : vector<1x8x128xbf16> to vector<8x128xbf16>
    %45 = vector.shape_cast %42 : vector<8x128xbf16> to vector<1x8x128xbf16>
    tpu.vector_store %arg4[%c0_18, %c0_19, %c0_20], %45 {strides = array<i32>} : memref<8x8x128xbf16, #tpu.memory_space<vmem>>, vector<1x8x128xbf16>,
    %c1 = arith.constant 1 : index
    %c0_21 = arith.constant 0 : index
    %c0_22 = arith.constant 0 : index
    %46 = vector.load %arg2[%c1, %c0_21, %c0_22] : memref<8x8x512xbf16, #tpu.memory_space<vmem>>, vector<1x8x512xbf16>
    %47 = vector.shape_cast %46 : vector<1x8x512xbf16> to vector<8x512xbf16>
    %48 = arith.extf %47 : vector<8x512xbf16> to vector<8x512xf32>
    %cst_23 = arith.constant dense<0.000000e+00> : vector<8x512xf32>
    %49 = tpu.matmul %42, %3, %cst_23 {dimension_numbers = #tpu.dot_dimension_numbers<[1], [0], [0], [1], [0, 0, 1, 1], [], []>} : vector<8x128xbf16>, vector<128x512xbf16>, vector<8x512xf32> -> vector<8x512xf32>
    %50 = arith.addf %48, %49 : vector<8x512xf32>
    %51 = vector.extract_strided_slice %50 {offsets = [0, 0], sizes = [8, 128], strides = [1, 1]} : vector<8x512xf32> to vector<8x128xf32>
    %cst_24 = arith.constant 5.000000e-01 : f32
    %52 = vector.broadcast %cst_24 : f32 to vector<8x128xf32>
    %53 = arith.mulf %52, %51 : vector<8x128xf32>
    %54 = math.tanh %53 : vector<8x128xf32>
    %cst_25 = arith.constant 1.000000e+00 : f32
    %55 = vector.broadcast %cst_25 : f32 to vector<8x128xf32>
    %56 = arith.addf %54, %55 : vector<8x128xf32>
    %cst_26 = arith.constant 5.000000e-01 : f32
    %57 = vector.broadcast %cst_26 : f32 to vector<8x128xf32>
    %58 = arith.mulf %57, %56 : vector<8x128xf32>
    %59 = vector.extract_strided_slice %50 {offsets = [0, 128], sizes = [8, 128], strides = [1, 1]} : vector<8x512xf32> to vector<8x128xf32>
    %cst_27 = arith.constant 5.000000e-01 : f32
    %60 = vector.broadcast %cst_27 : f32 to vector<8x128xf32>
    %61 = arith.mulf %60, %59 : vector<8x128xf32>
    %62 = math.tanh %61 : vector<8x128xf32>
    %cst_28 = arith.constant 1.000000e+00 : f32
    %63 = vector.broadcast %cst_28 : f32 to vector<8x128xf32>
    %64 = arith.addf %62, %63 : vector<8x128xf32>
    %cst_29 = arith.constant 5.000000e-01 : f32
    %65 = vector.broadcast %cst_29 : f32 to vector<8x128xf32>
    %66 = arith.mulf %65, %64 : vector<8x128xf32>
    %67 = vector.extract_strided_slice %50 {offsets = [0, 256], sizes = [8, 128], strides = [1, 1]} : vector<8x512xf32> to vector<8x128xf32>
    %68 = math.tanh %67 : vector<8x128xf32>
    %69 = vector.extract_strided_slice %50 {offsets = [0, 384], sizes = [8, 128], strides = [1, 1]} : vector<8x512xf32> to vector<8x128xf32>
    %cst_30 = arith.constant 5.000000e-01 : f32
    %70 = vector.broadcast %cst_30 : f32 to vector<8x128xf32>
    %71 = arith.mulf %70, %69 : vector<8x128xf32>
    %72 = math.tanh %71 : vector<8x128xf32>
    %cst_31 = arith.constant 1.000000e+00 : f32
    %73 = vector.broadcast %cst_31 : f32 to vector<8x128xf32>
    %74 = arith.addf %72, %73 : vector<8x128xf32>
    %cst_32 = arith.constant 5.000000e-01 : f32
    %75 = vector.broadcast %cst_32 : f32 to vector<8x128xf32>
    %76 = arith.mulf %75, %74 : vector<8x128xf32>
    %77 = arith.mulf %66, %39 : vector<8x128xf32>
    %78 = arith.mulf %58, %68 : vector<8x128xf32>
    %79 = arith.addf %77, %78 : vector<8x128xf32>
    %80 = math.tanh %79 : vector<8x128xf32>
    %81 = arith.mulf %76, %80 : vector<8x128xf32>
    %82 = arith.truncf %81 : vector<8x128xf32> to vector<8x128xbf16>
    %c1_33 = arith.constant 1 : index
    %c0_34 = arith.constant 0 : index
    %c0_35 = arith.constant 0 : index
    %83 = vector.load %arg4[%c1_33, %c0_34, %c0_35] : memref<8x8x128xbf16, #tpu.memory_space<vmem>>, vector<1x8x128xbf16>
    %84 = vector.shape_cast %83 : vector<1x8x128xbf16> to vector<8x128xbf16>
    %85 = vector.shape_cast %82 : vector<8x128xbf16> to vector<1x8x128xbf16>
    tpu.vector_store %arg4[%c1_33, %c0_34, %c0_35], %85 {strides = array<i32>} : memref<8x8x128xbf16, #tpu.memory_space<vmem>>, vector<1x8x128xbf16>,
    %c2 = arith.constant 2 : index
    %c0_36 = arith.constant 0 : index
    %c0_37 = arith.constant 0 : index
    %86 = vector.load %arg2[%c2, %c0_36, %c0_37] : memref<8x8x512xbf16, #tpu.memory_space<vmem>>, vector<1x8x512xbf16>
    %87 = vector.shape_cast %86 : vector<1x8x512xbf16> to vector<8x512xbf16>
    %88 = arith.extf %87 : vector<8x512xbf16> to vector<8x512xf32>
    %cst_38 = arith.constant dense<0.000000e+00> : vector<8x512xf32>
    %89 = tpu.matmul %82, %3, %cst_38 {dimension_numbers = #tpu.dot_dimension_numbers<[1], [0], [0], [1], [0, 0, 1, 1], [], []>} : vector<8x128xbf16>, vector<128x512xbf16>, vector<8x512xf32> -> vector<8x512xf32>
    %90 = arith.addf %88, %89 : vector<8x512xf32>
    %91 = vector.extract_strided_slice %90 {offsets = [0, 0], sizes = [8, 128], strides = [1, 1]} : vector<8x512xf32> to vector<8x128xf32>
    %cst_39 = arith.constant 5.000000e-01 : f32
    %92 = vector.broadcast %cst_39 : f32 to vector<8x128xf32>
    %93 = arith.mulf %92, %91 : vector<8x128xf32>
    %94 = math.tanh %93 : vector<8x128xf32>
    %cst_40 = arith.constant 1.000000e+00 : f32
    %95 = vector.broadcast %cst_40 : f32 to vector<8x128xf32>
    %96 = arith.addf %94, %95 : vector<8x128xf32>
    %cst_41 = arith.constant 5.000000e-01 : f32
    %97 = vector.broadcast %cst_41 : f32 to vector<8x128xf32>
    %98 = arith.mulf %97, %96 : vector<8x128xf32>
    %99 = vector.extract_strided_slice %90 {offsets = [0, 128], sizes = [8, 128], strides = [1, 1]} : vector<8x512xf32> to vector<8x128xf32>
    %cst_42 = arith.constant 5.000000e-01 : f32
    %100 = vector.broadcast %cst_42 : f32 to vector<8x128xf32>
    %101 = arith.mulf %100, %99 : vector<8x128xf32>
    %102 = math.tanh %101 : vector<8x128xf32>
    %cst_43 = arith.constant 1.000000e+00 : f32
    %103 = vector.broadcast %cst_43 : f32 to vector<8x128xf32>
    %104 = arith.addf %102, %103 : vector<8x128xf32>
    %cst_44 = arith.constant 5.000000e-01 : f32
    %105 = vector.broadcast %cst_44 : f32 to vector<8x128xf32>
    %106 = arith.mulf %105, %104 : vector<8x128xf32>
    %107 = vector.extract_strided_slice %90 {offsets = [0, 256], sizes = [8, 128], strides = [1, 1]} : vector<8x512xf32> to vector<8x128xf32>
    %108 = math.tanh %107 : vector<8x128xf32>
    %109 = vector.extract_strided_slice %90 {offsets = [0, 384], sizes = [8, 128], strides = [1, 1]} : vector<8x512xf32> to vector<8x128xf32>
    %cst_45 = arith.constant 5.000000e-01 : f32
    %110 = vector.broadcast %cst_45 : f32 to vector<8x128xf32>
    %111 = arith.mulf %110, %109 : vector<8x128xf32>
    %112 = math.tanh %111 : vector<8x128xf32>
    %cst_46 = arith.constant 1.000000e+00 : f32
    %113 = vector.broadcast %cst_46 : f32 to vector<8x128xf32>
    %114 = arith.addf %112, %113 : vector<8x128xf32>
    %cst_47 = arith.constant 5.000000e-01 : f32
    %115 = vector.broadcast %cst_47 : f32 to vector<8x128xf32>
    %116 = arith.mulf %115, %114 : vector<8x128xf32>
    %117 = arith.mulf %106, %79 : vector<8x128xf32>
    %118 = arith.mulf %98, %108 : vector<8x128xf32>
    %119 = arith.addf %117, %118 : vector<8x128xf32>
    %120 = math.tanh %119 : vector<8x128xf32>
    %121 = arith.mulf %116, %120 : vector<8x128xf32>
    %122 = arith.truncf %121 : vector<8x128xf32> to vector<8x128xbf16>
    %c2_48 = arith.constant 2 : index
    %c0_49 = arith.constant 0 : index
    %c0_50 = arith.constant 0 : index
    %123 = vector.load %arg4[%c2_48, %c0_49, %c0_50] : memref<8x8x128xbf16, #tpu.memory_space<vmem>>, vector<1x8x128xbf16>
    %124 = vector.shape_cast %123 : vector<1x8x128xbf16> to vector<8x128xbf16>
    %125 = vector.shape_cast %122 : vector<8x128xbf16> to vector<1x8x128xbf16>
    tpu.vector_store %arg4[%c2_48, %c0_49, %c0_50], %125 {strides = array<i32>} : memref<8x8x128xbf16, #tpu.memory_space<vmem>>, vector<1x8x128xbf16>,
    %c3 = arith.constant 3 : index
    %c0_51 = arith.constant 0 : index
    %c0_52 = arith.constant 0 : index
    %126 = vector.load %arg2[%c3, %c0_51, %c0_52] : memref<8x8x512xbf16, #tpu.memory_space<vmem>>, vector<1x8x512xbf16>
    %127 = vector.shape_cast %126 : vector<1x8x512xbf16> to vector<8x512xbf16>
    %128 = arith.extf %127 : vector<8x512xbf16> to vector<8x512xf32>
    %cst_53 = arith.constant dense<0.000000e+00> : vector<8x512xf32>
    %129 = tpu.matmul %122, %3, %cst_53 {dimension_numbers = #tpu.dot_dimension_numbers<[1], [0], [0], [1], [0, 0, 1, 1], [], []>} : vector<8x128xbf16>, vector<128x512xbf16>, vector<8x512xf32> -> vector<8x512xf32>
    %130 = arith.addf %128, %129 : vector<8x512xf32>
    %131 = vector.extract_strided_slice %130 {offsets = [0, 0], sizes = [8, 128], strides = [1, 1]} : vector<8x512xf32> to vector<8x128xf32>
    %cst_54 = arith.constant 5.000000e-01 : f32
    %132 = vector.broadcast %cst_54 : f32 to vector<8x128xf32>
    %133 = arith.mulf %132, %131 : vector<8x128xf32>
    %134 = math.tanh %133 : vector<8x128xf32>
    %cst_55 = arith.constant 1.000000e+00 : f32
    %135 = vector.broadcast %cst_55 : f32 to vector<8x128xf32>
    %136 = arith.addf %134, %135 : vector<8x128xf32>
    %cst_56 = arith.constant 5.000000e-01 : f32
    %137 = vector.broadcast %cst_56 : f32 to vector<8x128xf32>
    %138 = arith.mulf %137, %136 : vector<8x128xf32>
    %139 = vector.extract_strided_slice %130 {offsets = [0, 128], sizes = [8, 128], strides = [1, 1]} : vector<8x512xf32> to vector<8x128xf32>
    %cst_57 = arith.constant 5.000000e-01 : f32
    %140 = vector.broadcast %cst_57 : f32 to vector<8x128xf32>
    %141 = arith.mulf %140, %139 : vector<8x128xf32>
    %142 = math.tanh %141 : vector<8x128xf32>
    %cst_58 = arith.constant 1.000000e+00 : f32
    %143 = vector.broadcast %cst_58 : f32 to vector<8x128xf32>
    %144 = arith.addf %142, %143 : vector<8x128xf32>
    %cst_59 = arith.constant 5.000000e-01 : f32
    %145 = vector.broadcast %cst_59 : f32 to vector<8x128xf32>
    %146 = arith.mulf %145, %144 : vector<8x128xf32>
    %147 = vector.extract_strided_slice %130 {offsets = [0, 256], sizes = [8, 128], strides = [1, 1]} : vector<8x512xf32> to vector<8x128xf32>
    %148 = math.tanh %147 : vector<8x128xf32>
    %149 = vector.extract_strided_slice %130 {offsets = [0, 384], sizes = [8, 128], strides = [1, 1]} : vector<8x512xf32> to vector<8x128xf32>
    %cst_60 = arith.constant 5.000000e-01 : f32
    %150 = vector.broadcast %cst_60 : f32 to vector<8x128xf32>
    %151 = arith.mulf %150, %149 : vector<8x128xf32>
    %152 = math.tanh %151 : vector<8x128xf32>
    %cst_61 = arith.constant 1.000000e+00 : f32
    %153 = vector.broadcast %cst_61 : f32 to vector<8x128xf32>
    %154 = arith.addf %152, %153 : vector<8x128xf32>
    %cst_62 = arith.constant 5.000000e-01 : f32
    %155 = vector.broadcast %cst_62 : f32 to vector<8x128xf32>
    %156 = arith.mulf %155, %154 : vector<8x128xf32>
    %157 = arith.mulf %146, %119 : vector<8x128xf32>
    %158 = arith.mulf %138, %148 : vector<8x128xf32>
    %159 = arith.addf %157, %158 : vector<8x128xf32>
    %160 = math.tanh %159 : vector<8x128xf32>
    %161 = arith.mulf %156, %160 : vector<8x128xf32>
    %162 = arith.truncf %161 : vector<8x128xf32> to vector<8x128xbf16>
    %c3_63 = arith.constant 3 : index
    %c0_64 = arith.constant 0 : index
    %c0_65 = arith.constant 0 : index
    %163 = vector.load %arg4[%c3_63, %c0_64, %c0_65] : memref<8x8x128xbf16, #tpu.memory_space<vmem>>, vector<1x8x128xbf16>
    %164 = vector.shape_cast %163 : vector<1x8x128xbf16> to vector<8x128xbf16>
    %165 = vector.shape_cast %162 : vector<8x128xbf16> to vector<1x8x128xbf16>
    tpu.vector_store %arg4[%c3_63, %c0_64, %c0_65], %165 {strides = array<i32>} : memref<8x8x128xbf16, #tpu.memory_space<vmem>>, vector<1x8x128xbf16>,
    %c4 = arith.constant 4 : index
    %c0_66 = arith.constant 0 : index
    %c0_67 = arith.constant 0 : index
    %166 = vector.load %arg2[%c4, %c0_66, %c0_67] : memref<8x8x512xbf16, #tpu.memory_space<vmem>>, vector<1x8x512xbf16>
    %167 = vector.shape_cast %166 : vector<1x8x512xbf16> to vector<8x512xbf16>
    %168 = arith.extf %167 : vector<8x512xbf16> to vector<8x512xf32>
    %cst_68 = arith.constant dense<0.000000e+00> : vector<8x512xf32>
    %169 = tpu.matmul %162, %3, %cst_68 {dimension_numbers = #tpu.dot_dimension_numbers<[1], [0], [0], [1], [0, 0, 1, 1], [], []>} : vector<8x128xbf16>, vector<128x512xbf16>, vector<8x512xf32> -> vector<8x512xf32>
    %170 = arith.addf %168, %169 : vector<8x512xf32>
    %171 = vector.extract_strided_slice %170 {offsets = [0, 0], sizes = [8, 128], strides = [1, 1]} : vector<8x512xf32> to vector<8x128xf32>
    %cst_69 = arith.constant 5.000000e-01 : f32
    %172 = vector.broadcast %cst_69 : f32 to vector<8x128xf32>
    %173 = arith.mulf %172, %171 : vector<8x128xf32>
    %174 = math.tanh %173 : vector<8x128xf32>
    %cst_70 = arith.constant 1.000000e+00 : f32
    %175 = vector.broadcast %cst_70 : f32 to vector<8x128xf32>
    %176 = arith.addf %174, %175 : vector<8x128xf32>
    %cst_71 = arith.constant 5.000000e-01 : f32
    %177 = vector.broadcast %cst_71 : f32 to vector<8x128xf32>
    %178 = arith.mulf %177, %176 : vector<8x128xf32>
    %179 = vector.extract_strided_slice %170 {offsets = [0, 128], sizes = [8, 128], strides = [1, 1]} : vector<8x512xf32> to vector<8x128xf32>
    %cst_72 = arith.constant 5.000000e-01 : f32
    %180 = vector.broadcast %cst_72 : f32 to vector<8x128xf32>
    %181 = arith.mulf %180, %179 : vector<8x128xf32>
    %182 = math.tanh %181 : vector<8x128xf32>
    %cst_73 = arith.constant 1.000000e+00 : f32
    %183 = vector.broadcast %cst_73 : f32 to vector<8x128xf32>
    %184 = arith.addf %182, %183 : vector<8x128xf32>
    %cst_74 = arith.constant 5.000000e-01 : f32
    %185 = vector.broadcast %cst_74 : f32 to vector<8x128xf32>
    %186 = arith.mulf %185, %184 : vector<8x128xf32>
    %187 = vector.extract_strided_slice %170 {offsets = [0, 256], sizes = [8, 128], strides = [1, 1]} : vector<8x512xf32> to vector<8x128xf32>
    %188 = math.tanh %187 : vector<8x128xf32>
    %189 = vector.extract_strided_slice %170 {offsets = [0, 384], sizes = [8, 128], strides = [1, 1]} : vector<8x512xf32> to vector<8x128xf32>
    %cst_75 = arith.constant 5.000000e-01 : f32
    %190 = vector.broadcast %cst_75 : f32 to vector<8x128xf32>
    %191 = arith.mulf %190, %189 : vector<8x128xf32>
    %192 = math.tanh %191 : vector<8x128xf32>
    %cst_76 = arith.constant 1.000000e+00 : f32
    %193 = vector.broadcast %cst_76 : f32 to vector<8x128xf32>
    %194 = arith.addf %192, %193 : vector<8x128xf32>
    %cst_77 = arith.constant 5.000000e-01 : f32
    %195 = vector.broadcast %cst_77 : f32 to vector<8x128xf32>
    %196 = arith.mulf %195, %194 : vector<8x128xf32>
    %197 = arith.mulf %186, %159 : vector<8x128xf32>
    %198 = arith.mulf %178, %188 : vector<8x128xf32>
    %199 = arith.addf %197, %198 : vector<8x128xf32>
    %200 = math.tanh %199 : vector<8x128xf32>
    %201 = arith.mulf %196, %200 : vector<8x128xf32>
    %202 = arith.truncf %201 : vector<8x128xf32> to vector<8x128xbf16>
    %c4_78 = arith.constant 4 : index
    %c0_79 = arith.constant 0 : index
    %c0_80 = arith.constant 0 : index
    %203 = vector.load %arg4[%c4_78, %c0_79, %c0_80] : memref<8x8x128xbf16, #tpu.memory_space<vmem>>, vector<1x8x128xbf16>
    %204 = vector.shape_cast %203 : vector<1x8x128xbf16> to vector<8x128xbf16>
    %205 = vector.shape_cast %202 : vector<8x128xbf16> to vector<1x8x128xbf16>
    tpu.vector_store %arg4[%c4_78, %c0_79, %c0_80], %205 {strides = array<i32>} : memref<8x8x128xbf16, #tpu.memory_space<vmem>>, vector<1x8x128xbf16>,
    %c5 = arith.constant 5 : index
    %c0_81 = arith.constant 0 : index
    %c0_82 = arith.constant 0 : index
    %206 = vector.load %arg2[%c5, %c0_81, %c0_82] : memref<8x8x512xbf16, #tpu.memory_space<vmem>>, vector<1x8x512xbf16>
    %207 = vector.shape_cast %206 : vector<1x8x512xbf16> to vector<8x512xbf16>
    %208 = arith.extf %207 : vector<8x512xbf16> to vector<8x512xf32>
    %cst_83 = arith.constant dense<0.000000e+00> : vector<8x512xf32>
    %209 = tpu.matmul %202, %3, %cst_83 {dimension_numbers = #tpu.dot_dimension_numbers<[1], [0], [0], [1], [0, 0, 1, 1], [], []>} : vector<8x128xbf16>, vector<128x512xbf16>, vector<8x512xf32> -> vector<8x512xf32>
    %210 = arith.addf %208, %209 : vector<8x512xf32>
    %211 = vector.extract_strided_slice %210 {offsets = [0, 0], sizes = [8, 128], strides = [1, 1]} : vector<8x512xf32> to vector<8x128xf32>
    %cst_84 = arith.constant 5.000000e-01 : f32
    %212 = vector.broadcast %cst_84 : f32 to vector<8x128xf32>
    %213 = arith.mulf %212, %211 : vector<8x128xf32>
    %214 = math.tanh %213 : vector<8x128xf32>
    %cst_85 = arith.constant 1.000000e+00 : f32
    %215 = vector.broadcast %cst_85 : f32 to vector<8x128xf32>
    %216 = arith.addf %214, %215 : vector<8x128xf32>
    %cst_86 = arith.constant 5.000000e-01 : f32
    %217 = vector.broadcast %cst_86 : f32 to vector<8x128xf32>
    %218 = arith.mulf %217, %216 : vector<8x128xf32>
    %219 = vector.extract_strided_slice %210 {offsets = [0, 128], sizes = [8, 128], strides = [1, 1]} : vector<8x512xf32> to vector<8x128xf32>
    %cst_87 = arith.constant 5.000000e-01 : f32
    %220 = vector.broadcast %cst_87 : f32 to vector<8x128xf32>
    %221 = arith.mulf %220, %219 : vector<8x128xf32>
    %222 = math.tanh %221 : vector<8x128xf32>
    %cst_88 = arith.constant 1.000000e+00 : f32
    %223 = vector.broadcast %cst_88 : f32 to vector<8x128xf32>
    %224 = arith.addf %222, %223 : vector<8x128xf32>
    %cst_89 = arith.constant 5.000000e-01 : f32
    %225 = vector.broadcast %cst_89 : f32 to vector<8x128xf32>
    %226 = arith.mulf %225, %224 : vector<8x128xf32>
    %227 = vector.extract_strided_slice %210 {offsets = [0, 256], sizes = [8, 128], strides = [1, 1]} : vector<8x512xf32> to vector<8x128xf32>
    %228 = math.tanh %227 : vector<8x128xf32>
    %229 = vector.extract_strided_slice %210 {offsets = [0, 384], sizes = [8, 128], strides = [1, 1]} : vector<8x512xf32> to vector<8x128xf32>
    %cst_90 = arith.constant 5.000000e-01 : f32
    %230 = vector.broadcast %cst_90 : f32 to vector<8x128xf32>
    %231 = arith.mulf %230, %229 : vector<8x128xf32>
    %232 = math.tanh %231 : vector<8x128xf32>
    %cst_91 = arith.constant 1.000000e+00 : f32
    %233 = vector.broadcast %cst_91 : f32 to vector<8x128xf32>
    %234 = arith.addf %232, %233 : vector<8x128xf32>
    %cst_92 = arith.constant 5.000000e-01 : f32
    %235 = vector.broadcast %cst_92 : f32 to vector<8x128xf32>
    %236 = arith.mulf %235, %234 : vector<8x128xf32>
    %237 = arith.mulf %226, %199 : vector<8x128xf32>
    %238 = arith.mulf %218, %228 : vector<8x128xf32>
    %239 = arith.addf %237, %238 : vector<8x128xf32>
    %240 = math.tanh %239 : vector<8x128xf32>
    %241 = arith.mulf %236, %240 : vector<8x128xf32>
    %242 = arith.truncf %241 : vector<8x128xf32> to vector<8x128xbf16>
    %c5_93 = arith.constant 5 : index
    %c0_94 = arith.constant 0 : index
    %c0_95 = arith.constant 0 : index
    %243 = vector.load %arg4[%c5_93, %c0_94, %c0_95] : memref<8x8x128xbf16, #tpu.memory_space<vmem>>, vector<1x8x128xbf16>
    %244 = vector.shape_cast %243 : vector<1x8x128xbf16> to vector<8x128xbf16>
    %245 = vector.shape_cast %242 : vector<8x128xbf16> to vector<1x8x128xbf16>
    tpu.vector_store %arg4[%c5_93, %c0_94, %c0_95], %245 {strides = array<i32>} : memref<8x8x128xbf16, #tpu.memory_space<vmem>>, vector<1x8x128xbf16>,
    %c6 = arith.constant 6 : index
    %c0_96 = arith.constant 0 : index
    %c0_97 = arith.constant 0 : index
    %246 = vector.load %arg2[%c6, %c0_96, %c0_97] : memref<8x8x512xbf16, #tpu.memory_space<vmem>>, vector<1x8x512xbf16>
    %247 = vector.shape_cast %246 : vector<1x8x512xbf16> to vector<8x512xbf16>
    %248 = arith.extf %247 : vector<8x512xbf16> to vector<8x512xf32>
    %cst_98 = arith.constant dense<0.000000e+00> : vector<8x512xf32>
    %249 = tpu.matmul %242, %3, %cst_98 {dimension_numbers = #tpu.dot_dimension_numbers<[1], [0], [0], [1], [0, 0, 1, 1], [], []>} : vector<8x128xbf16>, vector<128x512xbf16>, vector<8x512xf32> -> vector<8x512xf32>
    %250 = arith.addf %248, %249 : vector<8x512xf32>
    %251 = vector.extract_strided_slice %250 {offsets = [0, 0], sizes = [8, 128], strides = [1, 1]} : vector<8x512xf32> to vector<8x128xf32>
    %cst_99 = arith.constant 5.000000e-01 : f32
    %252 = vector.broadcast %cst_99 : f32 to vector<8x128xf32>
    %253 = arith.mulf %252, %251 : vector<8x128xf32>
    %254 = math.tanh %253 : vector<8x128xf32>
    %cst_100 = arith.constant 1.000000e+00 : f32
    %255 = vector.broadcast %cst_100 : f32 to vector<8x128xf32>
    %256 = arith.addf %254, %255 : vector<8x128xf32>
    %cst_101 = arith.constant 5.000000e-01 : f32
    %257 = vector.broadcast %cst_101 : f32 to vector<8x128xf32>
    %258 = arith.mulf %257, %256 : vector<8x128xf32>
    %259 = vector.extract_strided_slice %250 {offsets = [0, 128], sizes = [8, 128], strides = [1, 1]} : vector<8x512xf32> to vector<8x128xf32>
    %cst_102 = arith.constant 5.000000e-01 : f32
    %260 = vector.broadcast %cst_102 : f32 to vector<8x128xf32>
    %261 = arith.mulf %260, %259 : vector<8x128xf32>
    %262 = math.tanh %261 : vector<8x128xf32>
    %cst_103 = arith.constant 1.000000e+00 : f32
    %263 = vector.broadcast %cst_103 : f32 to vector<8x128xf32>
    %264 = arith.addf %262, %263 : vector<8x128xf32>
    %cst_104 = arith.constant 5.000000e-01 : f32
    %265 = vector.broadcast %cst_104 : f32 to vector<8x128xf32>
    %266 = arith.mulf %265, %264 : vector<8x128xf32>
    %267 = vector.extract_strided_slice %250 {offsets = [0, 256], sizes = [8, 128], strides = [1, 1]} : vector<8x512xf32> to vector<8x128xf32>
    %268 = math.tanh %267 : vector<8x128xf32>
    %269 = vector.extract_strided_slice %250 {offsets = [0, 384], sizes = [8, 128], strides = [1, 1]} : vector<8x512xf32> to vector<8x128xf32>
    %cst_105 = arith.constant 5.000000e-01 : f32
    %270 = vector.broadcast %cst_105 : f32 to vector<8x128xf32>
    %271 = arith.mulf %270, %269 : vector<8x128xf32>
    %272 = math.tanh %271 : vector<8x128xf32>
    %cst_106 = arith.constant 1.000000e+00 : f32
    %273 = vector.broadcast %cst_106 : f32 to vector<8x128xf32>
    %274 = arith.addf %272, %273 : vector<8x128xf32>
    %cst_107 = arith.constant 5.000000e-01 : f32
    %275 = vector.broadcast %cst_107 : f32 to vector<8x128xf32>
    %276 = arith.mulf %275, %274 : vector<8x128xf32>
    %277 = arith.mulf %266, %239 : vector<8x128xf32>
    %278 = arith.mulf %258, %268 : vector<8x128xf32>
    %279 = arith.addf %277, %278 : vector<8x128xf32>
    %280 = math.tanh %279 : vector<8x128xf32>
    %281 = arith.mulf %276, %280 : vector<8x128xf32>
    %282 = arith.truncf %281 : vector<8x128xf32> to vector<8x128xbf16>
    %c6_108 = arith.constant 6 : index
    %c0_109 = arith.constant 0 : index
    %c0_110 = arith.constant 0 : index
    %283 = vector.load %arg4[%c6_108, %c0_109, %c0_110] : memref<8x8x128xbf16, #tpu.memory_space<vmem>>, vector<1x8x128xbf16>
    %284 = vector.shape_cast %283 : vector<1x8x128xbf16> to vector<8x128xbf16>
    %285 = vector.shape_cast %282 : vector<8x128xbf16> to vector<1x8x128xbf16>
    tpu.vector_store %arg4[%c6_108, %c0_109, %c0_110], %285 {strides = array<i32>} : memref<8x8x128xbf16, #tpu.memory_space<vmem>>, vector<1x8x128xbf16>,
    %c7 = arith.constant 7 : index
    %c0_111 = arith.constant 0 : index
    %c0_112 = arith.constant 0 : index
    %286 = vector.load %arg2[%c7, %c0_111, %c0_112] : memref<8x8x512xbf16, #tpu.memory_space<vmem>>, vector<1x8x512xbf16>
    %287 = vector.shape_cast %286 : vector<1x8x512xbf16> to vector<8x512xbf16>
    %288 = arith.extf %287 : vector<8x512xbf16> to vector<8x512xf32>
    %cst_113 = arith.constant dense<0.000000e+00> : vector<8x512xf32>
    %289 = tpu.matmul %282, %3, %cst_113 {dimension_numbers = #tpu.dot_dimension_numbers<[1], [0], [0], [1], [0, 0, 1, 1], [], []>} : vector<8x128xbf16>, vector<128x512xbf16>, vector<8x512xf32> -> vector<8x512xf32>
    %290 = arith.addf %288, %289 : vector<8x512xf32>
    %291 = vector.extract_strided_slice %290 {offsets = [0, 0], sizes = [8, 128], strides = [1, 1]} : vector<8x512xf32> to vector<8x128xf32>
    %cst_114 = arith.constant 5.000000e-01 : f32
    %292 = vector.broadcast %cst_114 : f32 to vector<8x128xf32>
    %293 = arith.mulf %292, %291 : vector<8x128xf32>
    %294 = math.tanh %293 : vector<8x128xf32>
    %cst_115 = arith.constant 1.000000e+00 : f32
    %295 = vector.broadcast %cst_115 : f32 to vector<8x128xf32>
    %296 = arith.addf %294, %295 : vector<8x128xf32>
    %cst_116 = arith.constant 5.000000e-01 : f32
    %297 = vector.broadcast %cst_116 : f32 to vector<8x128xf32>
    %298 = arith.mulf %297, %296 : vector<8x128xf32>
    %299 = vector.extract_strided_slice %290 {offsets = [0, 128], sizes = [8, 128], strides = [1, 1]} : vector<8x512xf32> to vector<8x128xf32>
    %cst_117 = arith.constant 5.000000e-01 : f32
    %300 = vector.broadcast %cst_117 : f32 to vector<8x128xf32>
    %301 = arith.mulf %300, %299 : vector<8x128xf32>
    %302 = math.tanh %301 : vector<8x128xf32>
    %cst_118 = arith.constant 1.000000e+00 : f32
    %303 = vector.broadcast %cst_118 : f32 to vector<8x128xf32>
    %304 = arith.addf %302, %303 : vector<8x128xf32>
    %cst_119 = arith.constant 5.000000e-01 : f32
    %305 = vector.broadcast %cst_119 : f32 to vector<8x128xf32>
    %306 = arith.mulf %305, %304 : vector<8x128xf32>
    %307 = vector.extract_strided_slice %290 {offsets = [0, 256], sizes = [8, 128], strides = [1, 1]} : vector<8x512xf32> to vector<8x128xf32>
    %308 = math.tanh %307 : vector<8x128xf32>
    %309 = vector.extract_strided_slice %290 {offsets = [0, 384], sizes = [8, 128], strides = [1, 1]} : vector<8x512xf32> to vector<8x128xf32>
    %cst_120 = arith.constant 5.000000e-01 : f32
    %310 = vector.broadcast %cst_120 : f32 to vector<8x128xf32>
    %311 = arith.mulf %310, %309 : vector<8x128xf32>
    %312 = math.tanh %311 : vector<8x128xf32>
    %cst_121 = arith.constant 1.000000e+00 : f32
    %313 = vector.broadcast %cst_121 : f32 to vector<8x128xf32>
    %314 = arith.addf %312, %313 : vector<8x128xf32>
    %cst_122 = arith.constant 5.000000e-01 : f32
    %315 = vector.broadcast %cst_122 : f32 to vector<8x128xf32>
    %316 = arith.mulf %315, %314 : vector<8x128xf32>
    %317 = arith.mulf %306, %279 : vector<8x128xf32>
    %318 = arith.mulf %298, %308 : vector<8x128xf32>
    %319 = arith.addf %317, %318 : vector<8x128xf32>
    %320 = math.tanh %319 : vector<8x128xf32>
    %321 = arith.mulf %316, %320 : vector<8x128xf32>
    %322 = arith.truncf %321 : vector<8x128xf32> to vector<8x128xbf16>
    %c7_123 = arith.constant 7 : index
    %c0_124 = arith.constant 0 : index
    %c0_125 = arith.constant 0 : index
    %323 = vector.load %arg4[%c7_123, %c0_124, %c0_125] : memref<8x8x128xbf16, #tpu.memory_space<vmem>>, vector<1x8x128xbf16>
    %324 = vector.shape_cast %323 : vector<1x8x128xbf16> to vector<8x128xbf16>
    %325 = vector.shape_cast %322 : vector<8x128xbf16> to vector<1x8x128xbf16>
    tpu.vector_store %arg4[%c7_123, %c0_124, %c0_125], %325 {strides = array<i32>} : memref<8x8x128xbf16, #tpu.memory_space<vmem>>, vector<1x8x128xbf16>,
    %c0_126 = arith.constant 0 : index
    %c0_127 = arith.constant 0 : index
    %326 = vector.load %arg6[%c0_126, %c0_127] : memref<8x128xbf16, #tpu.memory_space<vmem>>, vector<8x128xbf16>
    tpu.vector_store %arg6[%c0_126, %c0_127], %322 {strides = array<i32>} : memref<8x128xbf16, #tpu.memory_space<vmem>>, vector<8x128xbf16>,
    %c0_128 = arith.constant 0 : index
    %c0_129 = arith.constant 0 : index
    %327 = vector.load %arg7[%c0_128, %c0_129] : memref<8x128xf32, #tpu.memory_space<vmem>>, vector<8x128xf32>
    tpu.vector_store %arg7[%c0_128, %c0_129], %319 {strides = array<i32>} : memref<8x128xf32, #tpu.memory_space<vmem>>, vector<8x128xf32>,
    %c0_i32_130 = arith.constant 0 : i32
    %328 = arith.cmpi eq, %arg1, %c0_i32_130 : i32
    %329 = arith.extui %328 : i1 to i32
    %c0_i32_131 = arith.constant 0 : i32
    %330 = arith.cmpi ne, %329, %c0_i32_131 : i32
    scf.if %330 {
      %331 = arith.extf %322 : vector<8x128xbf16> to vector<8x128xf32>
      %c0_132 = arith.constant 0 : index
      %c0_133 = arith.constant 0 : index
      %332 = vector.load %arg5[%c0_132, %c0_133] : memref<8x128xf32, #tpu.memory_space<vmem>>, vector<8x128xf32>
      tpu.vector_store %arg5[%c0_132, %c0_133], %331 {strides = array<i32>} : memref<8x128xf32, #tpu.memory_space<vmem>>, vector<8x128xf32>,
    } else {
    }
    return
  }
  func.func @transform_0(%arg0: i32, %arg1: i32) -> (i32, i32, i32) {
    %c0_i32 = arith.constant 0 : i32
    %c0_i32_0 = arith.constant 0 : i32
    return %arg1, %arg0, %c0_i32 : i32, i32, i32
  }
  func.func @transform_1(%arg0: i32, %arg1: i32) -> (i32, i32) {
    %c0_i32 = arith.constant 0 : i32
    %c0_i32_0 = arith.constant 0 : i32
    %c0_i32_1 = arith.constant 0 : i32
    return %c0_i32, %c0_i32_0 : i32, i32
  }
  func.func @transform_2(%arg0: i32, %arg1: i32) -> (i32, i32, i32) {
    %c0_i32 = arith.constant 0 : i32
    %c0_i32_0 = arith.constant 0 : i32
    return %arg1, %arg0, %c0_i32 : i32, i32, i32
  }
  func.func @transform_3(%arg0: i32, %arg1: i32) -> (i32, i32) {
    %c0_i32 = arith.constant 0 : i32
    %c0_i32_0 = arith.constant 0 : i32
    return %arg0, %c0_i32 : i32, i32
  }
}

module attributes {stable_mosaic.version = 11 : i64} {
  func.func @_matmul_bias_kernel(%arg0: i32, %arg1: i32, %arg2: memref<16x128xf32, #tpu.memory_space<vmem>>, %arg3: memref<128x128xf32, #tpu.memory_space<vmem>>, %arg4: memref<1x128xf32, #tpu.memory_space<vmem>>, %arg5: memref<16x128xf32, #tpu.memory_space<vmem>>) attributes {dimension_semantics = [#tpu.dimension_semantics<parallel>, #tpu.dimension_semantics<parallel>], iteration_bounds = array<i64: 1, 1>, scalar_prefetch = 0 : i64, scratch_operands = 0 : i64, tpu.core_type = #tpu.core_type<tc>, window_params = [{transform_indices = @transform_0, window_bounds = array<i64: 16, 128>}, {transform_indices = @transform_1, window_bounds = array<i64: 128, 128>}, {transform_indices = @transform_2, window_bounds = array<i64: 1, 128>}, {transform_indices = @transform_3, window_bounds = array<i64: 16, 128>}]} {
    %c0 = arith.constant 0 : index
    %c0_0 = arith.constant 0 : index
    %0 = vector.load %arg2[%c0, %c0_0] : memref<16x128xf32, #tpu.memory_space<vmem>>, vector<16x128xf32>
    %c0_1 = arith.constant 0 : index
    %c0_2 = arith.constant 0 : index
    %1 = vector.load %arg3[%c0_1, %c0_2] : memref<128x128xf32, #tpu.memory_space<vmem>>, vector<128x128xf32>
    %cst = arith.constant dense<0.000000e+00> : vector<16x128xf32>
    %2 = tpu.matmul %0, %1, %cst {dimension_numbers = #tpu.dot_dimension_numbers<[1], [0], [0], [1], [0, 0, 1, 1], [], []>} : vector<16x128xf32>, vector<128x128xf32>, vector<16x128xf32> -> vector<16x128xf32>
    %c0_3 = arith.constant 0 : index
    %c0_4 = arith.constant 0 : index
    %3 = vector.load %arg4[%c0_3, %c0_4] : memref<1x128xf32, #tpu.memory_space<vmem>>, vector<1x128xf32>
    %4 = vector.broadcast %3 : vector<1x128xf32> to vector<16x128xf32>
    %5 = arith.addf %2, %4 : vector<16x128xf32>
    %c0_5 = arith.constant 0 : index
    %c0_6 = arith.constant 0 : index
    %6 = vector.load %arg5[%c0_5, %c0_6] : memref<16x128xf32, #tpu.memory_space<vmem>>, vector<16x128xf32>
    tpu.vector_store %arg5[%c0_5, %c0_6], %5 {strides = array<i32>} : memref<16x128xf32, #tpu.memory_space<vmem>>, vector<16x128xf32>,
    return
  }
  func.func @transform_0(%arg0: i32, %arg1: i32) -> (i32, i32) {
    %c0_i32 = arith.constant 0 : i32
    %c0_i32_0 = arith.constant 0 : i32
    return %arg0, %c0_i32 : i32, i32
  }
  func.func @transform_1(%arg0: i32, %arg1: i32) -> (i32, i32) {
    %c0_i32 = arith.constant 0 : i32
    %c0_i32_0 = arith.constant 0 : i32
    return %c0_i32, %arg1 : i32, i32
  }
  func.func @transform_2(%arg0: i32, %arg1: i32) -> (i32, i32) {
    %c0_i32 = arith.constant 0 : i32
    %c0_i32_0 = arith.constant 0 : i32
    return %c0_i32, %arg1 : i32, i32
  }
  func.func @transform_3(%arg0: i32, %arg1: i32) -> (i32, i32) {
    %c0_i32 = arith.constant 0 : i32
    return %arg0, %arg1 : i32, i32
  }
}

</mosaic_0001>

<llo_original>
// kernel: lstm_forward.5
$region0: #{lstm_forward.5}
  #allocation0 [shape = 'u32[]', space=smem, size = 0x4, offset = 0x4, fixed_abs, tag = 'smem constant byte address 0x4 - core index']
  #allocation1 [shape = 'u32[72,128]{1,0:T(1,128)}', space=vmem, size = 0x9000, scoped, tag = 'internal scratch']
  %s0 = inlined_call_operand.vmem [shape: bf16[64,8], index: 0, kind: input, shape index: {}]
  %s1 = inlined_call_operand.vmem [shape: bf16[8,512], index: 1, kind: input, shape index: {}]
  %s2 = inlined_call_operand.vmem [shape: f32[1,512], index: 2, kind: input, shape index: {}]
  %s3 = inlined_call_operand.vmem [shape: bf16[64,512], index: 3, kind: output, shape index: {}]
  %s4 = sld [smem:[#allocation0]]
  $region22: #{lstm_forward.5} parent=0
    _
  %s6 = ssub.s32 1, %s4
  %s7 = scalar_select 0, %s6, %s4
  // Predicated region
  $region2: #{lstm_forward.5} parent=0 // pred_check
    _
  $region3: #{lstm_forward.5} parent=0 // pred_check_branch
    %9 = sbr.rel (0) target = $region5
  $region4: #{lstm_forward.5} parent=0 // pred_region
    _
  $region5: #{lstm_forward.5} parent=0 // pred_fallthru
    _
  // Predicated region
  $region6: #{lstm_forward.5} parent=0 // pred_check
    _
  $region7: #{lstm_forward.5} parent=0 // pred_check_branch
    %11 = sbr.rel (0) target = $region9
  $region8: #{lstm_forward.5} parent=0 // pred_region
    _
  $region9: #{lstm_forward.5} parent=0 // pred_fallthru
    _
  // Predicated region
  $region10: #{lstm_forward.5} parent=0 // pred_check
    _
  $region11: #{lstm_forward.5} parent=0 // pred_check_branch
    %13 = sbr.rel (0) target = $region13
  $region12: #{lstm_forward.5} parent=0 // pred_region
    _
  $region13: #{lstm_forward.5} parent=0 // pred_fallthru
    _
  %v15 = vld [vmem:[%s0] sm:$0xf]
  %v16 = vld [vmem:[%s0 + $0x4] sm:$0xf]
  %v17 = vld [vmem:[%s0 + $0x8] sm:$0xf]
  %v18 = vld [vmem:[%s0 + $0xc] sm:$0xf]
  %v19 = vld [vmem:[%s0 + $0x10] sm:$0xf]
  %v20 = vld [vmem:[%s0 + $0x14] sm:$0xf]
  %v21 = vld [vmem:[%s0 + $0x18] sm:$0xf]
  %v22 = vld [vmem:[%s0 + $0x1c] sm:$0xf]
  %v23 = vld [vmem:[%s1] sm:$0xff]
  %v24 = vld [vmem:[%s1 + $0x8] sm:$0xff]
  %v25 = vld [vmem:[%s2] sm:$0xf]
  %v27 = vperm.slane %v25, 0
  %v28 = vperm.slane %v25, 1
  %v29 = vperm.slane %v25, 2
  %v30 = vperm.slane %v25, 3
  %v43 = vunpack.c.l.b16 %v15
  %v44 = vunpack.c.l.b16 %v16
  %v45 = vunpack.c.l.b16 %v17
  %v46 = vunpack.c.l.b16 %v18
  %v47 = vunpack.c.l.b16 %v19
  %v48 = vunpack.c.l.b16 %v20
  %v49 = vunpack.c.l.b16 %v21
  %v50 = vunpack.c.l.b16 %v22
  %v51 = vpack.c.b16 %v44, %v43
  %v52 = vpack.c.b16 %v46, %v45
  %v53 = vpack.c.b16 %v48, %v47
  %v54 = vpack.c.b16 %v50, %v49
  %v57 = vunpack.c.l.b16 %v23
  %v58 = vunpack.c.h.b16 %v23
  %v59 = vunpack.c.l.b16 %v24
  %v60 = vunpack.c.h.b16 %v24
  %v61 = vpack.c.b16 %v57, %v57
  %v62 = vpack.c.b16 %v58, %v58
  %v63 = vpack.c.b16 %v59, %v59
  %v64 = vpack.c.b16 %v60, %v60
  %vm65 = vcmask 64512
  %v67 = vsel %vm65, %v51, 0
  %v70 = vsel %vm65, %v52, 0
  %v73 = vsel %vm65, %v53, 0
  %v76 = vsel %vm65, %v54, 0
  %vm78 = vcmask 1043456
  %v80 = vsel %vm78, %v61, 0
  %v83 = vsel %vm78, %v62, 0
  %v86 = vsel %vm78, %v63, 0
  %v89 = vsel %vm78, %v64, 0
  %91 = vmatpush.bf16.msra.mxu0 0
  %92 = vmatpush.bf16.msra.mxu0 0
  %93 = vmatpush.bf16.msra.mxu0 0
  %94 = vmatpush.bf16.msra.mxu0 0
  %95 = vmatpush.bf16.msra.mxu0 0
  %96 = vmatpush.bf16.msra.mxu0 0
  %97 = vmatpush.bf16.msra.mxu0 0
  %98 = vmatpush.bf16.msra.mxu0 %v80
  %99 = vmatmul.bf16.gmra.mxu0 %v67
  %v100 = vpop.f32.mrf.mxu0
  %v101 = vadd.f32 %v27, %v100
  %v102 = vpop.f32.mrf.mxu0
  %v103 = vadd.f32 %v27, %v102
  %104 = vmatmul.bf16.gmra.mxu0 %v70
  %v105 = vpop.f32.mrf.mxu0
  %v106 = vadd.f32 %v27, %v105
  %v107 = vpop.f32.mrf.mxu0
  %v108 = vadd.f32 %v27, %v107
  %109 = vmatmul.bf16.gmra.mxu0 %v73
  %v110 = vpop.f32.mrf.mxu0
  %v111 = vadd.f32 %v27, %v110
  %v112 = vpop.f32.mrf.mxu0
  %v113 = vadd.f32 %v27, %v112
  %114 = vmatmul.bf16.gmra.mxu0 %v76
  %v115 = vpop.f32.mrf.mxu0
  %v116 = vadd.f32 %v27, %v115
  %v117 = vpop.f32.mrf.mxu0
  %v118 = vadd.f32 %v27, %v117
  %119 = vdwg.mxu0
  %120 = vmatpush.bf16.msra.mxu0 0
  %121 = vmatpush.bf16.msra.mxu0 0
  %122 = vmatpush.bf16.msra.mxu0 0
  %123 = vmatpush.bf16.msra.mxu0 0
  %124 = vmatpush.bf16.msra.mxu0 0
  %125 = vmatpush.bf16.msra.mxu0 0
  %126 = vmatpush.bf16.msra.mxu0 0
  %127 = vmatpush.bf16.msra.mxu0 %v83
  %128 = vmatmul.bf16.gmra.mxu0 %v67
  %v129 = vpop.f32.mrf.mxu0
  %v130 = vadd.f32 %v28, %v129
  %v131 = vpop.f32.mrf.mxu0
  %v132 = vadd.f32 %v28, %v131
  %133 = vmatmul.bf16.gmra.mxu0 %v70
  %v134 = vpop.f32.mrf.mxu0
  %v135 = vadd.f32 %v28, %v134
  %v136 = vpop.f32.mrf.mxu0
  %v137 = vadd.f32 %v28, %v136
  %138 = vmatmul.bf16.gmra.mxu0 %v73
  %v139 = vpop.f32.mrf.mxu0
  %v140 = vadd.f32 %v28, %v139
  %v141 = vpop.f32.mrf.mxu0
  %v142 = vadd.f32 %v28, %v141
  %143 = vmatmul.bf16.gmra.mxu0 %v76
  %v144 = vpop.f32.mrf.mxu0
  %v145 = vadd.f32 %v28, %v144
  %v146 = vpop.f32.mrf.mxu0
  %v147 = vadd.f32 %v28, %v146
  %148 = vdwg.mxu0
  %149 = vmatpush.bf16.msra.mxu0 0
  %150 = vmatpush.bf16.msra.mxu0 0
  %151 = vmatpush.bf16.msra.mxu0 0
  %152 = vmatpush.bf16.msra.mxu0 0
  %153 = vmatpush.bf16.msra.mxu0 0
  %154 = vmatpush.bf16.msra.mxu0 0
  %155 = vmatpush.bf16.msra.mxu0 0
  %156 = vmatpush.bf16.msra.mxu0 %v86
  %157 = vmatmul.bf16.gmra.mxu0 %v67
  %v158 = vpop.f32.mrf.mxu0
  %v159 = vadd.f32 %v29, %v158
  %v160 = vpop.f32.mrf.mxu0
  %v161 = vadd.f32 %v29, %v160
  %162 = vmatmul.bf16.gmra.mxu0 %v70
  %v163 = vpop.f32.mrf.mxu0
  %v164 = vadd.f32 %v29, %v163
  %v165 = vpop.f32.mrf.mxu0
  %v166 = vadd.f32 %v29, %v165
  %167 = vmatmul.bf16.gmra.mxu0 %v73
  %v168 = vpop.f32.mrf.mxu0
  %v169 = vadd.f32 %v29, %v168
  %v170 = vpop.f32.mrf.mxu0
  %v171 = vadd.f32 %v29, %v170
  %172 = vmatmul.bf16.gmra.mxu0 %v76
  %v173 = vpop.f32.mrf.mxu0
  %v174 = vadd.f32 %v29, %v173
  %v175 = vpop.f32.mrf.mxu0
  %v176 = vadd.f32 %v29, %v175
  %177 = vdwg.mxu0
  %178 = vmatpush.bf16.msra.mxu0 0
  %179 = vmatpush.bf16.msra.mxu0 0
  %180 = vmatpush.bf16.msra.mxu0 0
  %181 = vmatpush.bf16.msra.mxu0 0
  %182 = vmatpush.bf16.msra.mxu0 0
  %183 = vmatpush.bf16.msra.mxu0 0
  %184 = vmatpush.bf16.msra.mxu0 0
  %185 = vmatpush.bf16.msra.mxu0 %v89
  %186 = vmatmul.bf16.gmra.mxu0 %v67
  %v187 = vpop.f32.mrf.mxu0
  %v188 = vadd.f32 %v30, %v187
  %v189 = vpop.f32.mrf.mxu0
  %v190 = vadd.f32 %v30, %v189
  %191 = vmatmul.bf16.gmra.mxu0 %v70
  %v192 = vpop.f32.mrf.mxu0
  %v193 = vadd.f32 %v30, %v192
  %v194 = vpop.f32.mrf.mxu0
  %v195 = vadd.f32 %v30, %v194
  %196 = vmatmul.bf16.gmra.mxu0 %v73
  %v197 = vpop.f32.mrf.mxu0
  %v198 = vadd.f32 %v30, %v197
  %v199 = vpop.f32.mrf.mxu0
  %v200 = vadd.f32 %v30, %v199
  %201 = vmatmul.bf16.gmra.mxu0 %v76
  %v202 = vpop.f32.mrf.mxu0
  %v203 = vadd.f32 %v30, %v202
  %v204 = vpop.f32.mrf.mxu0
  %v205 = vadd.f32 %v30, %v204
  %206 = vdwg.mxu0
  %v207 = vpack.c.bf16 %v130, %v101
  %v208 = vpack.c.bf16 %v188, %v159
  %v209 = vpack.c.bf16 %v132, %v103
  %v210 = vpack.c.bf16 %v190, %v161
  %v211 = vpack.c.bf16 %v135, %v106
  %v212 = vpack.c.bf16 %v193, %v164
  %v213 = vpack.c.bf16 %v137, %v108
  %v214 = vpack.c.bf16 %v195, %v166
  %v215 = vpack.c.bf16 %v140, %v111
  %v216 = vpack.c.bf16 %v198, %v169
  %v217 = vpack.c.bf16 %v142, %v113
  %v218 = vpack.c.bf16 %v200, %v171
  %v219 = vpack.c.bf16 %v145, %v116
  %v220 = vpack.c.bf16 %v203, %v174
  %v221 = vpack.c.bf16 %v147, %v118
  %v222 = vpack.c.bf16 %v205, %v176
  %223 = vst [vmem:[%s3] sm:$0xff] %v207
  %224 = vst [vmem:[%s3 + $0x8] sm:$0xff] %v208
  %225 = vst [vmem:[%s3 + $0x10] sm:$0xff] %v209
  %226 = vst [vmem:[%s3 + $0x18] sm:$0xff] %v210
  %227 = vst [vmem:[%s3 + $0x20] sm:$0xff] %v211
  %228 = vst [vmem:[%s3 + $0x28] sm:$0xff] %v212
  %229 = vst [vmem:[%s3 + $0x30] sm:$0xff] %v213
  %230 = vst [vmem:[%s3 + $0x38] sm:$0xff] %v214
  %231 = vst [vmem:[%s3 + $0x40] sm:$0xff] %v215
  %232 = vst [vmem:[%s3 + $0x48] sm:$0xff] %v216
  %233 = vst [vmem:[%s3 + $0x50] sm:$0xff] %v217
  %234 = vst [vmem:[%s3 + $0x58] sm:$0xff] %v218
  %235 = vst [vmem:[%s3 + $0x60] sm:$0xff] %v219
  %236 = vst [vmem:[%s3 + $0x68] sm:$0xff] %v220
  %237 = vst [vmem:[%s3 + $0x70] sm:$0xff] %v221
  %238 = vst [vmem:[%s3 + $0x78] sm:$0xff] %v222
  // Predicated region
  $region14: #{lstm_forward.5} parent=0 // pred_check
    _
  $region15: #{lstm_forward.5} parent=0 // pred_check_branch
    %240 = sbr.rel (0) target = $region17
  $region16: #{lstm_forward.5} parent=0 // pred_region
    _
  $region17: #{lstm_forward.5} parent=0 // pred_fallthru
    _
  // Predicated region
  $region18: #{lstm_forward.5} parent=0 // pred_check
    _
  $region19: #{lstm_forward.5} parent=0 // pred_check_branch
    %242 = sbr.rel (0) target = $region21
  $region20: #{lstm_forward.5} parent=0 // pred_region
    _
  $region21: #{lstm_forward.5} parent=0 // pred_fallthru
    _

// kernel: lstm_forward.7
$region0: #{lstm_forward.7}
  #allocation0 [shape = 'u32[]', space=smem, size = 0x4, offset = 0x4, fixed_abs, tag = 'smem constant byte address 0x4 - core index']
  #allocation1 [shape = 'u32[72,128]{1,0:T(1,128)}', space=vmem, size = 0x9000, scoped, tag = 'internal scratch']
  %s0 = inlined_call_operand.vmem [shape: bf16[64,128], index: 0, kind: input, shape index: {}]
  %s1 = inlined_call_operand.vmem [shape: bf16[128,512], index: 1, kind: input, shape index: {}]
  %s2 = inlined_call_operand.vmem [shape: f32[1,512], index: 2, kind: input, shape index: {}]
  %s3 = inlined_call_operand.vmem [shape: bf16[64,512], index: 3, kind: output, shape index: {}]
  %s4 = sld [smem:[#allocation0]]
  $region22: #{lstm_forward.7} parent=0
    _
  %s6 = ssub.s32 1, %s4
  %s7 = scalar_select 0, %s6, %s4
  // Predicated region
  $region2: #{lstm_forward.7} parent=0 // pred_check
    _
  $region3: #{lstm_forward.7} parent=0 // pred_check_branch
    %9 = sbr.rel (0) target = $region5
  $region4: #{lstm_forward.7} parent=0 // pred_region
    _
  $region5: #{lstm_forward.7} parent=0 // pred_fallthru
    _
  // Predicated region
  $region6: #{lstm_forward.7} parent=0 // pred_check
    _
  $region7: #{lstm_forward.7} parent=0 // pred_check_branch
    %11 = sbr.rel (0) target = $region9
  $region8: #{lstm_forward.7} parent=0 // pred_region
    _
  $region9: #{lstm_forward.7} parent=0 // pred_fallthru
    _
  // Predicated region
  $region10: #{lstm_forward.7} parent=0 // pred_check
    _
  $region11: #{lstm_forward.7} parent=0 // pred_check_branch
    %13 = sbr.rel (0) target = $region13
  $region12: #{lstm_forward.7} parent=0 // pred_region
    _
  $region13: #{lstm_forward.7} parent=0 // pred_fallthru
    _
  %v14 = vld [vmem:[%s0] sm:$0xf]
  %v15 = vld [vmem:[%s0 + $0x4] sm:$0xf]
  %v16 = vld [vmem:[%s0 + $0x8] sm:$0xf]
  %v17 = vld [vmem:[%s0 + $0xc] sm:$0xf]
  %v18 = vld [vmem:[%s0 + $0x10] sm:$0xf]
  %v19 = vld [vmem:[%s0 + $0x14] sm:$0xf]
  %v20 = vld [vmem:[%s0 + $0x18] sm:$0xf]
  %v21 = vld [vmem:[%s0 + $0x1c] sm:$0xf]
  %v22 = vld [vmem:[%s1] sm:$0xff]
  %v23 = vld [vmem:[%s1 + $0x8] sm:$0xff]
  %v24 = vld [vmem:[%s1 + $0x10] sm:$0xff]
  %v25 = vld [vmem:[%s1 + $0x18] sm:$0xff]
  %v26 = vld [vmem:[%s1 + $0x20] sm:$0xff]
  %v27 = vld [vmem:[%s1 + $0x28] sm:$0xff]
  %v28 = vld [vmem:[%s1 + $0x30] sm:$0xff]
  %v29 = vld [vmem:[%s1 + $0x38] sm:$0xff]
  %v30 = vld [vmem:[%s1 + $0x40] sm:$0xff]
  %v31 = vld [vmem:[%s1 + $0x48] sm:$0xff]
  %v32 = vld [vmem:[%s1 + $0x50] sm:$0xff]
  %v33 = vld [vmem:[%s1 + $0x58] sm:$0xff]
  %v34 = vld [vmem:[%s1 + $0x60] sm:$0xff]
  %v35 = vld [vmem:[%s1 + $0x68] sm:$0xff]
  %v36 = vld [vmem:[%s1 + $0x70] sm:$0xff]
  %v37 = vld [vmem:[%s1 + $0x78] sm:$0xff]
  %v38 = vld [vmem:[%s1 + $0x80] sm:$0xff]
  %v39 = vld [vmem:[%s1 + $0x88] sm:$0xff]
  %v40 = vld [vmem:[%s1 + $0x90] sm:$0xff]
  %v41 = vld [vmem:[%s1 + $0x98] sm:$0xff]
  %v42 = vld [vmem:[%s1 + $0xa0] sm:$0xff]
  %v43 = vld [vmem:[%s1 + $0xa8] sm:$0xff]
  %v44 = vld [vmem:[%s1 + $0xb0] sm:$0xff]
  %v45 = vld [vmem:[%s1 + $0xb8] sm:$0xff]
  %v46 = vld [vmem:[%s1 + $0xc0] sm:$0xff]
  %v47 = vld [vmem:[%s1 + $0xc8] sm:$0xff]
  %v48 = vld [vmem:[%s1 + $0xd0] sm:$0xff]
  %v49 = vld [vmem:[%s1 + $0xd8] sm:$0xff]
  %v50 = vld [vmem:[%s1 + $0xe0] sm:$0xff]
  %v51 = vld [vmem:[%s1 + $0xe8] sm:$0xff]
  %v52 = vld [vmem:[%s1 + $0xf0] sm:$0xff]
  %v53 = vld [vmem:[%s1 + $0xf8] sm:$0xff]
  %v54 = vld [vmem:[%s2] sm:$0xf]
  %v56 = vperm.slane %v54, 0
  %v57 = vperm.slane %v54, 1
  %v58 = vperm.slane %v54, 2
  %v59 = vperm.slane %v54, 3
  %v72 = vunpack.c.l.b16 %v14
  %v73 = vunpack.c.l.b16 %v15
  %v74 = vunpack.c.l.b16 %v16
  %v75 = vunpack.c.l.b16 %v17
  %v76 = vunpack.c.l.b16 %v18
  %v77 = vunpack.c.l.b16 %v19
  %v78 = vunpack.c.l.b16 %v20
  %v79 = vunpack.c.l.b16 %v21
  %v80 = vpack.c.b16 %v73, %v72
  %v81 = vpack.c.b16 %v75, %v74
  %v82 = vpack.c.b16 %v77, %v76
  %v83 = vpack.c.b16 %v79, %v78
  %v120 = vunpack.c.l.b16 %v22
  %v121 = vunpack.c.h.b16 %v22
  %v122 = vunpack.c.l.b16 %v23
  %v123 = vunpack.c.h.b16 %v23
  %v124 = vunpack.c.l.b16 %v24
  %v125 = vunpack.c.h.b16 %v24
  %v126 = vunpack.c.l.b16 %v25
  %v127 = vunpack.c.h.b16 %v25
  %v128 = vunpack.c.l.b16 %v26
  %v129 = vunpack.c.h.b16 %v26
  %v130 = vunpack.c.l.b16 %v27
  %v131 = vunpack.c.h.b16 %v27
  %v132 = vunpack.c.l.b16 %v28
  %v133 = vunpack.c.h.b16 %v28
  %v134 = vunpack.c.l.b16 %v29
  %v135 = vunpack.c.h.b16 %v29
  %v136 = vunpack.c.l.b16 %v30
  %v137 = vunpack.c.h.b16 %v30
  %v138 = vunpack.c.l.b16 %v31
  %v139 = vunpack.c.h.b16 %v31
  %v140 = vunpack.c.l.b16 %v32
  %v141 = vunpack.c.h.b16 %v32
  %v142 = vunpack.c.l.b16 %v33
  %v143 = vunpack.c.h.b16 %v33
  %v144 = vunpack.c.l.b16 %v34
  %v145 = vunpack.c.h.b16 %v34
  %v146 = vunpack.c.l.b16 %v35
  %v147 = vunpack.c.h.b16 %v35
  %v148 = vunpack.c.l.b16 %v36
  %v149 = vunpack.c.h.b16 %v36
  %v150 = vunpack.c.l.b16 %v37
  %v151 = vunpack.c.h.b16 %v37
  %v152 = vunpack.c.l.b16 %v38
  %v153 = vunpack.c.h.b16 %v38
  %v154 = vunpack.c.l.b16 %v39
  %v155 = vunpack.c.h.b16 %v39
  %v156 = vunpack.c.l.b16 %v40
  %v157 = vunpack.c.h.b16 %v40
  %v158 = vunpack.c.l.b16 %v41
  %v159 = vunpack.c.h.b16 %v41
  %v160 = vunpack.c.l.b16 %v42
  %v161 = vunpack.c.h.b16 %v42
  %v162 = vunpack.c.l.b16 %v43
  %v163 = vunpack.c.h.b16 %v43
  %v164 = vunpack.c.l.b16 %v44
  %v165 = vunpack.c.h.b16 %v44
  %v166 = vunpack.c.l.b16 %v45
  %v167 = vunpack.c.h.b16 %v45
  %v168 = vunpack.c.l.b16 %v46
  %v169 = vunpack.c.h.b16 %v46
  %v170 = vunpack.c.l.b16 %v47
  %v171 = vunpack.c.h.b16 %v47
  %v172 = vunpack.c.l.b16 %v48
  %v173 = vunpack.c.h.b16 %v48
  %v174 = vunpack.c.l.b16 %v49
  %v175 = vunpack.c.h.b16 %v49
  %v176 = vunpack.c.l.b16 %v50
  %v177 = vunpack.c.h.b16 %v50
  %v178 = vunpack.c.l.b16 %v51
  %v179 = vunpack.c.h.b16 %v51
  %v180 = vunpack.c.l.b16 %v52
  %v181 = vunpack.c.h.b16 %v52
  %v182 = vunpack.c.l.b16 %v53
  %v183 = vunpack.c.h.b16 %v53
  %v184 = vpack.c.b16 %v124, %v120
  %v185 = vpack.c.b16 %v125, %v121
  %v186 = vpack.c.b16 %v126, %v122
  %v187 = vpack.c.b16 %v127, %v123
  %v188 = vpack.c.b16 %v132, %v128
  %v189 = vpack.c.b16 %v133, %v129
  %v190 = vpack.c.b16 %v134, %v130
  %v191 = vpack.c.b16 %v135, %v131
  %v192 = vpack.c.b16 %v140, %v136
  %v193 = vpack.c.b16 %v141, %v137
  %v194 = vpack.c.b16 %v142, %v138
  %v195 = vpack.c.b16 %v143, %v139
  %v196 = vpack.c.b16 %v148, %v144
  %v197 = vpack.c.b16 %v149, %v145
  %v198 = vpack.c.b16 %v150, %v146
  %v199 = vpack.c.b16 %v151, %v147
  %v200 = vpack.c.b16 %v156, %v152
  %v201 = vpack.c.b16 %v157, %v153
  %v202 = vpack.c.b16 %v158, %v154
  %v203 = vpack.c.b16 %v159, %v155
  %v204 = vpack.c.b16 %v164, %v160
  %v205 = vpack.c.b16 %v165, %v161
  %v206 = vpack.c.b16 %v166, %v162
  %v207 = vpack.c.b16 %v167, %v163
  %v208 = vpack.c.b16 %v172, %v168
  %v209 = vpack.c.b16 %v173, %v169
  %v210 = vpack.c.b16 %v174, %v170
  %v211 = vpack.c.b16 %v175, %v171
  %v212 = vpack.c.b16 %v180, %v176
  %v213 = vpack.c.b16 %v181, %v177
  %v214 = vpack.c.b16 %v182, %v178
  %v215 = vpack.c.b16 %v183, %v179
  %248 = vmatpush.bf16.msra.mxu0 %v212
  %249 = vmatpush.bf16.msra.mxu0 %v208
  %250 = vmatpush.bf16.msra.mxu0 %v204
  %251 = vmatpush.bf16.msra.mxu0 %v200
  %252 = vmatpush.bf16.msra.mxu0 %v196
  %253 = vmatpush.bf16.msra.mxu0 %v192
  %254 = vmatpush.bf16.msra.mxu0 %v188
  %255 = vmatpush.bf16.msra.mxu0 %v184
  %256 = vmatmul.bf16.gmra.mxu0 %v80
  %v257 = vpop.f32.mrf.mxu0
  %v258 = vadd.f32 %v56, %v257
  %v259 = vpop.f32.mrf.mxu0
  %v260 = vadd.f32 %v56, %v259
  %261 = vmatmul.bf16.gmra.mxu0 %v81
  %v262 = vpop.f32.mrf.mxu0
  %v263 = vadd.f32 %v56, %v262
  %v264 = vpop.f32.mrf.mxu0
  %v265 = vadd.f32 %v56, %v264
  %266 = vmatmul.bf16.gmra.mxu0 %v82
  %v267 = vpop.f32.mrf.mxu0
  %v268 = vadd.f32 %v56, %v267
  %v269 = vpop.f32.mrf.mxu0
  %v270 = vadd.f32 %v56, %v269
  %271 = vmatmul.bf16.gmra.mxu0 %v83
  %v272 = vpop.f32.mrf.mxu0
  %v273 = vadd.f32 %v56, %v272
  %v274 = vpop.f32.mrf.mxu0
  %v275 = vadd.f32 %v56, %v274
  %276 = vdwg.mxu0
  %277 = vmatpush.bf16.msra.mxu0 %v213
  %278 = vmatpush.bf16.msra.mxu0 %v209
  %279 = vmatpush.bf16.msra.mxu0 %v205
  %280 = vmatpush.bf16.msra.mxu0 %v201
  %281 = vmatpush.bf16.msra.mxu0 %v197
  %282 = vmatpush.bf16.msra.mxu0 %v193
  %283 = vmatpush.bf16.msra.mxu0 %v189
  %284 = vmatpush.bf16.msra.mxu0 %v185
  %285 = vmatmul.bf16.gmra.mxu0 %v80
  %v286 = vpop.f32.mrf.mxu0
  %v287 = vadd.f32 %v57, %v286
  %v288 = vpop.f32.mrf.mxu0
  %v289 = vadd.f32 %v57, %v288
  %290 = vmatmul.bf16.gmra.mxu0 %v81
  %v291 = vpop.f32.mrf.mxu0
  %v292 = vadd.f32 %v57, %v291
  %v293 = vpop.f32.mrf.mxu0
  %v294 = vadd.f32 %v57, %v293
  %295 = vmatmul.bf16.gmra.mxu0 %v82
  %v296 = vpop.f32.mrf.mxu0
  %v297 = vadd.f32 %v57, %v296
  %v298 = vpop.f32.mrf.mxu0
  %v299 = vadd.f32 %v57, %v298
  %300 = vmatmul.bf16.gmra.mxu0 %v83
  %v301 = vpop.f32.mrf.mxu0
  %v302 = vadd.f32 %v57, %v301
  %v303 = vpop.f32.mrf.mxu0
  %v304 = vadd.f32 %v57, %v303
  %305 = vdwg.mxu0
  %306 = vmatpush.bf16.msra.mxu0 %v214
  %307 = vmatpush.bf16.msra.mxu0 %v210
  %308 = vmatpush.bf16.msra.mxu0 %v206
  %309 = vmatpush.bf16.msra.mxu0 %v202
  %310 = vmatpush.bf16.msra.mxu0 %v198
  %311 = vmatpush.bf16.msra.mxu0 %v194
  %312 = vmatpush.bf16.msra.mxu0 %v190
  %313 = vmatpush.bf16.msra.mxu0 %v186
  %314 = vmatmul.bf16.gmra.mxu0 %v80
  %v315 = vpop.f32.mrf.mxu0
  %v316 = vadd.f32 %v58, %v315
  %v317 = vpop.f32.mrf.mxu0
  %v318 = vadd.f32 %v58, %v317
  %319 = vmatmul.bf16.gmra.mxu0 %v81
  %v320 = vpop.f32.mrf.mxu0
  %v321 = vadd.f32 %v58, %v320
  %v322 = vpop.f32.mrf.mxu0
  %v323 = vadd.f32 %v58, %v322
  %324 = vmatmul.bf16.gmra.mxu0 %v82
  %v325 = vpop.f32.mrf.mxu0
  %v326 = vadd.f32 %v58, %v325
  %v327 = vpop.f32.mrf.mxu0
  %v328 = vadd.f32 %v58, %v327
  %329 = vmatmul.bf16.gmra.mxu0 %v83
  %v330 = vpop.f32.mrf.mxu0
  %v331 = vadd.f32 %v58, %v330
  %v332 = vpop.f32.mrf.mxu0
  %v333 = vadd.f32 %v58, %v332
  %334 = vdwg.mxu0
  %335 = vmatpush.bf16.msra.mxu0 %v215
  %336 = vmatpush.bf16.msra.mxu0 %v211
  %337 = vmatpush.bf16.msra.mxu0 %v207
  %338 = vmatpush.bf16.msra.mxu0 %v203
  %339 = vmatpush.bf16.msra.mxu0 %v199
  %340 = vmatpush.bf16.msra.mxu0 %v195
  %341 = vmatpush.bf16.msra.mxu0 %v191
  %342 = vmatpush.bf16.msra.mxu0 %v187
  %343 = vmatmul.bf16.gmra.mxu0 %v80
  %v344 = vpop.f32.mrf.mxu0
  %v345 = vadd.f32 %v59, %v344
  %v346 = vpop.f32.mrf.mxu0
  %v347 = vadd.f32 %v59, %v346
  %348 = vmatmul.bf16.gmra.mxu0 %v81
  %v349 = vpop.f32.mrf.mxu0
  %v350 = vadd.f32 %v59, %v349
  %v351 = vpop.f32.mrf.mxu0
  %v352 = vadd.f32 %v59, %v351
  %353 = vmatmul.bf16.gmra.mxu0 %v82
  %v354 = vpop.f32.mrf.mxu0
  %v355 = vadd.f32 %v59, %v354
  %v356 = vpop.f32.mrf.mxu0
  %v357 = vadd.f32 %v59, %v356
  %358 = vmatmul.bf16.gmra.mxu0 %v83
  %v359 = vpop.f32.mrf.mxu0
  %v360 = vadd.f32 %v59, %v359
  %v361 = vpop.f32.mrf.mxu0
  %v362 = vadd.f32 %v59, %v361
  %363 = vdwg.mxu0
  %v364 = vpack.c.bf16 %v287, %v258
  %v365 = vpack.c.bf16 %v345, %v316
  %v366 = vpack.c.bf16 %v289, %v260
  %v367 = vpack.c.bf16 %v347, %v318
  %v368 = vpack.c.bf16 %v292, %v263
  %v369 = vpack.c.bf16 %v350, %v321
  %v370 = vpack.c.bf16 %v294, %v265
  %v371 = vpack.c.bf16 %v352, %v323
  %v372 = vpack.c.bf16 %v297, %v268
  %v373 = vpack.c.bf16 %v355, %v326
  %v374 = vpack.c.bf16 %v299, %v270
  %v375 = vpack.c.bf16 %v357, %v328
  %v376 = vpack.c.bf16 %v302, %v273
  %v377 = vpack.c.bf16 %v360, %v331
  %v378 = vpack.c.bf16 %v304, %v275
  %v379 = vpack.c.bf16 %v362, %v333
  %380 = vst [vmem:[%s3] sm:$0xff] %v364
  %381 = vst [vmem:[%s3 + $0x8] sm:$0xff] %v365
  %382 = vst [vmem:[%s3 + $0x10] sm:$0xff] %v366
  %383 = vst [vmem:[%s3 + $0x18] sm:$0xff] %v367
  %384 = vst [vmem:[%s3 + $0x20] sm:$0xff] %v368
  %385 = vst [vmem:[%s3 + $0x28] sm:$0xff] %v369
  %386 = vst [vmem:[%s3 + $0x30] sm:$0xff] %v370
  %387 = vst [vmem:[%s3 + $0x38] sm:$0xff] %v371
  %388 = vst [vmem:[%s3 + $0x40] sm:$0xff] %v372
  %389 = vst [vmem:[%s3 + $0x48] sm:$0xff] %v373
  %390 = vst [vmem:[%s3 + $0x50] sm:$0xff] %v374
  %391 = vst [vmem:[%s3 + $0x58] sm:$0xff] %v375
  %392 = vst [vmem:[%s3 + $0x60] sm:$0xff] %v376
  %393 = vst [vmem:[%s3 + $0x68] sm:$0xff] %v377
  %394 = vst [vmem:[%s3 + $0x70] sm:$0xff] %v378
  %395 = vst [vmem:[%s3 + $0x78] sm:$0xff] %v379
  // Predicated region
  $region14: #{lstm_forward.7} parent=0 // pred_check
    _
  $region15: #{lstm_forward.7} parent=0 // pred_check_branch
    %397 = sbr.rel (0) target = $region17
  $region16: #{lstm_forward.7} parent=0 // pred_region
    _
  $region17: #{lstm_forward.7} parent=0 // pred_fallthru
    _
  // Predicated region
  $region18: #{lstm_forward.7} parent=0 // pred_check
    _
  $region19: #{lstm_forward.7} parent=0 // pred_check_branch
    %399 = sbr.rel (0) target = $region21
  $region20: #{lstm_forward.7} parent=0 // pred_region
    _
  $region21: #{lstm_forward.7} parent=0 // pred_fallthru
    _

// kernel: lstm_forward.9
$region0: #{lstm_forward.9}
  #allocation0 [shape = 'u32[]', space=smem, size = 0x4, offset = 0x4, fixed_abs, tag = 'smem constant byte address 0x4 - core index']
  #allocation1 [shape = 'u32[72,128]{1,0:T(1,128)}', space=vmem, size = 0x9000, scoped, tag = 'internal scratch']
  %s0 = inlined_call_operand.vmem [shape: f32[16,128], index: 0, kind: input, shape index: {}]
  %s1 = inlined_call_operand.vmem [shape: f32[128,128], index: 1, kind: input, shape index: {}]
  %s2 = inlined_call_operand.vmem [shape: f32[1,128], index: 2, kind: input, shape index: {}]
  %s3 = inlined_call_operand.vmem [shape: f32[16,128], index: 3, kind: output, shape index: {}]
  %s4 = sld [smem:[#allocation0]]
  $region22: #{lstm_forward.9} parent=0
    _
  %s6 = ssub.s32 1, %s4
  %s7 = scalar_select 0, %s6, %s4
  // Predicated region
  $region2: #{lstm_forward.9} parent=0 // pred_check
    _
  $region3: #{lstm_forward.9} parent=0 // pred_check_branch
    %9 = sbr.rel (0) target = $region5
  $region4: #{lstm_forward.9} parent=0 // pred_region
    _
  $region5: #{lstm_forward.9} parent=0 // pred_fallthru
    _
  // Predicated region
  $region6: #{lstm_forward.9} parent=0 // pred_check
    _
  $region7: #{lstm_forward.9} parent=0 // pred_check_branch
    %11 = sbr.rel (0) target = $region9
  $region8: #{lstm_forward.9} parent=0 // pred_region
    _
  $region9: #{lstm_forward.9} parent=0 // pred_fallthru
    _
  // Predicated region
  $region10: #{lstm_forward.9} parent=0 // pred_check
    _
  $region11: #{lstm_forward.9} parent=0 // pred_check_branch
    %13 = sbr.rel (0) target = $region13
  $region12: #{lstm_forward.9} parent=0 // pred_region
    _
  $region13: #{lstm_forward.9} parent=0 // pred_fallthru
    _
  %v14 = vld [vmem:[%s0] sm:$0xff]
  %v15 = vld [vmem:[%s0 + $0x8] sm:$0xff]
  %v16 = vld [vmem:[%s1] sm:$0xff]
  %v17 = vld [vmem:[%s1 + $0x8] sm:$0xff]
  %v18 = vld [vmem:[%s1 + $0x10] sm:$0xff]
  %v19 = vld [vmem:[%s1 + $0x18] sm:$0xff]
  %v20 = vld [vmem:[%s1 + $0x20] sm:$0xff]
  %v21 = vld [vmem:[%s1 + $0x28] sm:$0xff]
  %v22 = vld [vmem:[%s1 + $0x30] sm:$0xff]
  %v23 = vld [vmem:[%s1 + $0x38] sm:$0xff]
  %v24 = vld [vmem:[%s1 + $0x40] sm:$0xff]
  %v25 = vld [vmem:[%s1 + $0x48] sm:$0xff]
  %v26 = vld [vmem:[%s1 + $0x50] sm:$0xff]
  %v27 = vld [vmem:[%s1 + $0x58] sm:$0xff]
  %v28 = vld [vmem:[%s1 + $0x60] sm:$0xff]
  %v29 = vld [vmem:[%s1 + $0x68] sm:$0xff]
  %v30 = vld [vmem:[%s1 + $0x70] sm:$0xff]
  %v31 = vld [vmem:[%s1 + $0x78] sm:$0xff]
  %v32 = vld [vmem:[%s2] sm:$0x1]
  %v34 = vperm.slane %v32, 0
  %36 = vmatpush.msra.mxu0 %v31
  %37 = vmatpush.msra.mxu0 %v30
  %38 = vmatpush.msra.mxu0 %v29
  %39 = vmatpush.msra.mxu0 %v28
  %40 = vmatpush.msra.mxu0 %v27
  %41 = vmatpush.msra.mxu0 %v26
  %42 = vmatpush.msra.mxu0 %v25
  %43 = vmatpush.msra.mxu0 %v24
  %44 = vmatpush.msra.mxu0 %v23
  %45 = vmatpush.msra.mxu0 %v22
  %46 = vmatpush.msra.mxu0 %v21
  %47 = vmatpush.msra.mxu0 %v20
  %48 = vmatpush.msra.mxu0 %v19
  %49 = vmatpush.msra.mxu0 %v18
  %50 = vmatpush.msra.mxu0 %v17
  %51 = vmatpush.msra.mxu0 %v16
  %52 = vmatmul.f32.gmra.mxu0 %v14
  %v53 = vpop.f32.mrf.mxu0
  %v54 = vadd.f32 %v34, %v53
  %55 = vmatmul.f32.gmra.mxu0 %v15
  %v56 = vpop.f32.mrf.mxu0
  %v57 = vadd.f32 %v34, %v56
  %58 = vdwg.mxu0
  %59 = vst [vmem:[%s3] sm:$0xff] %v54
  %60 = vst [vmem:[%s3 + $0x8] sm:$0xff] %v57
  // Predicated region
  $region14: #{lstm_forward.9} parent=0 // pred_check
    _
  $region15: #{lstm_forward.9} parent=0 // pred_check_branch
    %62 = sbr.rel (0) target = $region17
  $region16: #{lstm_forward.9} parent=0 // pred_region
    _
  $region17: #{lstm_forward.9} parent=0 // pred_fallthru
    _
  // Predicated region
  $region18: #{lstm_forward.9} parent=0 // pred_check
    _
  $region19: #{lstm_forward.9} parent=0 // pred_check_branch
    %64 = sbr.rel (0) target = $region21
  $region20: #{lstm_forward.9} parent=0 // pred_region
    _
  $region21: #{lstm_forward.9} parent=0 // pred_fallthru
    _

// kernel: lstm_forward.8
$region0: #{lstm_forward.8}
  #allocation0 [shape = 'u32[]', space=smem, size = 0x4, offset = 0x4, fixed_abs, tag = 'smem constant byte address 0x4 - core index']
  #allocation1 [shape = 'u32[72,128]{1,0:T(1,128)}', space=vmem, size = 0x9000, scoped, tag = 'internal scratch']
  #allocation2 [shape = 'bf16[8,128]{1,0:T(8,128)(2,1)}', space=vmem, size = 0x800, scoped, tag = 'scratch operand']
  #allocation3 [shape = 'f32[8,128]{1,0:T(8,128)}', space=vmem, size = 0x1000, scoped, tag = 'scratch operand']
  %s0 = inlined_call_operand.vmem [shape: bf16[8,8,512], index: 0, kind: input, shape index: {}]
  %s1 = inlined_call_operand.vmem [shape: bf16[128,512], index: 1, kind: input, shape index: {}]
  %s2 = inlined_call_operand.hbm [shape: bf16[8,8,128], index: 2, kind: output, shape index: {0}]
  %s3 = inlined_call_operand.vmem [shape: f32[8,128], index: 3, kind: output, shape index: {1}]
  %4 = xla_tuple %s2, %s3
  %s5 = sld [smem:[#allocation0]]
  $region34: #{lstm_forward.8} parent=0
    _
  %s7 = ssub.s32 1, %s5
  %s8 = scalar_select 0, %s7, %s5
  $region1: #{lstm_forward.8} parent=0
    #allocation4 [shape = 'u8[16384]{0}', space=vmem, size = 0x4000, scoped, tag = 'output window, operand 0, single buffered']
    #allocation5 [shape = 's32[1]{0}', space=sflag, size = 0x4, scoped, tag = 'scoped memory for lstm_forward.8']
    %9 = vsyncpa [#allocation5], 0
    // Predicated region
    $region2: #{lstm_forward.8} parent=1 // pred_check
      _
    $region3: #{lstm_forward.8} parent=1 // pred_check_branch
      %11 = sbr.rel (0) target = $region5
    $region4: #{lstm_forward.8} parent=1 // pred_region
      _
    $region5: #{lstm_forward.8} parent=1 // pred_fallthru
      _
    // Predicated region
    $region6: #{lstm_forward.8} parent=1 // pred_check
      _
    $region7: #{lstm_forward.8} parent=1 // pred_check_branch
      %13 = sbr.rel (0) target = $region9
    $region8: #{lstm_forward.8} parent=1 // pred_region
      _
    $region9: #{lstm_forward.8} parent=1 // pred_fallthru
      _
    %p15 = scmp.eq.s32.totalorder 0, 0
    // Predicated region
    $region10: #{lstm_forward.8} parent=1 // pred_check
      %p16 = pneg %p15
    $region11: #{lstm_forward.8} parent=1 // pred_check_branch
      %18 = sbr.rel (%p16) target = $region13
    $region12: #{lstm_forward.8} parent=1 // pred_region
      %19 = vst [vmem:[#allocation2] sm:$0xf] 0
      %20 = vst [vmem:[#allocation3] sm:$0xff] 0.0
    $region13: #{lstm_forward.8} parent=1 // pred_fallthru
      _
    %v21 = vld [vmem:[%s1] sm:$0xff]
    %v22 = vld [vmem:[%s1 + $0x8] sm:$0xff]
    %v23 = vld [vmem:[%s1 + $0x10] sm:$0xff]
    %v24 = vld [vmem:[%s1 + $0x18] sm:$0xff]
    %v25 = vld [vmem:[%s1 + $0x20] sm:$0xff]
    %v26 = vld [vmem:[%s1 + $0x28] sm:$0xff]
    %v27 = vld [vmem:[%s1 + $0x30] sm:$0xff]
    %v28 = vld [vmem:[%s1 + $0x38] sm:$0xff]
    %v29 = vld [vmem:[%s1 + $0x40] sm:$0xff]
    %v30 = vld [vmem:[%s1 + $0x48] sm:$0xff]
    %v31 = vld [vmem:[%s1 + $0x50] sm:$0xff]
    %v32 = vld [vmem:[%s1 + $0x58] sm:$0xff]
    %v33 = vld [vmem:[%s1 + $0x60] sm:$0xff]
    %v34 = vld [vmem:[%s1 + $0x68] sm:$0xff]
    %v35 = vld [vmem:[%s1 + $0x70] sm:$0xff]
    %v36 = vld [vmem:[%s1 + $0x78] sm:$0xff]
    %v37 = vld [vmem:[%s1 + $0x80] sm:$0xff]
    %v38 = vld [vmem:[%s1 + $0x88] sm:$0xff]
    %v39 = vld [vmem:[%s1 + $0x90] sm:$0xff]
    %v40 = vld [vmem:[%s1 + $0x98] sm:$0xff]
    %v41 = vld [vmem:[%s1 + $0xa0] sm:$0xff]
    %v42 = vld [vmem:[%s1 + $0xa8] sm:$0xff]
    %v43 = vld [vmem:[%s1 + $0xb0] sm:$0xff]
    %v44 = vld [vmem:[%s1 + $0xb8] sm:$0xff]
    %v45 = vld [vmem:[%s1 + $0xc0] sm:$0xff]
    %v46 = vld [vmem:[%s1 + $0xc8] sm:$0xff]
    %v47 = vld [vmem:[%s1 + $0xd0] sm:$0xff]
    %v48 = vld [vmem:[%s1 + $0xd8] sm:$0xff]
    %v49 = vld [vmem:[%s1 + $0xe0] sm:$0xff]
    %v50 = vld [vmem:[%s1 + $0xe8] sm:$0xff]
    %v51 = vld [vmem:[%s1 + $0xf0] sm:$0xff]
    %v52 = vld [vmem:[%s1 + $0xf8] sm:$0xff]
    %v53 = vld [vmem:[#allocation2] sm:$0xf]
    %v54 = vld [vmem:[#allocation3] sm:$0xff]
    %v55 = vld [vmem:[%s0] sm:$0xff]
    %v56 = vld [vmem:[%s0 + $0x8] sm:$0xff]
    %v57 = vunpack.c.l.bf16 %v55
    %v58 = vunpack.c.h.bf16 %v55
    %v59 = vunpack.c.l.bf16 %v56
    %v60 = vunpack.c.h.bf16 %v56
    %v93 = vunpack.c.l.b16 %v21
    %v94 = vunpack.c.h.b16 %v21
    %v95 = vunpack.c.l.b16 %v22
    %v96 = vunpack.c.h.b16 %v22
    %v97 = vunpack.c.l.b16 %v23
    %v98 = vunpack.c.h.b16 %v23
    %v99 = vunpack.c.l.b16 %v24
    %v100 = vunpack.c.h.b16 %v24
    %v101 = vunpack.c.l.b16 %v25
    %v102 = vunpack.c.h.b16 %v25
    %v103 = vunpack.c.l.b16 %v26
    %v104 = vunpack.c.h.b16 %v26
    %v105 = vunpack.c.l.b16 %v27
    %v106 = vunpack.c.h.b16 %v27
    %v107 = vunpack.c.l.b16 %v28
    %v108 = vunpack.c.h.b16 %v28
    %v109 = vunpack.c.l.b16 %v29
    %v110 = vunpack.c.h.b16 %v29
    %v111 = vunpack.c.l.b16 %v30
    %v112 = vunpack.c.h.b16 %v30
    %v113 = vunpack.c.l.b16 %v31
    %v114 = vunpack.c.h.b16 %v31
    %v115 = vunpack.c.l.b16 %v32
    %v116 = vunpack.c.h.b16 %v32
    %v117 = vunpack.c.l.b16 %v33
    %v118 = vunpack.c.h.b16 %v33
    %v119 = vunpack.c.l.b16 %v34
    %v120 = vunpack.c.h.b16 %v34
    %v121 = vunpack.c.l.b16 %v35
    %v122 = vunpack.c.h.b16 %v35
    %v123 = vunpack.c.l.b16 %v36
    %v124 = vunpack.c.h.b16 %v36
    %v125 = vunpack.c.l.b16 %v37
    %v126 = vunpack.c.h.b16 %v37
    %v127 = vunpack.c.l.b16 %v38
    %v128 = vunpack.c.h.b16 %v38
    %v129 = vunpack.c.l.b16 %v39
    %v130 = vunpack.c.h.b16 %v39
    %v131 = vunpack.c.l.b16 %v40
    %v132 = vunpack.c.h.b16 %v40
    %v133 = vunpack.c.l.b16 %v41
    %v134 = vunpack.c.h.b16 %v41
    %v135 = vunpack.c.l.b16 %v42
    %v136 = vunpack.c.h.b16 %v42
    %v137 = vunpack.c.l.b16 %v43
    %v138 = vunpack.c.h.b16 %v43
    %v139 = vunpack.c.l.b16 %v44
    %v140 = vunpack.c.h.b16 %v44
    %v141 = vunpack.c.l.b16 %v45
    %v142 = vunpack.c.h.b16 %v45
    %v143 = vunpack.c.l.b16 %v46
    %v144 = vunpack.c.h.b16 %v46
    %v145 = vunpack.c.l.b16 %v47
    %v146 = vunpack.c.h.b16 %v47
    %v147 = vunpack.c.l.b16 %v48
    %v148 = vunpack.c.h.b16 %v48
    %v149 = vunpack.c.l.b16 %v49
    %v150 = vunpack.c.h.b16 %v49
    %v151 = vunpack.c.l.b16 %v50
    %v152 = vunpack.c.h.b16 %v50
    %v153 = vunpack.c.l.b16 %v51
    %v154 = vunpack.c.h.b16 %v51
    %v155 = vunpack.c.l.b16 %v52
    %v156 = vunpack.c.h.b16 %v52
    %v157 = vpack.c.b16 %v97, %v93
    %v158 = vpack.c.b16 %v98, %v94
    %v159 = vpack.c.b16 %v99, %v95
    %v160 = vpack.c.b16 %v100, %v96
    %v161 = vpack.c.b16 %v105, %v101
    %v162 = vpack.c.b16 %v106, %v102
    %v163 = vpack.c.b16 %v107, %v103
    %v164 = vpack.c.b16 %v108, %v104
    %v165 = vpack.c.b16 %v113, %v109
    %v166 = vpack.c.b16 %v114, %v110
    %v167 = vpack.c.b16 %v115, %v111
    %v168 = vpack.c.b16 %v116, %v112
    %v169 = vpack.c.b16 %v121, %v117
    %v170 = vpack.c.b16 %v122, %v118
    %v171 = vpack.c.b16 %v123, %v119
    %v172 = vpack.c.b16 %v124, %v120
    %v173 = vpack.c.b16 %v129, %v125
    %v174 = vpack.c.b16 %v130, %v126
    %v175 = vpack.c.b16 %v131, %v127
    %v176 = vpack.c.b16 %v132, %v128
    %v177 = vpack.c.b16 %v137, %v133
    %v178 = vpack.c.b16 %v138, %v134
    %v179 = vpack.c.b16 %v139, %v135
    %v180 = vpack.c.b16 %v140, %v136
    %v181 = vpack.c.b16 %v145, %v141
    %v182 = vpack.c.b16 %v146, %v142
    %v183 = vpack.c.b16 %v147, %v143
    %v184 = vpack.c.b16 %v148, %v144
    %v185 = vpack.c.b16 %v153, %v149
    %v186 = vpack.c.b16 %v154, %v150
    %v187 = vpack.c.b16 %v155, %v151
    %v188 = vpack.c.b16 %v156, %v152
    %221 = vmatpush.bf16.msra.mxu0 %v185
    %222 = vmatpush.bf16.msra.mxu0 %v181
    %223 = vmatpush.bf16.msra.mxu0 %v177
    %224 = vmatpush.bf16.msra.mxu0 %v173
    %225 = vmatpush.bf16.msra.mxu0 %v169
    %226 = vmatpush.bf16.msra.mxu0 %v165
    %227 = vmatpush.bf16.msra.mxu0 %v161
    %228 = vmatpush.bf16.msra.mxu0 %v157
    %229 = vmatmul.bf16.gmra.mxu0 %v53
    %v230 = vpop.f32.mrf.mxu0
    %v231 = vadd.f32 0.0, %v230
    %v232 = vpop.f32.mrf.mxu0
    %233 = vdwg.mxu0
    %234 = vmatpush.bf16.msra.mxu0 %v186
    %235 = vmatpush.bf16.msra.mxu0 %v182
    %236 = vmatpush.bf16.msra.mxu0 %v178
    %237 = vmatpush.bf16.msra.mxu0 %v174
    %238 = vmatpush.bf16.msra.mxu0 %v170
    %239 = vmatpush.bf16.msra.mxu0 %v166
    %240 = vmatpush.bf16.msra.mxu0 %v162
    %241 = vmatpush.bf16.msra.mxu0 %v158
    %242 = vmatmul.bf16.gmra.mxu0 %v53
    %v243 = vpop.f32.mrf.mxu0
    %v244 = vadd.f32 0.0, %v243
    %v245 = vpop.f32.mrf.mxu0
    %246 = vdwg.mxu0
    %247 = vmatpush.bf16.msra.mxu0 %v187
    %248 = vmatpush.bf16.msra.mxu0 %v183
    %249 = vmatpush.bf16.msra.mxu0 %v179
    %250 = vmatpush.bf16.msra.mxu0 %v175
    %251 = vmatpush.bf16.msra.mxu0 %v171
    %252 = vmatpush.bf16.msra.mxu0 %v167
    %253 = vmatpush.bf16.msra.mxu0 %v163
    %254 = vmatpush.bf16.msra.mxu0 %v159
    %255 = vmatmul.bf16.gmra.mxu0 %v53
    %v256 = vpop.f32.mrf.mxu0
    %v257 = vadd.f32 0.0, %v256
    %v258 = vpop.f32.mrf.mxu0
    %259 = vdwg.mxu0
    %260 = vmatpush.bf16.msra.mxu0 %v188
    %261 = vmatpush.bf16.msra.mxu0 %v184
    %262 = vmatpush.bf16.msra.mxu0 %v180
    %263 = vmatpush.bf16.msra.mxu0 %v176
    %264 = vmatpush.bf16.msra.mxu0 %v172
    %265 = vmatpush.bf16.msra.mxu0 %v168
    %266 = vmatpush.bf16.msra.mxu0 %v164
    %267 = vmatpush.bf16.msra.mxu0 %v160
    %268 = vmatmul.bf16.gmra.mxu0 %v53
    %v269 = vpop.f32.mrf.mxu0
    %v270 = vadd.f32 0.0, %v269
    %v271 = vpop.f32.mrf.mxu0
    %272 = vdwg.mxu0
    %v273 = vadd.f32 %v57, %v231
    %v274 = vadd.f32 %v58, %v244
    %v275 = vadd.f32 %v59, %v257
    %v276 = vadd.f32 %v60, %v270
    %v277 = vmul.f32 %v273, 0.5
    %v278 = vtanh.pop %v277
    %v279 = vadd.f32 %v278, 1.0
    %v280 = vmul.f32 %v279, 0.5
    %v281 = vmul.f32 %v274, 0.5
    %v282 = vtanh.pop %v281
    %v283 = vadd.f32 %v282, 1.0
    %v284 = vmul.f32 %v283, 0.5
    %v285 = vtanh.pop %v275
    %v286 = vmul.f32 %v276, 0.5
    %v287 = vtanh.pop %v286
    %v288 = vadd.f32 %v287, 1.0
    %v289 = vmul.f32 %v288, 0.5
    %v290 = vmul.f32 %v284, %v54
    %v291 = vmul.f32 %v280, %v285
    %v292 = vadd.f32 %v290, %v291
    %v293 = vtanh.pop %v292
    %v294 = vmul.f32 %v289, %v293
    %v295 = vpack.c.bf16 %v294, %v294
    %296 = vst [vmem:[#allocation4] sm:$0xf] %v295
    %s297 = scalar_lea.vmem %s0, 16
    %v298 = vld [vmem:[%s297] sm:$0xff]
    %v299 = vld [vmem:[%s297 + $0x8] sm:$0xff]
    %v300 = vunpack.c.l.bf16 %v298
    %v301 = vunpack.c.h.bf16 %v298
    %v302 = vunpack.c.l.bf16 %v299
    %v303 = vunpack.c.h.bf16 %v299
    %304 = vmatpush.bf16.msra.mxu0 %v185
    %305 = vmatpush.bf16.msra.mxu0 %v181
    %306 = vmatpush.bf16.msra.mxu0 %v177
    %307 = vmatpush.bf16.msra.mxu0 %v173
    %308 = vmatpush.bf16.msra.mxu0 %v169
    %309 = vmatpush.bf16.msra.mxu0 %v165
    %310 = vmatpush.bf16.msra.mxu0 %v161
    %311 = vmatpush.bf16.msra.mxu0 %v157
    %312 = vmatmul.bf16.gmra.mxu0 %v295
    %v313 = vpop.f32.mrf.mxu0
    %v314 = vadd.f32 0.0, %v313
    %v315 = vpop.f32.mrf.mxu0
    %316 = vdwg.mxu0
    %317 = vmatpush.bf16.msra.mxu0 %v186
    %318 = vmatpush.bf16.msra.mxu0 %v182
    %319 = vmatpush.bf16.msra.mxu0 %v178
    %320 = vmatpush.bf16.msra.mxu0 %v174
    %321 = vmatpush.bf16.msra.mxu0 %v170
    %322 = vmatpush.bf16.msra.mxu0 %v166
    %323 = vmatpush.bf16.msra.mxu0 %v162
    %324 = vmatpush.bf16.msra.mxu0 %v158
    %325 = vmatmul.bf16.gmra.mxu0 %v295
    %v326 = vpop.f32.mrf.mxu0
    %v327 = vadd.f32 0.0, %v326
    %v328 = vpop.f32.mrf.mxu0
    %329 = vdwg.mxu0
    %330 = vmatpush.bf16.msra.mxu0 %v187
    %331 = vmatpush.bf16.msra.mxu0 %v183
    %332 = vmatpush.bf16.msra.mxu0 %v179
    %333 = vmatpush.bf16.msra.mxu0 %v175
    %334 = vmatpush.bf16.msra.mxu0 %v171
    %335 = vmatpush.bf16.msra.mxu0 %v167
    %336 = vmatpush.bf16.msra.mxu0 %v163
    %337 = vmatpush.bf16.msra.mxu0 %v159
    %338 = vmatmul.bf16.gmra.mxu0 %v295
    %v339 = vpop.f32.mrf.mxu0
    %v340 = vadd.f32 0.0, %v339
    %v341 = vpop.f32.mrf.mxu0
    %342 = vdwg.mxu0
    %343 = vmatpush.bf16.msra.mxu0 %v188
    %344 = vmatpush.bf16.msra.mxu0 %v184
    %345 = vmatpush.bf16.msra.mxu0 %v180
    %346 = vmatpush.bf16.msra.mxu0 %v176
    %347 = vmatpush.bf16.msra.mxu0 %v172
    %348 = vmatpush.bf16.msra.mxu0 %v168
    %349 = vmatpush.bf16.msra.mxu0 %v164
    %350 = vmatpush.bf16.msra.mxu0 %v160
    %351 = vmatmul.bf16.gmra.mxu0 %v295
    %v352 = vpop.f32.mrf.mxu0
    %v353 = vadd.f32 0.0, %v352
    %v354 = vpop.f32.mrf.mxu0
    %355 = vdwg.mxu0
    %v356 = vadd.f32 %v300, %v314
    %v357 = vadd.f32 %v301, %v327
    %v358 = vadd.f32 %v302, %v340
    %v359 = vadd.f32 %v303, %v353
    %v360 = vmul.f32 %v356, 0.5
    %v361 = vtanh.pop %v360
    %v362 = vadd.f32 %v361, 1.0
    %v363 = vmul.f32 %v362, 0.5
    %v364 = vmul.f32 %v357, 0.5
    %v365 = vtanh.pop %v364
    %v366 = vadd.f32 %v365, 1.0
    %v367 = vmul.f32 %v366, 0.5
    %v368 = vtanh.pop %v358
    %v369 = vmul.f32 %v359, 0.5
    %v370 = vtanh.pop %v369
    %v371 = vadd.f32 %v370, 1.0
    %v372 = vmul.f32 %v371, 0.5
    %v373 = vmul.f32 %v367, %v292
    %v374 = vmul.f32 %v363, %v368
    %v375 = vadd.f32 %v373, %v374
    %v376 = vtanh.pop %v375
    %v377 = vmul.f32 %v372, %v376
    %v378 = vpack.c.bf16 %v377, %v377
    %s379 = scalar_lea.vmem [#allocation4], 4
    %380 = vst [vmem:[%s379] sm:$0xf] %v378
    %s381 = scalar_lea.vmem %s0, 32
    %v382 = vld [vmem:[%s381] sm:$0xff]
    %v383 = vld [vmem:[%s381 + $0x8] sm:$0xff]
    %v384 = vunpack.c.l.bf16 %v382
    %v385 = vunpack.c.h.bf16 %v382
    %v386 = vunpack.c.l.bf16 %v383
    %v387 = vunpack.c.h.bf16 %v383
    %388 = vmatpush.bf16.msra.mxu0 %v185
    %389 = vmatpush.bf16.msra.mxu0 %v181
    %390 = vmatpush.bf16.msra.mxu0 %v177
    %391 = vmatpush.bf16.msra.mxu0 %v173
    %392 = vmatpush.bf16.msra.mxu0 %v169
    %393 = vmatpush.bf16.msra.mxu0 %v165
    %394 = vmatpush.bf16.msra.mxu0 %v161
    %395 = vmatpush.bf16.msra.mxu0 %v157
    %396 = vmatmul.bf16.gmra.mxu0 %v378
    %v397 = vpop.f32.mrf.mxu0
    %v398 = vadd.f32 0.0, %v397
    %v399 = vpop.f32.mrf.mxu0
    %400 = vdwg.mxu0
    %401 = vmatpush.bf16.msra.mxu0 %v186
    %402 = vmatpush.bf16.msra.mxu0 %v182
    %403 = vmatpush.bf16.msra.mxu0 %v178
    %404 = vmatpush.bf16.msra.mxu0 %v174
    %405 = vmatpush.bf16.msra.mxu0 %v170
    %406 = vmatpush.bf16.msra.mxu0 %v166
    %407 = vmatpush.bf16.msra.mxu0 %v162
    %408 = vmatpush.bf16.msra.mxu0 %v158
    %409 = vmatmul.bf16.gmra.mxu0 %v378
    %v410 = vpop.f32.mrf.mxu0
    %v411 = vadd.f32 0.0, %v410
    %v412 = vpop.f32.mrf.mxu0
    %413 = vdwg.mxu0
    %414 = vmatpush.bf16.msra.mxu0 %v187
    %415 = vmatpush.bf16.msra.mxu0 %v183
    %416 = vmatpush.bf16.msra.mxu0 %v179
    %417 = vmatpush.bf16.msra.mxu0 %v175
    %418 = vmatpush.bf16.msra.mxu0 %v171
    %419 = vmatpush.bf16.msra.mxu0 %v167
    %420 = vmatpush.bf16.msra.mxu0 %v163
    %421 = vmatpush.bf16.msra.mxu0 %v159
    %422 = vmatmul.bf16.gmra.mxu0 %v378
    %v423 = vpop.f32.mrf.mxu0
    %v424 = vadd.f32 0.0, %v423
    %v425 = vpop.f32.mrf.mxu0
    %426 = vdwg.mxu0
    %427 = vmatpush.bf16.msra.mxu0 %v188
    %428 = vmatpush.bf16.msra.mxu0 %v184
    %429 = vmatpush.bf16.msra.mxu0 %v180
    %430 = vmatpush.bf16.msra.mxu0 %v176
    %431 = vmatpush.bf16.msra.mxu0 %v172
    %432 = vmatpush.bf16.msra.mxu0 %v168
    %433 = vmatpush.bf16.msra.mxu0 %v164
    %434 = vmatpush.bf16.msra.mxu0 %v160
    %435 = vmatmul.bf16.gmra.mxu0 %v378
    %v436 = vpop.f32.mrf.mxu0
    %v437 = vadd.f32 0.0, %v436
    %v438 = vpop.f32.mrf.mxu0
    %439 = vdwg.mxu0
    %v440 = vadd.f32 %v384, %v398
    %v441 = vadd.f32 %v385, %v411
    %v442 = vadd.f32 %v386, %v424
    %v443 = vadd.f32 %v387, %v437
    %v444 = vmul.f32 %v440, 0.5
    %v445 = vtanh.pop %v444
    %v446 = vadd.f32 %v445, 1.0
    %v447 = vmul.f32 %v446, 0.5
    %v448 = vmul.f32 %v441, 0.5
    %v449 = vtanh.pop %v448
    %v450 = vadd.f32 %v449, 1.0
    %v451 = vmul.f32 %v450, 0.5
    %v452 = vtanh.pop %v442
    %v453 = vmul.f32 %v443, 0.5
    %v454 = vtanh.pop %v453
    %v455 = vadd.f32 %v454, 1.0
    %v456 = vmul.f32 %v455, 0.5
    %v457 = vmul.f32 %v451, %v375
    %v458 = vmul.f32 %v447, %v452
    %v459 = vadd.f32 %v457, %v458
    %v460 = vtanh.pop %v459
    %v461 = vmul.f32 %v456, %v460
    %v462 = vpack.c.bf16 %v461, %v461
    %s463 = scalar_lea.vmem [#allocation4], 8
    %464 = vst [vmem:[%s463] sm:$0xf] %v462
    %s465 = scalar_lea.vmem %s0, 48
    %v466 = vld [vmem:[%s465] sm:$0xff]
    %v467 = vld [vmem:[%s465 + $0x8] sm:$0xff]
    %v468 = vunpack.c.l.bf16 %v466
    %v469 = vunpack.c.h.bf16 %v466
    %v470 = vunpack.c.l.bf16 %v467
    %v471 = vunpack.c.h.bf16 %v467
    %472 = vmatpush.bf16.msra.mxu0 %v185
    %473 = vmatpush.bf16.msra.mxu0 %v181
    %474 = vmatpush.bf16.msra.mxu0 %v177
    %475 = vmatpush.bf16.msra.mxu0 %v173
    %476 = vmatpush.bf16.msra.mxu0 %v169
    %477 = vmatpush.bf16.msra.mxu0 %v165
    %478 = vmatpush.bf16.msra.mxu0 %v161
    %479 = vmatpush.bf16.msra.mxu0 %v157
    %480 = vmatmul.bf16.gmra.mxu0 %v462
    %v481 = vpop.f32.mrf.mxu0
    %v482 = vadd.f32 0.0, %v481
    %v483 = vpop.f32.mrf.mxu0
    %484 = vdwg.mxu0
    %485 = vmatpush.bf16.msra.mxu0 %v186
    %486 = vmatpush.bf16.msra.mxu0 %v182
    %487 = vmatpush.bf16.msra.mxu0 %v178
    %488 = vmatpush.bf16.msra.mxu0 %v174
    %489 = vmatpush.bf16.msra.mxu0 %v170
    %490 = vmatpush.bf16.msra.mxu0 %v166
    %491 = vmatpush.bf16.msra.mxu0 %v162
    %492 = vmatpush.bf16.msra.mxu0 %v158
    %493 = vmatmul.bf16.gmra.mxu0 %v462
    %v494 = vpop.f32.mrf.mxu0
    %v495 = vadd.f32 0.0, %v494
    %v496 = vpop.f32.mrf.mxu0
    %497 = vdwg.mxu0
    %498 = vmatpush.bf16.msra.mxu0 %v187
    %499 = vmatpush.bf16.msra.mxu0 %v183
    %500 = vmatpush.bf16.msra.mxu0 %v179
    %501 = vmatpush.bf16.msra.mxu0 %v175
    %502 = vmatpush.bf16.msra.mxu0 %v171
    %503 = vmatpush.bf16.msra.mxu0 %v167
    %504 = vmatpush.bf16.msra.mxu0 %v163
    %505 = vmatpush.bf16.msra.mxu0 %v159
    %506 = vmatmul.bf16.gmra.mxu0 %v462
    %v507 = vpop.f32.mrf.mxu0
    %v508 = vadd.f32 0.0, %v507
    %v509 = vpop.f32.mrf.mxu0
    %510 = vdwg.mxu0
    %511 = vmatpush.bf16.msra.mxu0 %v188
    %512 = vmatpush.bf16.msra.mxu0 %v184
    %513 = vmatpush.bf16.msra.mxu0 %v180
    %514 = vmatpush.bf16.msra.mxu0 %v176
    %515 = vmatpush.bf16.msra.mxu0 %v172
    %516 = vmatpush.bf16.msra.mxu0 %v168
    %517 = vmatpush.bf16.msra.mxu0 %v164
    %518 = vmatpush.bf16.msra.mxu0 %v160
    %519 = vmatmul.bf16.gmra.mxu0 %v462
    %v520 = vpop.f32.mrf.mxu0
    %v521 = vadd.f32 0.0, %v520
    %v522 = vpop.f32.mrf.mxu0
    %523 = vdwg.mxu0
    %v524 = vadd.f32 %v468, %v482
    %v525 = vadd.f32 %v469, %v495
    %v526 = vadd.f32 %v470, %v508
    %v527 = vadd.f32 %v471, %v521
    %v528 = vmul.f32 %v524, 0.5
    %v529 = vtanh.pop %v528
    %v530 = vadd.f32 %v529, 1.0
    %v531 = vmul.f32 %v530, 0.5
    %v532 = vmul.f32 %v525, 0.5
    %v533 = vtanh.pop %v532
    %v534 = vadd.f32 %v533, 1.0
    %v535 = vmul.f32 %v534, 0.5
    %v536 = vtanh.pop %v526
    %v537 = vmul.f32 %v527, 0.5
    %v538 = vtanh.pop %v537
    %v539 = vadd.f32 %v538, 1.0
    %v540 = vmul.f32 %v539, 0.5
    %v541 = vmul.f32 %v535, %v459
    %v542 = vmul.f32 %v531, %v536
    %v543 = vadd.f32 %v541, %v542
    %v544 = vtanh.pop %v543
    %v545 = vmul.f32 %v540, %v544
    %v546 = vpack.c.bf16 %v545, %v545
    %s547 = scalar_lea.vmem [#allocation4], 12
    %548 = vst [vmem:[%s547] sm:$0xf] %v546
    %s549 = scalar_lea.vmem %s0, 64
    %v550 = vld [vmem:[%s549] sm:$0xff]
    %v551 = vld [vmem:[%s549 + $0x8] sm:$0xff]
    %v552 = vunpack.c.l.bf16 %v550
    %v553 = vunpack.c.h.bf16 %v550
    %v554 = vunpack.c.l.bf16 %v551
    %v555 = vunpack.c.h.bf16 %v551
    %556 = vmatpush.bf16.msra.mxu0 %v185
    %557 = vmatpush.bf16.msra.mxu0 %v181
    %558 = vmatpush.bf16.msra.mxu0 %v177
    %559 = vmatpush.bf16.msra.mxu0 %v173
    %560 = vmatpush.bf16.msra.mxu0 %v169
    %561 = vmatpush.bf16.msra.mxu0 %v165
    %562 = vmatpush.bf16.msra.mxu0 %v161
    %563 = vmatpush.bf16.msra.mxu0 %v157
    %564 = vmatmul.bf16.gmra.mxu0 %v546
    %v565 = vpop.f32.mrf.mxu0
    %v566 = vadd.f32 0.0, %v565
    %v567 = vpop.f32.mrf.mxu0
    %568 = vdwg.mxu0
    %569 = vmatpush.bf16.msra.mxu0 %v186
    %570 = vmatpush.bf16.msra.mxu0 %v182
    %571 = vmatpush.bf16.msra.mxu0 %v178
    %572 = vmatpush.bf16.msra.mxu0 %v174
    %573 = vmatpush.bf16.msra.mxu0 %v170
    %574 = vmatpush.bf16.msra.mxu0 %v166
    %575 = vmatpush.bf16.msra.mxu0 %v162
    %576 = vmatpush.bf16.msra.mxu0 %v158
    %577 = vmatmul.bf16.gmra.mxu0 %v546
    %v578 = vpop.f32.mrf.mxu0
    %v579 = vadd.f32 0.0, %v578
    %v580 = vpop.f32.mrf.mxu0
    %581 = vdwg.mxu0
    %582 = vmatpush.bf16.msra.mxu0 %v187
    %583 = vmatpush.bf16.msra.mxu0 %v183
    %584 = vmatpush.bf16.msra.mxu0 %v179
    %585 = vmatpush.bf16.msra.mxu0 %v175
    %586 = vmatpush.bf16.msra.mxu0 %v171
    %587 = vmatpush.bf16.msra.mxu0 %v167
    %588 = vmatpush.bf16.msra.mxu0 %v163
    %589 = vmatpush.bf16.msra.mxu0 %v159
    %590 = vmatmul.bf16.gmra.mxu0 %v546
    %v591 = vpop.f32.mrf.mxu0
    %v592 = vadd.f32 0.0, %v591
    %v593 = vpop.f32.mrf.mxu0
    %594 = vdwg.mxu0
    %595 = vmatpush.bf16.msra.mxu0 %v188
    %596 = vmatpush.bf16.msra.mxu0 %v184
    %597 = vmatpush.bf16.msra.mxu0 %v180
    %598 = vmatpush.bf16.msra.mxu0 %v176
    %599 = vmatpush.bf16.msra.mxu0 %v172
    %600 = vmatpush.bf16.msra.mxu0 %v168
    %601 = vmatpush.bf16.msra.mxu0 %v164
    %602 = vmatpush.bf16.msra.mxu0 %v160
    %603 = vmatmul.bf16.gmra.mxu0 %v546
    %v604 = vpop.f32.mrf.mxu0
    %v605 = vadd.f32 0.0, %v604
    %v606 = vpop.f32.mrf.mxu0
    %607 = vdwg.mxu0
    %v608 = vadd.f32 %v552, %v566
    %v609 = vadd.f32 %v553, %v579
    %v610 = vadd.f32 %v554, %v592
    %v611 = vadd.f32 %v555, %v605
    %v612 = vmul.f32 %v608, 0.5
    %v613 = vtanh.pop %v612
    %v614 = vadd.f32 %v613, 1.0
    %v615 = vmul.f32 %v614, 0.5
    %v616 = vmul.f32 %v609, 0.5
    %v617 = vtanh.pop %v616
    %v618 = vadd.f32 %v617, 1.0
    %v619 = vmul.f32 %v618, 0.5
    %v620 = vtanh.pop %v610
    %v621 = vmul.f32 %v611, 0.5
    %v622 = vtanh.pop %v621
    %v623 = vadd.f32 %v622, 1.0
    %v624 = vmul.f32 %v623, 0.5
    %v625 = vmul.f32 %v619, %v543
    %v626 = vmul.f32 %v615, %v620
    %v627 = vadd.f32 %v625, %v626
    %v628 = vtanh.pop %v627
    %v629 = vmul.f32 %v624, %v628
    %v630 = vpack.c.bf16 %v629, %v629
    %s631 = scalar_lea.vmem [#allocation4], 16
    %632 = vst [vmem:[%s631] sm:$0xf] %v630
    %s633 = scalar_lea.vmem %s0, 80
    %v634 = vld [vmem:[%s633] sm:$0xff]
    %v635 = vld [vmem:[%s633 + $0x8] sm:$0xff]
    %v636 = vunpack.c.l.bf16 %v634
    %v637 = vunpack.c.h.bf16 %v634
    %v638 = vunpack.c.l.bf16 %v635
    %v639 = vunpack.c.h.bf16 %v635
    %640 = vmatpush.bf16.msra.mxu0 %v185
    %641 = vmatpush.bf16.msra.mxu0 %v181
    %642 = vmatpush.bf16.msra.mxu0 %v177
    %643 = vmatpush.bf16.msra.mxu0 %v173
    %644 = vmatpush.bf16.msra.mxu0 %v169
    %645 = vmatpush.bf16.msra.mxu0 %v165
    %646 = vmatpush.bf16.msra.mxu0 %v161
    %647 = vmatpush.bf16.msra.mxu0 %v157
    %648 = vmatmul.bf16.gmra.mxu0 %v630
    %v649 = vpop.f32.mrf.mxu0
    %v650 = vadd.f32 0.0, %v649
    %v651 = vpop.f32.mrf.mxu0
    %652 = vdwg.mxu0
    %653 = vmatpush.bf16.msra.mxu0 %v186
    %654 = vmatpush.bf16.msra.mxu0 %v182
    %655 = vmatpush.bf16.msra.mxu0 %v178
    %656 = vmatpush.bf16.msra.mxu0 %v174
    %657 = vmatpush.bf16.msra.mxu0 %v170
    %658 = vmatpush.bf16.msra.mxu0 %v166
    %659 = vmatpush.bf16.msra.mxu0 %v162
    %660 = vmatpush.bf16.msra.mxu0 %v158
    %661 = vmatmul.bf16.gmra.mxu0 %v630
    %v662 = vpop.f32.mrf.mxu0
    %v663 = vadd.f32 0.0, %v662
    %v664 = vpop.f32.mrf.mxu0
    %665 = vdwg.mxu0
    %666 = vmatpush.bf16.msra.mxu0 %v187
    %667 = vmatpush.bf16.msra.mxu0 %v183
    %668 = vmatpush.bf16.msra.mxu0 %v179
    %669 = vmatpush.bf16.msra.mxu0 %v175
    %670 = vmatpush.bf16.msra.mxu0 %v171
    %671 = vmatpush.bf16.msra.mxu0 %v167
    %672 = vmatpush.bf16.msra.mxu0 %v163
    %673 = vmatpush.bf16.msra.mxu0 %v159
    %674 = vmatmul.bf16.gmra.mxu0 %v630
    %v675 = vpop.f32.mrf.mxu0
    %v676 = vadd.f32 0.0, %v675
    %v677 = vpop.f32.mrf.mxu0
    %678 = vdwg.mxu0
    %679 = vmatpush.bf16.msra.mxu0 %v188
    %680 = vmatpush.bf16.msra.mxu0 %v184
    %681 = vmatpush.bf16.msra.mxu0 %v180
    %682 = vmatpush.bf16.msra.mxu0 %v176
    %683 = vmatpush.bf16.msra.mxu0 %v172
    %684 = vmatpush.bf16.msra.mxu0 %v168
    %685 = vmatpush.bf16.msra.mxu0 %v164
    %686 = vmatpush.bf16.msra.mxu0 %v160
    %687 = vmatmul.bf16.gmra.mxu0 %v630
    %v688 = vpop.f32.mrf.mxu0
    %v689 = vadd.f32 0.0, %v688
    %v690 = vpop.f32.mrf.mxu0
    %691 = vdwg.mxu0
    %v692 = vadd.f32 %v636, %v650
    %v693 = vadd.f32 %v637, %v663
    %v694 = vadd.f32 %v638, %v676
    %v695 = vadd.f32 %v639, %v689
    %v696 = vmul.f32 %v692, 0.5
    %v697 = vtanh.pop %v696
    %v698 = vadd.f32 %v697, 1.0
    %v699 = vmul.f32 %v698, 0.5
    %v700 = vmul.f32 %v693, 0.5
    %v701 = vtanh.pop %v700
    %v702 = vadd.f32 %v701, 1.0
    %v703 = vmul.f32 %v702, 0.5
    %v704 = vtanh.pop %v694
    %v705 = vmul.f32 %v695, 0.5
    %v706 = vtanh.pop %v705
    %v707 = vadd.f32 %v706, 1.0
    %v708 = vmul.f32 %v707, 0.5
    %v709 = vmul.f32 %v703, %v627
    %v710 = vmul.f32 %v699, %v704
    %v711 = vadd.f32 %v709, %v710
    %v712 = vtanh.pop %v711
    %v713 = vmul.f32 %v708, %v712
    %v714 = vpack.c.bf16 %v713, %v713
    %s715 = scalar_lea.vmem [#allocation4], 20
    %716 = vst [vmem:[%s715] sm:$0xf] %v714
    %s717 = scalar_lea.vmem %s0, 96
    %v718 = vld [vmem:[%s717] sm:$0xff]
    %v719 = vld [vmem:[%s717 + $0x8] sm:$0xff]
    %v720 = vunpack.c.l.bf16 %v718
    %v721 = vunpack.c.h.bf16 %v718
    %v722 = vunpack.c.l.bf16 %v719
    %v723 = vunpack.c.h.bf16 %v719
    %724 = vmatpush.bf16.msra.mxu0 %v185
    %725 = vmatpush.bf16.msra.mxu0 %v181
    %726 = vmatpush.bf16.msra.mxu0 %v177
    %727 = vmatpush.bf16.msra.mxu0 %v173
    %728 = vmatpush.bf16.msra.mxu0 %v169
    %729 = vmatpush.bf16.msra.mxu0 %v165
    %730 = vmatpush.bf16.msra.mxu0 %v161
    %731 = vmatpush.bf16.msra.mxu0 %v157
    %732 = vmatmul.bf16.gmra.mxu0 %v714
    %v733 = vpop.f32.mrf.mxu0
    %v734 = vadd.f32 0.0, %v733
    %v735 = vpop.f32.mrf.mxu0
    %736 = vdwg.mxu0
    %737 = vmatpush.bf16.msra.mxu0 %v186
    %738 = vmatpush.bf16.msra.mxu0 %v182
    %739 = vmatpush.bf16.msra.mxu0 %v178
    %740 = vmatpush.bf16.msra.mxu0 %v174
    %741 = vmatpush.bf16.msra.mxu0 %v170
    %742 = vmatpush.bf16.msra.mxu0 %v166
    %743 = vmatpush.bf16.msra.mxu0 %v162
    %744 = vmatpush.bf16.msra.mxu0 %v158
    %745 = vmatmul.bf16.gmra.mxu0 %v714
    %v746 = vpop.f32.mrf.mxu0
    %v747 = vadd.f32 0.0, %v746
    %v748 = vpop.f32.mrf.mxu0
    %749 = vdwg.mxu0
    %750 = vmatpush.bf16.msra.mxu0 %v187
    %751 = vmatpush.bf16.msra.mxu0 %v183
    %752 = vmatpush.bf16.msra.mxu0 %v179
    %753 = vmatpush.bf16.msra.mxu0 %v175
    %754 = vmatpush.bf16.msra.mxu0 %v171
    %755 = vmatpush.bf16.msra.mxu0 %v167
    %756 = vmatpush.bf16.msra.mxu0 %v163
    %757 = vmatpush.bf16.msra.mxu0 %v159
    %758 = vmatmul.bf16.gmra.mxu0 %v714
    %v759 = vpop.f32.mrf.mxu0
    %v760 = vadd.f32 0.0, %v759
    %v761 = vpop.f32.mrf.mxu0
    %762 = vdwg.mxu0
    %763 = vmatpush.bf16.msra.mxu0 %v188
    %764 = vmatpush.bf16.msra.mxu0 %v184
    %765 = vmatpush.bf16.msra.mxu0 %v180
    %766 = vmatpush.bf16.msra.mxu0 %v176
    %767 = vmatpush.bf16.msra.mxu0 %v172
    %768 = vmatpush.bf16.msra.mxu0 %v168
    %769 = vmatpush.bf16.msra.mxu0 %v164
    %770 = vmatpush.bf16.msra.mxu0 %v160
    %771 = vmatmul.bf16.gmra.mxu0 %v714
    %v772 = vpop.f32.mrf.mxu0
    %v773 = vadd.f32 0.0, %v772
    %v774 = vpop.f32.mrf.mxu0
    %775 = vdwg.mxu0
    %v776 = vadd.f32 %v720, %v734
    %v777 = vadd.f32 %v721, %v747
    %v778 = vadd.f32 %v722, %v760
    %v779 = vadd.f32 %v723, %v773
    %v780 = vmul.f32 %v776, 0.5
    %v781 = vtanh.pop %v780
    %v782 = vadd.f32 %v781, 1.0
    %v783 = vmul.f32 %v782, 0.5
    %v784 = vmul.f32 %v777, 0.5
    %v785 = vtanh.pop %v784
    %v786 = vadd.f32 %v785, 1.0
    %v787 = vmul.f32 %v786, 0.5
    %v788 = vtanh.pop %v778
    %v789 = vmul.f32 %v779, 0.5
    %v790 = vtanh.pop %v789
    %v791 = vadd.f32 %v790, 1.0
    %v792 = vmul.f32 %v791, 0.5
    %v793 = vmul.f32 %v787, %v711
    %v794 = vmul.f32 %v783, %v788
    %v795 = vadd.f32 %v793, %v794
    %v796 = vtanh.pop %v795
    %v797 = vmul.f32 %v792, %v796
    %v798 = vpack.c.bf16 %v797, %v797
    %s799 = scalar_lea.vmem [#allocation4], 24
    %800 = vst [vmem:[%s799] sm:$0xf] %v798
    %s801 = scalar_lea.vmem %s0, 112
    %v802 = vld [vmem:[%s801] sm:$0xff]
    %v803 = vld [vmem:[%s801 + $0x8] sm:$0xff]
    %v804 = vunpack.c.l.bf16 %v802
    %v805 = vunpack.c.h.bf16 %v802
    %v806 = vunpack.c.l.bf16 %v803
    %v807 = vunpack.c.h.bf16 %v803
    %808 = vmatpush.bf16.msra.mxu0 %v185
    %809 = vmatpush.bf16.msra.mxu0 %v181
    %810 = vmatpush.bf16.msra.mxu0 %v177
    %811 = vmatpush.bf16.msra.mxu0 %v173
    %812 = vmatpush.bf16.msra.mxu0 %v169
    %813 = vmatpush.bf16.msra.mxu0 %v165
    %814 = vmatpush.bf16.msra.mxu0 %v161
    %815 = vmatpush.bf16.msra.mxu0 %v157
    %816 = vmatmul.bf16.gmra.mxu0 %v798
    %v817 = vpop.f32.mrf.mxu0
    %v818 = vadd.f32 0.0, %v817
    %v819 = vpop.f32.mrf.mxu0
    %820 = vdwg.mxu0
    %821 = vmatpush.bf16.msra.mxu0 %v186
    %822 = vmatpush.bf16.msra.mxu0 %v182
    %823 = vmatpush.bf16.msra.mxu0 %v178
    %824 = vmatpush.bf16.msra.mxu0 %v174
    %825 = vmatpush.bf16.msra.mxu0 %v170
    %826 = vmatpush.bf16.msra.mxu0 %v166
    %827 = vmatpush.bf16.msra.mxu0 %v162
    %828 = vmatpush.bf16.msra.mxu0 %v158
    %829 = vmatmul.bf16.gmra.mxu0 %v798
    %v830 = vpop.f32.mrf.mxu0
    %v831 = vadd.f32 0.0, %v830
    %v832 = vpop.f32.mrf.mxu0
    %833 = vdwg.mxu0
    %834 = vmatpush.bf16.msra.mxu0 %v187
    %835 = vmatpush.bf16.msra.mxu0 %v183
    %836 = vmatpush.bf16.msra.mxu0 %v179
    %837 = vmatpush.bf16.msra.mxu0 %v175
    %838 = vmatpush.bf16.msra.mxu0 %v171
    %839 = vmatpush.bf16.msra.mxu0 %v167
    %840 = vmatpush.bf16.msra.mxu0 %v163
    %841 = vmatpush.bf16.msra.mxu0 %v159
    %842 = vmatmul.bf16.gmra.mxu0 %v798
    %v843 = vpop.f32.mrf.mxu0
    %v844 = vadd.f32 0.0, %v843
    %v845 = vpop.f32.mrf.mxu0
    %846 = vdwg.mxu0
    %847 = vmatpush.bf16.msra.mxu0 %v188
    %848 = vmatpush.bf16.msra.mxu0 %v184
    %849 = vmatpush.bf16.msra.mxu0 %v180
    %850 = vmatpush.bf16.msra.mxu0 %v176
    %851 = vmatpush.bf16.msra.mxu0 %v172
    %852 = vmatpush.bf16.msra.mxu0 %v168
    %853 = vmatpush.bf16.msra.mxu0 %v164
    %854 = vmatpush.bf16.msra.mxu0 %v160
    %855 = vmatmul.bf16.gmra.mxu0 %v798
    %v856 = vpop.f32.mrf.mxu0
    %v857 = vadd.f32 0.0, %v856
    %v858 = vpop.f32.mrf.mxu0
    %859 = vdwg.mxu0
    %v860 = vadd.f32 %v804, %v818
    %v861 = vadd.f32 %v805, %v831
    %v862 = vadd.f32 %v806, %v844
    %v863 = vadd.f32 %v807, %v857
    %v864 = vmul.f32 %v860, 0.5
    %v865 = vtanh.pop %v864
    %v866 = vadd.f32 %v865, 1.0
    %v867 = vmul.f32 %v866, 0.5
    %v868 = vmul.f32 %v861, 0.5
    %v869 = vtanh.pop %v868
    %v870 = vadd.f32 %v869, 1.0
    %v871 = vmul.f32 %v870, 0.5
    %v872 = vtanh.pop %v862
    %v873 = vmul.f32 %v863, 0.5
    %v874 = vtanh.pop %v873
    %v875 = vadd.f32 %v874, 1.0
    %v876 = vmul.f32 %v875, 0.5
    %v877 = vmul.f32 %v871, %v795
    %v878 = vmul.f32 %v867, %v872
    %v879 = vadd.f32 %v877, %v878
    %v880 = vtanh.pop %v879
    %v881 = vmul.f32 %v876, %v880
    %v882 = vpack.c.bf16 %v881, %v881
    %s883 = scalar_lea.vmem [#allocation4], 28
    %884 = vst [vmem:[%s883] sm:$0xf] %v882
    %885 = vst [vmem:[#allocation2] sm:$0xf] %v882
    %886 = vst [vmem:[#allocation3] sm:$0xff] %v879
    // Predicated region
    $region14: #{lstm_forward.8} parent=1 // pred_check
      %p887 = pneg %p15
    $region15: #{lstm_forward.8} parent=1 // pred_check_branch
      %889 = sbr.rel (%p887) target = $region17
    $region16: #{lstm_forward.8} parent=1 // pred_region
      %v890 = vunpack.c.l.bf16 %v882
      %891 = vst [vmem:[%s3] sm:$0xff] %v890
    $region17: #{lstm_forward.8} parent=1 // pred_fallthru
      _
    // Predicated region
    $region18: #{lstm_forward.8} parent=1 // pred_check
      _
    $region19: #{lstm_forward.8} parent=1 // pred_check_branch
      %893 = sbr.rel (0) target = $region21
    $region20: #{lstm_forward.8} parent=1 // pred_region
      %895 = vsyncadd [#allocation5], 0
      %s896 = sshll.u32 [#allocation4], 4
      %s897 = int_to_ptr.vmem [resolvable:$true] %s896
      %s898 = sshll.u32 %s2, 4
      %s899 = int_to_ptr.hbm [resolvable:$true] %s898
      %904 = dma.vmem_to_hbm [thread:$0]  %s897, 512, %s899, [#allocation5], 64, 64, 4
    $region21: #{lstm_forward.8} parent=1 // pred_fallthru
      _
    // Predicated region
    $region22: #{lstm_forward.8} parent=1 // pred_check
      _
    $region23: #{lstm_forward.8} parent=1 // pred_check_branch
      %906 = sbr.rel (0) target = $region25
    $region24: #{lstm_forward.8} parent=1 // pred_region
      _
    $region25: #{lstm_forward.8} parent=1 // pred_fallthru
      _
    // Predicated region
    $region26: #{lstm_forward.8} parent=1 // pred_check
      _
    $region27: #{lstm_forward.8} parent=1 // pred_check_branch
      %908 = sbr.rel (0) target = $region29
    $region28: #{lstm_forward.8} parent=1 // pred_region
      %910 = dma.done [#allocation5], 512
    $region29: #{lstm_forward.8} parent=1 // pred_fallthru
      _
    // Predicated region
    $region30: #{lstm_forward.8} parent=1 // pred_check
      _
    $region31: #{lstm_forward.8} parent=1 // pred_check_branch
      %912 = sbr.rel (0) target = $region33
    $region32: #{lstm_forward.8} parent=1 // pred_region
      _
    $region33: #{lstm_forward.8} parent=1 // pred_fallthru
      _
    %913 = vsyncpa [#allocation5], 1

// kernel: lstm_forward.6
$region0: #{lstm_forward.6}
  #allocation0 [shape = 'u32[]', space=smem, size = 0x4, offset = 0x4, fixed_abs, tag = 'smem constant byte address 0x4 - core index']
  #allocation1 [shape = 'u32[72,128]{1,0:T(1,128)}', space=vmem, size = 0x9000, scoped, tag = 'internal scratch']
  #allocation2 [shape = 'bf16[8,128]{1,0:T(8,128)(2,1)}', space=vmem, size = 0x800, scoped, tag = 'scratch operand']
  #allocation3 [shape = 'f32[8,128]{1,0:T(8,128)}', space=vmem, size = 0x1000, scoped, tag = 'scratch operand']
  %s0 = inlined_call_operand.vmem [shape: bf16[8,8,512], index: 0, kind: input, shape index: {}]
  %s1 = inlined_call_operand.hbm [shape: bf16[128,512], index: 1, kind: input, shape index: {}]
  %s2 = inlined_call_operand.vmem [shape: bf16[8,8,128], index: 2, kind: output, shape index: {0}]
  %s3 = inlined_call_operand.vmem [shape: f32[8,128], index: 3, kind: output, shape index: {1}]
  %4 = xla_tuple %s2, %s3
  %s5 = sld [smem:[#allocation0]]
  $region38: #{lstm_forward.6} parent=0
    _
  %s7 = ssub.s32 1, %s5
  %s8 = scalar_select 0, %s7, %s5
  $region1: #{lstm_forward.6} parent=0
    #allocation4 [shape = 'u8[131072]{0}', space=vmem, size = 0x20000, scoped, tag = 'input window, operand 1, single buffered']
    #allocation5 [shape = 's32[1]{0}', space=sflag, size = 0x4, scoped, tag = 'scoped memory for lstm_forward.6']
    %9 = vsyncpa [#allocation5], 0
    // Predicated region
    $region2: #{lstm_forward.6} parent=1 // pred_check
      _
    $region3: #{lstm_forward.6} parent=1 // pred_check_branch
      %11 = sbr.rel (0) target = $region5
    $region4: #{lstm_forward.6} parent=1 // pred_region
      _
    $region5: #{lstm_forward.6} parent=1 // pred_fallthru
      _
    // Predicated region
    $region6: #{lstm_forward.6} parent=1 // pred_check
      _
    $region7: #{lstm_forward.6} parent=1 // pred_check_branch
      %13 = sbr.rel (0) target = $region9
    $region8: #{lstm_forward.6} parent=1 // pred_region
      %15 = vsyncadd [#allocation5], 0
      %s16 = sshll.u32 %s1, 4
      %s17 = int_to_ptr.hbm [resolvable:$true] %s16
      %s18 = sshll.u32 [#allocation4], 4
      %s19 = int_to_ptr.vmem [resolvable:$true] %s18
      %24 = dma.hbm_to_vmem [thread:$0]  %s17, 4096, %s19, [#allocation5], 256, 256, 16
    $region9: #{lstm_forward.6} parent=1 // pred_fallthru
      _
    // Predicated region
    $region10: #{lstm_forward.6} parent=1 // pred_check
      _
    $region11: #{lstm_forward.6} parent=1 // pred_check_branch
      %26 = sbr.rel (0) target = $region13
    $region12: #{lstm_forward.6} parent=1 // pred_region
      %28 = dma.done [#allocation5], 4096
    $region13: #{lstm_forward.6} parent=1 // pred_fallthru
      _
    %p30 = scmp.eq.s32.totalorder 0, 0
    // Predicated region
    $region14: #{lstm_forward.6} parent=1 // pred_check
      %p31 = pneg %p30
    $region15: #{lstm_forward.6} parent=1 // pred_check_branch
      %33 = sbr.rel (%p31) target = $region17
    $region16: #{lstm_forward.6} parent=1 // pred_region
      %34 = vst [vmem:[#allocation2] sm:$0xf] 0
      %35 = vst [vmem:[#allocation3] sm:$0xff] 0.0
    $region17: #{lstm_forward.6} parent=1 // pred_fallthru
      _
    %v36 = vld [vmem:[#allocation4] sm:$0xff]
    %v37 = vld [vmem:[#allocation4 + $0x8] sm:$0xff]
    %v38 = vld [vmem:[#allocation4 + $0x10] sm:$0xff]
    %v39 = vld [vmem:[#allocation4 + $0x18] sm:$0xff]
    %v40 = vld [vmem:[#allocation4 + $0x20] sm:$0xff]
    %v41 = vld [vmem:[#allocation4 + $0x28] sm:$0xff]
    %v42 = vld [vmem:[#allocation4 + $0x30] sm:$0xff]
    %v43 = vld [vmem:[#allocation4 + $0x38] sm:$0xff]
    %v44 = vld [vmem:[#allocation4 + $0x40] sm:$0xff]
    %v45 = vld [vmem:[#allocation4 + $0x48] sm:$0xff]
    %v46 = vld [vmem:[#allocation4 + $0x50] sm:$0xff]
    %v47 = vld [vmem:[#allocation4 + $0x58] sm:$0xff]
    %v48 = vld [vmem:[#allocation4 + $0x60] sm:$0xff]
    %v49 = vld [vmem:[#allocation4 + $0x68] sm:$0xff]
    %v50 = vld [vmem:[#allocation4 + $0x70] sm:$0xff]
    %v51 = vld [vmem:[#allocation4 + $0x78] sm:$0xff]
    %v52 = vld [vmem:[#allocation4 + $0x80] sm:$0xff]
    %v53 = vld [vmem:[#allocation4 + $0x88] sm:$0xff]
    %v54 = vld [vmem:[#allocation4 + $0x90] sm:$0xff]
    %v55 = vld [vmem:[#allocation4 + $0x98] sm:$0xff]
    %v56 = vld [vmem:[#allocation4 + $0xa0] sm:$0xff]
    %v57 = vld [vmem:[#allocation4 + $0xa8] sm:$0xff]
    %v58 = vld [vmem:[#allocation4 + $0xb0] sm:$0xff]
    %v59 = vld [vmem:[#allocation4 + $0xb8] sm:$0xff]
    %v60 = vld [vmem:[#allocation4 + $0xc0] sm:$0xff]
    %v61 = vld [vmem:[#allocation4 + $0xc8] sm:$0xff]
    %v62 = vld [vmem:[#allocation4 + $0xd0] sm:$0xff]
    %v63 = vld [vmem:[#allocation4 + $0xd8] sm:$0xff]
    %v64 = vld [vmem:[#allocation4 + $0xe0] sm:$0xff]
    %v65 = vld [vmem:[#allocation4 + $0xe8] sm:$0xff]
    %v66 = vld [vmem:[#allocation4 + $0xf0] sm:$0xff]
    %v67 = vld [vmem:[#allocation4 + $0xf8] sm:$0xff]
    %v68 = vld [vmem:[#allocation2] sm:$0xf]
    %v69 = vld [vmem:[#allocation3] sm:$0xff]
    %v70 = vld [vmem:[%s0] sm:$0xff]
    %v71 = vld [vmem:[%s0 + $0x8] sm:$0xff]
    %v72 = vunpack.c.l.bf16 %v70
    %v73 = vunpack.c.h.bf16 %v70
    %v74 = vunpack.c.l.bf16 %v71
    %v75 = vunpack.c.h.bf16 %v71
    %v108 = vunpack.c.l.b16 %v36
    %v109 = vunpack.c.h.b16 %v36
    %v110 = vunpack.c.l.b16 %v37
    %v111 = vunpack.c.h.b16 %v37
    %v112 = vunpack.c.l.b16 %v38
    %v113 = vunpack.c.h.b16 %v38
    %v114 = vunpack.c.l.b16 %v39
    %v115 = vunpack.c.h.b16 %v39
    %v116 = vunpack.c.l.b16 %v40
    %v117 = vunpack.c.h.b16 %v40
    %v118 = vunpack.c.l.b16 %v41
    %v119 = vunpack.c.h.b16 %v41
    %v120 = vunpack.c.l.b16 %v42
    %v121 = vunpack.c.h.b16 %v42
    %v122 = vunpack.c.l.b16 %v43
    %v123 = vunpack.c.h.b16 %v43
    %v124 = vunpack.c.l.b16 %v44
    %v125 = vunpack.c.h.b16 %v44
    %v126 = vunpack.c.l.b16 %v45
    %v127 = vunpack.c.h.b16 %v45
    %v128 = vunpack.c.l.b16 %v46
    %v129 = vunpack.c.h.b16 %v46
    %v130 = vunpack.c.l.b16 %v47
    %v131 = vunpack.c.h.b16 %v47
    %v132 = vunpack.c.l.b16 %v48
    %v133 = vunpack.c.h.b16 %v48
    %v134 = vunpack.c.l.b16 %v49
    %v135 = vunpack.c.h.b16 %v49
    %v136 = vunpack.c.l.b16 %v50
    %v137 = vunpack.c.h.b16 %v50
    %v138 = vunpack.c.l.b16 %v51
    %v139 = vunpack.c.h.b16 %v51
    %v140 = vunpack.c.l.b16 %v52
    %v141 = vunpack.c.h.b16 %v52
    %v142 = vunpack.c.l.b16 %v53
    %v143 = vunpack.c.h.b16 %v53
    %v144 = vunpack.c.l.b16 %v54
    %v145 = vunpack.c.h.b16 %v54
    %v146 = vunpack.c.l.b16 %v55
    %v147 = vunpack.c.h.b16 %v55
    %v148 = vunpack.c.l.b16 %v56
    %v149 = vunpack.c.h.b16 %v56
    %v150 = vunpack.c.l.b16 %v57
    %v151 = vunpack.c.h.b16 %v57
    %v152 = vunpack.c.l.b16 %v58
    %v153 = vunpack.c.h.b16 %v58
    %v154 = vunpack.c.l.b16 %v59
    %v155 = vunpack.c.h.b16 %v59
    %v156 = vunpack.c.l.b16 %v60
    %v157 = vunpack.c.h.b16 %v60
    %v158 = vunpack.c.l.b16 %v61
    %v159 = vunpack.c.h.b16 %v61
    %v160 = vunpack.c.l.b16 %v62
    %v161 = vunpack.c.h.b16 %v62
    %v162 = vunpack.c.l.b16 %v63
    %v163 = vunpack.c.h.b16 %v63
    %v164 = vunpack.c.l.b16 %v64
    %v165 = vunpack.c.h.b16 %v64
    %v166 = vunpack.c.l.b16 %v65
    %v167 = vunpack.c.h.b16 %v65
    %v168 = vunpack.c.l.b16 %v66
    %v169 = vunpack.c.h.b16 %v66
    %v170 = vunpack.c.l.b16 %v67
    %v171 = vunpack.c.h.b16 %v67
    %v172 = vpack.c.b16 %v112, %v108
    %v173 = vpack.c.b16 %v113, %v109
    %v174 = vpack.c.b16 %v114, %v110
    %v175 = vpack.c.b16 %v115, %v111
    %v176 = vpack.c.b16 %v120, %v116
    %v177 = vpack.c.b16 %v121, %v117
    %v178 = vpack.c.b16 %v122, %v118
    %v179 = vpack.c.b16 %v123, %v119
    %v180 = vpack.c.b16 %v128, %v124
    %v181 = vpack.c.b16 %v129, %v125
    %v182 = vpack.c.b16 %v130, %v126
    %v183 = vpack.c.b16 %v131, %v127
    %v184 = vpack.c.b16 %v136, %v132
    %v185 = vpack.c.b16 %v137, %v133
    %v186 = vpack.c.b16 %v138, %v134
    %v187 = vpack.c.b16 %v139, %v135
    %v188 = vpack.c.b16 %v144, %v140
    %v189 = vpack.c.b16 %v145, %v141
    %v190 = vpack.c.b16 %v146, %v142
    %v191 = vpack.c.b16 %v147, %v143
    %v192 = vpack.c.b16 %v152, %v148
    %v193 = vpack.c.b16 %v153, %v149
    %v194 = vpack.c.b16 %v154, %v150
    %v195 = vpack.c.b16 %v155, %v151
    %v196 = vpack.c.b16 %v160, %v156
    %v197 = vpack.c.b16 %v161, %v157
    %v198 = vpack.c.b16 %v162, %v158
    %v199 = vpack.c.b16 %v163, %v159
    %v200 = vpack.c.b16 %v168, %v164
    %v201 = vpack.c.b16 %v169, %v165
    %v202 = vpack.c.b16 %v170, %v166
    %v203 = vpack.c.b16 %v171, %v167
    %236 = vmatpush.bf16.msra.mxu0 %v200
    %237 = vmatpush.bf16.msra.mxu0 %v196
    %238 = vmatpush.bf16.msra.mxu0 %v192
    %239 = vmatpush.bf16.msra.mxu0 %v188
    %240 = vmatpush.bf16.msra.mxu0 %v184
    %241 = vmatpush.bf16.msra.mxu0 %v180
    %242 = vmatpush.bf16.msra.mxu0 %v176
    %243 = vmatpush.bf16.msra.mxu0 %v172
    %244 = vmatmul.bf16.gmra.mxu0 %v68
    %v245 = vpop.f32.mrf.mxu0
    %v246 = vadd.f32 0.0, %v245
    %v247 = vpop.f32.mrf.mxu0
    %248 = vdwg.mxu0
    %249 = vmatpush.bf16.msra.mxu0 %v201
    %250 = vmatpush.bf16.msra.mxu0 %v197
    %251 = vmatpush.bf16.msra.mxu0 %v193
    %252 = vmatpush.bf16.msra.mxu0 %v189
    %253 = vmatpush.bf16.msra.mxu0 %v185
    %254 = vmatpush.bf16.msra.mxu0 %v181
    %255 = vmatpush.bf16.msra.mxu0 %v177
    %256 = vmatpush.bf16.msra.mxu0 %v173
    %257 = vmatmul.bf16.gmra.mxu0 %v68
    %v258 = vpop.f32.mrf.mxu0
    %v259 = vadd.f32 0.0, %v258
    %v260 = vpop.f32.mrf.mxu0
    %261 = vdwg.mxu0
    %262 = vmatpush.bf16.msra.mxu0 %v202
    %263 = vmatpush.bf16.msra.mxu0 %v198
    %264 = vmatpush.bf16.msra.mxu0 %v194
    %265 = vmatpush.bf16.msra.mxu0 %v190
    %266 = vmatpush.bf16.msra.mxu0 %v186
    %267 = vmatpush.bf16.msra.mxu0 %v182
    %268 = vmatpush.bf16.msra.mxu0 %v178
    %269 = vmatpush.bf16.msra.mxu0 %v174
    %270 = vmatmul.bf16.gmra.mxu0 %v68
    %v271 = vpop.f32.mrf.mxu0
    %v272 = vadd.f32 0.0, %v271
    %v273 = vpop.f32.mrf.mxu0
    %274 = vdwg.mxu0
    %275 = vmatpush.bf16.msra.mxu0 %v203
    %276 = vmatpush.bf16.msra.mxu0 %v199
    %277 = vmatpush.bf16.msra.mxu0 %v195
    %278 = vmatpush.bf16.msra.mxu0 %v191
    %279 = vmatpush.bf16.msra.mxu0 %v187
    %280 = vmatpush.bf16.msra.mxu0 %v183
    %281 = vmatpush.bf16.msra.mxu0 %v179
    %282 = vmatpush.bf16.msra.mxu0 %v175
    %283 = vmatmul.bf16.gmra.mxu0 %v68
    %v284 = vpop.f32.mrf.mxu0
    %v285 = vadd.f32 0.0, %v284
    %v286 = vpop.f32.mrf.mxu0
    %287 = vdwg.mxu0
    %v288 = vadd.f32 %v72, %v246
    %v289 = vadd.f32 %v73, %v259
    %v290 = vadd.f32 %v74, %v272
    %v291 = vadd.f32 %v75, %v285
    %v292 = vmul.f32 %v288, 0.5
    %v293 = vtanh.pop %v292
    %v294 = vadd.f32 %v293, 1.0
    %v295 = vmul.f32 %v294, 0.5
    %v296 = vmul.f32 %v289, 0.5
    %v297 = vtanh.pop %v296
    %v298 = vadd.f32 %v297, 1.0
    %v299 = vmul.f32 %v298, 0.5
    %v300 = vtanh.pop %v290
    %v301 = vmul.f32 %v291, 0.5
    %v302 = vtanh.pop %v301
    %v303 = vadd.f32 %v302, 1.0
    %v304 = vmul.f32 %v303, 0.5
    %v305 = vmul.f32 %v299, %v69
    %v306 = vmul.f32 %v295, %v300
    %v307 = vadd.f32 %v305, %v306
    %v308 = vtanh.pop %v307
    %v309 = vmul.f32 %v304, %v308
    %v310 = vpack.c.bf16 %v309, %v309
    %311 = vst [vmem:[%s2] sm:$0xf] %v310
    %s312 = scalar_lea.vmem %s0, 16
    %v313 = vld [vmem:[%s312] sm:$0xff]
    %v314 = vld [vmem:[%s312 + $0x8] sm:$0xff]
    %v315 = vunpack.c.l.bf16 %v313
    %v316 = vunpack.c.h.bf16 %v313
    %v317 = vunpack.c.l.bf16 %v314
    %v318 = vunpack.c.h.bf16 %v314
    %319 = vmatpush.bf16.msra.mxu0 %v200
    %320 = vmatpush.bf16.msra.mxu0 %v196
    %321 = vmatpush.bf16.msra.mxu0 %v192
    %322 = vmatpush.bf16.msra.mxu0 %v188
    %323 = vmatpush.bf16.msra.mxu0 %v184
    %324 = vmatpush.bf16.msra.mxu0 %v180
    %325 = vmatpush.bf16.msra.mxu0 %v176
    %326 = vmatpush.bf16.msra.mxu0 %v172
    %327 = vmatmul.bf16.gmra.mxu0 %v310
    %v328 = vpop.f32.mrf.mxu0
    %v329 = vadd.f32 0.0, %v328
    %v330 = vpop.f32.mrf.mxu0
    %331 = vdwg.mxu0
    %332 = vmatpush.bf16.msra.mxu0 %v201
    %333 = vmatpush.bf16.msra.mxu0 %v197
    %334 = vmatpush.bf16.msra.mxu0 %v193
    %335 = vmatpush.bf16.msra.mxu0 %v189
    %336 = vmatpush.bf16.msra.mxu0 %v185
    %337 = vmatpush.bf16.msra.mxu0 %v181
    %338 = vmatpush.bf16.msra.mxu0 %v177
    %339 = vmatpush.bf16.msra.mxu0 %v173
    %340 = vmatmul.bf16.gmra.mxu0 %v310
    %v341 = vpop.f32.mrf.mxu0
    %v342 = vadd.f32 0.0, %v341
    %v343 = vpop.f32.mrf.mxu0
    %344 = vdwg.mxu0
    %345 = vmatpush.bf16.msra.mxu0 %v202
    %346 = vmatpush.bf16.msra.mxu0 %v198
    %347 = vmatpush.bf16.msra.mxu0 %v194
    %348 = vmatpush.bf16.msra.mxu0 %v190
    %349 = vmatpush.bf16.msra.mxu0 %v186
    %350 = vmatpush.bf16.msra.mxu0 %v182
    %351 = vmatpush.bf16.msra.mxu0 %v178
    %352 = vmatpush.bf16.msra.mxu0 %v174
    %353 = vmatmul.bf16.gmra.mxu0 %v310
    %v354 = vpop.f32.mrf.mxu0
    %v355 = vadd.f32 0.0, %v354
    %v356 = vpop.f32.mrf.mxu0
    %357 = vdwg.mxu0
    %358 = vmatpush.bf16.msra.mxu0 %v203
    %359 = vmatpush.bf16.msra.mxu0 %v199
    %360 = vmatpush.bf16.msra.mxu0 %v195
    %361 = vmatpush.bf16.msra.mxu0 %v191
    %362 = vmatpush.bf16.msra.mxu0 %v187
    %363 = vmatpush.bf16.msra.mxu0 %v183
    %364 = vmatpush.bf16.msra.mxu0 %v179
    %365 = vmatpush.bf16.msra.mxu0 %v175
    %366 = vmatmul.bf16.gmra.mxu0 %v310
    %v367 = vpop.f32.mrf.mxu0
    %v368 = vadd.f32 0.0, %v367
    %v369 = vpop.f32.mrf.mxu0
    %370 = vdwg.mxu0
    %v371 = vadd.f32 %v315, %v329
    %v372 = vadd.f32 %v316, %v342
    %v373 = vadd.f32 %v317, %v355
    %v374 = vadd.f32 %v318, %v368
    %v375 = vmul.f32 %v371, 0.5
    %v376 = vtanh.pop %v375
    %v377 = vadd.f32 %v376, 1.0
    %v378 = vmul.f32 %v377, 0.5
    %v379 = vmul.f32 %v372, 0.5
    %v380 = vtanh.pop %v379
    %v381 = vadd.f32 %v380, 1.0
    %v382 = vmul.f32 %v381, 0.5
    %v383 = vtanh.pop %v373
    %v384 = vmul.f32 %v374, 0.5
    %v385 = vtanh.pop %v384
    %v386 = vadd.f32 %v385, 1.0
    %v387 = vmul.f32 %v386, 0.5
    %v388 = vmul.f32 %v382, %v307
    %v389 = vmul.f32 %v378, %v383
    %v390 = vadd.f32 %v388, %v389
    %v391 = vtanh.pop %v390
    %v392 = vmul.f32 %v387, %v391
    %v393 = vpack.c.bf16 %v392, %v392
    %s394 = scalar_lea.vmem %s2, 4
    %395 = vst [vmem:[%s394] sm:$0xf] %v393
    %s396 = scalar_lea.vmem %s0, 32
    %v397 = vld [vmem:[%s396] sm:$0xff]
    %v398 = vld [vmem:[%s396 + $0x8] sm:$0xff]
    %v399 = vunpack.c.l.bf16 %v397
    %v400 = vunpack.c.h.bf16 %v397
    %v401 = vunpack.c.l.bf16 %v398
    %v402 = vunpack.c.h.bf16 %v398
    %403 = vmatpush.bf16.msra.mxu0 %v200
    %404 = vmatpush.bf16.msra.mxu0 %v196
    %405 = vmatpush.bf16.msra.mxu0 %v192
    %406 = vmatpush.bf16.msra.mxu0 %v188
    %407 = vmatpush.bf16.msra.mxu0 %v184
    %408 = vmatpush.bf16.msra.mxu0 %v180
    %409 = vmatpush.bf16.msra.mxu0 %v176
    %410 = vmatpush.bf16.msra.mxu0 %v172
    %411 = vmatmul.bf16.gmra.mxu0 %v393
    %v412 = vpop.f32.mrf.mxu0
    %v413 = vadd.f32 0.0, %v412
    %v414 = vpop.f32.mrf.mxu0
    %415 = vdwg.mxu0
    %416 = vmatpush.bf16.msra.mxu0 %v201
    %417 = vmatpush.bf16.msra.mxu0 %v197
    %418 = vmatpush.bf16.msra.mxu0 %v193
    %419 = vmatpush.bf16.msra.mxu0 %v189
    %420 = vmatpush.bf16.msra.mxu0 %v185
    %421 = vmatpush.bf16.msra.mxu0 %v181
    %422 = vmatpush.bf16.msra.mxu0 %v177
    %423 = vmatpush.bf16.msra.mxu0 %v173
    %424 = vmatmul.bf16.gmra.mxu0 %v393
    %v425 = vpop.f32.mrf.mxu0
    %v426 = vadd.f32 0.0, %v425
    %v427 = vpop.f32.mrf.mxu0
    %428 = vdwg.mxu0
    %429 = vmatpush.bf16.msra.mxu0 %v202
    %430 = vmatpush.bf16.msra.mxu0 %v198
    %431 = vmatpush.bf16.msra.mxu0 %v194
    %432 = vmatpush.bf16.msra.mxu0 %v190
    %433 = vmatpush.bf16.msra.mxu0 %v186
    %434 = vmatpush.bf16.msra.mxu0 %v182
    %435 = vmatpush.bf16.msra.mxu0 %v178
    %436 = vmatpush.bf16.msra.mxu0 %v174
    %437 = vmatmul.bf16.gmra.mxu0 %v393
    %v438 = vpop.f32.mrf.mxu0
    %v439 = vadd.f32 0.0, %v438
    %v440 = vpop.f32.mrf.mxu0
    %441 = vdwg.mxu0
    %442 = vmatpush.bf16.msra.mxu0 %v203
    %443 = vmatpush.bf16.msra.mxu0 %v199
    %444 = vmatpush.bf16.msra.mxu0 %v195
    %445 = vmatpush.bf16.msra.mxu0 %v191
    %446 = vmatpush.bf16.msra.mxu0 %v187
    %447 = vmatpush.bf16.msra.mxu0 %v183
    %448 = vmatpush.bf16.msra.mxu0 %v179
    %449 = vmatpush.bf16.msra.mxu0 %v175
    %450 = vmatmul.bf16.gmra.mxu0 %v393
    %v451 = vpop.f32.mrf.mxu0
    %v452 = vadd.f32 0.0, %v451
    %v453 = vpop.f32.mrf.mxu0
    %454 = vdwg.mxu0
    %v455 = vadd.f32 %v399, %v413
    %v456 = vadd.f32 %v400, %v426
    %v457 = vadd.f32 %v401, %v439
    %v458 = vadd.f32 %v402, %v452
    %v459 = vmul.f32 %v455, 0.5
    %v460 = vtanh.pop %v459
    %v461 = vadd.f32 %v460, 1.0
    %v462 = vmul.f32 %v461, 0.5
    %v463 = vmul.f32 %v456, 0.5
    %v464 = vtanh.pop %v463
    %v465 = vadd.f32 %v464, 1.0
    %v466 = vmul.f32 %v465, 0.5
    %v467 = vtanh.pop %v457
    %v468 = vmul.f32 %v458, 0.5
    %v469 = vtanh.pop %v468
    %v470 = vadd.f32 %v469, 1.0
    %v471 = vmul.f32 %v470, 0.5
    %v472 = vmul.f32 %v466, %v390
    %v473 = vmul.f32 %v462, %v467
    %v474 = vadd.f32 %v472, %v473
    %v475 = vtanh.pop %v474
    %v476 = vmul.f32 %v471, %v475
    %v477 = vpack.c.bf16 %v476, %v476
    %s478 = scalar_lea.vmem %s2, 8
    %479 = vst [vmem:[%s478] sm:$0xf] %v477
    %s480 = scalar_lea.vmem %s0, 48
    %v481 = vld [vmem:[%s480] sm:$0xff]
    %v482 = vld [vmem:[%s480 + $0x8] sm:$0xff]
    %v483 = vunpack.c.l.bf16 %v481
    %v484 = vunpack.c.h.bf16 %v481
    %v485 = vunpack.c.l.bf16 %v482
    %v486 = vunpack.c.h.bf16 %v482
    %487 = vmatpush.bf16.msra.mxu0 %v200
    %488 = vmatpush.bf16.msra.mxu0 %v196
    %489 = vmatpush.bf16.msra.mxu0 %v192
    %490 = vmatpush.bf16.msra.mxu0 %v188
    %491 = vmatpush.bf16.msra.mxu0 %v184
    %492 = vmatpush.bf16.msra.mxu0 %v180
    %493 = vmatpush.bf16.msra.mxu0 %v176
    %494 = vmatpush.bf16.msra.mxu0 %v172
    %495 = vmatmul.bf16.gmra.mxu0 %v477
    %v496 = vpop.f32.mrf.mxu0
    %v497 = vadd.f32 0.0, %v496
    %v498 = vpop.f32.mrf.mxu0
    %499 = vdwg.mxu0
    %500 = vmatpush.bf16.msra.mxu0 %v201
    %501 = vmatpush.bf16.msra.mxu0 %v197
    %502 = vmatpush.bf16.msra.mxu0 %v193
    %503 = vmatpush.bf16.msra.mxu0 %v189
    %504 = vmatpush.bf16.msra.mxu0 %v185
    %505 = vmatpush.bf16.msra.mxu0 %v181
    %506 = vmatpush.bf16.msra.mxu0 %v177
    %507 = vmatpush.bf16.msra.mxu0 %v173
    %508 = vmatmul.bf16.gmra.mxu0 %v477
    %v509 = vpop.f32.mrf.mxu0
    %v510 = vadd.f32 0.0, %v509
    %v511 = vpop.f32.mrf.mxu0
    %512 = vdwg.mxu0
    %513 = vmatpush.bf16.msra.mxu0 %v202
    %514 = vmatpush.bf16.msra.mxu0 %v198
    %515 = vmatpush.bf16.msra.mxu0 %v194
    %516 = vmatpush.bf16.msra.mxu0 %v190
    %517 = vmatpush.bf16.msra.mxu0 %v186
    %518 = vmatpush.bf16.msra.mxu0 %v182
    %519 = vmatpush.bf16.msra.mxu0 %v178
    %520 = vmatpush.bf16.msra.mxu0 %v174
    %521 = vmatmul.bf16.gmra.mxu0 %v477
    %v522 = vpop.f32.mrf.mxu0
    %v523 = vadd.f32 0.0, %v522
    %v524 = vpop.f32.mrf.mxu0
    %525 = vdwg.mxu0
    %526 = vmatpush.bf16.msra.mxu0 %v203
    %527 = vmatpush.bf16.msra.mxu0 %v199
    %528 = vmatpush.bf16.msra.mxu0 %v195
    %529 = vmatpush.bf16.msra.mxu0 %v191
    %530 = vmatpush.bf16.msra.mxu0 %v187
    %531 = vmatpush.bf16.msra.mxu0 %v183
    %532 = vmatpush.bf16.msra.mxu0 %v179
    %533 = vmatpush.bf16.msra.mxu0 %v175
    %534 = vmatmul.bf16.gmra.mxu0 %v477
    %v535 = vpop.f32.mrf.mxu0
    %v536 = vadd.f32 0.0, %v535
    %v537 = vpop.f32.mrf.mxu0
    %538 = vdwg.mxu0
    %v539 = vadd.f32 %v483, %v497
    %v540 = vadd.f32 %v484, %v510
    %v541 = vadd.f32 %v485, %v523
    %v542 = vadd.f32 %v486, %v536
    %v543 = vmul.f32 %v539, 0.5
    %v544 = vtanh.pop %v543
    %v545 = vadd.f32 %v544, 1.0
    %v546 = vmul.f32 %v545, 0.5
    %v547 = vmul.f32 %v540, 0.5
    %v548 = vtanh.pop %v547
    %v549 = vadd.f32 %v548, 1.0
    %v550 = vmul.f32 %v549, 0.5
    %v551 = vtanh.pop %v541
    %v552 = vmul.f32 %v542, 0.5
    %v553 = vtanh.pop %v552
    %v554 = vadd.f32 %v553, 1.0
    %v555 = vmul.f32 %v554, 0.5
    %v556 = vmul.f32 %v550, %v474
    %v557 = vmul.f32 %v546, %v551
    %v558 = vadd.f32 %v556, %v557
    %v559 = vtanh.pop %v558
    %v560 = vmul.f32 %v555, %v559
    %v561 = vpack.c.bf16 %v560, %v560
    %s562 = scalar_lea.vmem %s2, 12
    %563 = vst [vmem:[%s562] sm:$0xf] %v561
    %s564 = scalar_lea.vmem %s0, 64
    %v565 = vld [vmem:[%s564] sm:$0xff]
    %v566 = vld [vmem:[%s564 + $0x8] sm:$0xff]
    %v567 = vunpack.c.l.bf16 %v565
    %v568 = vunpack.c.h.bf16 %v565
    %v569 = vunpack.c.l.bf16 %v566
    %v570 = vunpack.c.h.bf16 %v566
    %571 = vmatpush.bf16.msra.mxu0 %v200
    %572 = vmatpush.bf16.msra.mxu0 %v196
    %573 = vmatpush.bf16.msra.mxu0 %v192
    %574 = vmatpush.bf16.msra.mxu0 %v188
    %575 = vmatpush.bf16.msra.mxu0 %v184
    %576 = vmatpush.bf16.msra.mxu0 %v180
    %577 = vmatpush.bf16.msra.mxu0 %v176
    %578 = vmatpush.bf16.msra.mxu0 %v172
    %579 = vmatmul.bf16.gmra.mxu0 %v561
    %v580 = vpop.f32.mrf.mxu0
    %v581 = vadd.f32 0.0, %v580
    %v582 = vpop.f32.mrf.mxu0
    %583 = vdwg.mxu0
    %584 = vmatpush.bf16.msra.mxu0 %v201
    %585 = vmatpush.bf16.msra.mxu0 %v197
    %586 = vmatpush.bf16.msra.mxu0 %v193
    %587 = vmatpush.bf16.msra.mxu0 %v189
    %588 = vmatpush.bf16.msra.mxu0 %v185
    %589 = vmatpush.bf16.msra.mxu0 %v181
    %590 = vmatpush.bf16.msra.mxu0 %v177
    %591 = vmatpush.bf16.msra.mxu0 %v173
    %592 = vmatmul.bf16.gmra.mxu0 %v561
    %v593 = vpop.f32.mrf.mxu0
    %v594 = vadd.f32 0.0, %v593
    %v595 = vpop.f32.mrf.mxu0
    %596 = vdwg.mxu0
    %597 = vmatpush.bf16.msra.mxu0 %v202
    %598 = vmatpush.bf16.msra.mxu0 %v198
    %599 = vmatpush.bf16.msra.mxu0 %v194
    %600 = vmatpush.bf16.msra.mxu0 %v190
    %601 = vmatpush.bf16.msra.mxu0 %v186
    %602 = vmatpush.bf16.msra.mxu0 %v182
    %603 = vmatpush.bf16.msra.mxu0 %v178
    %604 = vmatpush.bf16.msra.mxu0 %v174
    %605 = vmatmul.bf16.gmra.mxu0 %v561
    %v606 = vpop.f32.mrf.mxu0
    %v607 = vadd.f32 0.0, %v606
    %v608 = vpop.f32.mrf.mxu0
    %609 = vdwg.mxu0
    %610 = vmatpush.bf16.msra.mxu0 %v203
    %611 = vmatpush.bf16.msra.mxu0 %v199
    %612 = vmatpush.bf16.msra.mxu0 %v195
    %613 = vmatpush.bf16.msra.mxu0 %v191
    %614 = vmatpush.bf16.msra.mxu0 %v187
    %615 = vmatpush.bf16.msra.mxu0 %v183
    %616 = vmatpush.bf16.msra.mxu0 %v179
    %617 = vmatpush.bf16.msra.mxu0 %v175
    %618 = vmatmul.bf16.gmra.mxu0 %v561
    %v619 = vpop.f32.mrf.mxu0
    %v620 = vadd.f32 0.0, %v619
    %v621 = vpop.f32.mrf.mxu0
    %622 = vdwg.mxu0
    %v623 = vadd.f32 %v567, %v581
    %v624 = vadd.f32 %v568, %v594
    %v625 = vadd.f32 %v569, %v607
    %v626 = vadd.f32 %v570, %v620
    %v627 = vmul.f32 %v623, 0.5
    %v628 = vtanh.pop %v627
    %v629 = vadd.f32 %v628, 1.0
    %v630 = vmul.f32 %v629, 0.5
    %v631 = vmul.f32 %v624, 0.5
    %v632 = vtanh.pop %v631
    %v633 = vadd.f32 %v632, 1.0
    %v634 = vmul.f32 %v633, 0.5
    %v635 = vtanh.pop %v625
    %v636 = vmul.f32 %v626, 0.5
    %v637 = vtanh.pop %v636
    %v638 = vadd.f32 %v637, 1.0
    %v639 = vmul.f32 %v638, 0.5
    %v640 = vmul.f32 %v634, %v558
    %v641 = vmul.f32 %v630, %v635
    %v642 = vadd.f32 %v640, %v641
    %v643 = vtanh.pop %v642
    %v644 = vmul.f32 %v639, %v643
    %v645 = vpack.c.bf16 %v644, %v644
    %s646 = scalar_lea.vmem %s2, 16
    %647 = vst [vmem:[%s646] sm:$0xf] %v645
    %s648 = scalar_lea.vmem %s0, 80
    %v649 = vld [vmem:[%s648] sm:$0xff]
    %v650 = vld [vmem:[%s648 + $0x8] sm:$0xff]
    %v651 = vunpack.c.l.bf16 %v649
    %v652 = vunpack.c.h.bf16 %v649
    %v653 = vunpack.c.l.bf16 %v650
    %v654 = vunpack.c.h.bf16 %v650
    %655 = vmatpush.bf16.msra.mxu0 %v200
    %656 = vmatpush.bf16.msra.mxu0 %v196
    %657 = vmatpush.bf16.msra.mxu0 %v192
    %658 = vmatpush.bf16.msra.mxu0 %v188
    %659 = vmatpush.bf16.msra.mxu0 %v184
    %660 = vmatpush.bf16.msra.mxu0 %v180
    %661 = vmatpush.bf16.msra.mxu0 %v176
    %662 = vmatpush.bf16.msra.mxu0 %v172
    %663 = vmatmul.bf16.gmra.mxu0 %v645
    %v664 = vpop.f32.mrf.mxu0
    %v665 = vadd.f32 0.0, %v664
    %v666 = vpop.f32.mrf.mxu0
    %667 = vdwg.mxu0
    %668 = vmatpush.bf16.msra.mxu0 %v201
    %669 = vmatpush.bf16.msra.mxu0 %v197
    %670 = vmatpush.bf16.msra.mxu0 %v193
    %671 = vmatpush.bf16.msra.mxu0 %v189
    %672 = vmatpush.bf16.msra.mxu0 %v185
    %673 = vmatpush.bf16.msra.mxu0 %v181
    %674 = vmatpush.bf16.msra.mxu0 %v177
    %675 = vmatpush.bf16.msra.mxu0 %v173
    %676 = vmatmul.bf16.gmra.mxu0 %v645
    %v677 = vpop.f32.mrf.mxu0
    %v678 = vadd.f32 0.0, %v677
    %v679 = vpop.f32.mrf.mxu0
    %680 = vdwg.mxu0
    %681 = vmatpush.bf16.msra.mxu0 %v202
    %682 = vmatpush.bf16.msra.mxu0 %v198
    %683 = vmatpush.bf16.msra.mxu0 %v194
    %684 = vmatpush.bf16.msra.mxu0 %v190
    %685 = vmatpush.bf16.msra.mxu0 %v186
    %686 = vmatpush.bf16.msra.mxu0 %v182
    %687 = vmatpush.bf16.msra.mxu0 %v178
    %688 = vmatpush.bf16.msra.mxu0 %v174
    %689 = vmatmul.bf16.gmra.mxu0 %v645
    %v690 = vpop.f32.mrf.mxu0
    %v691 = vadd.f32 0.0, %v690
    %v692 = vpop.f32.mrf.mxu0
    %693 = vdwg.mxu0
    %694 = vmatpush.bf16.msra.mxu0 %v203
    %695 = vmatpush.bf16.msra.mxu0 %v199
    %696 = vmatpush.bf16.msra.mxu0 %v195
    %697 = vmatpush.bf16.msra.mxu0 %v191
    %698 = vmatpush.bf16.msra.mxu0 %v187
    %699 = vmatpush.bf16.msra.mxu0 %v183
    %700 = vmatpush.bf16.msra.mxu0 %v179
    %701 = vmatpush.bf16.msra.mxu0 %v175
    %702 = vmatmul.bf16.gmra.mxu0 %v645
    %v703 = vpop.f32.mrf.mxu0
    %v704 = vadd.f32 0.0, %v703
    %v705 = vpop.f32.mrf.mxu0
    %706 = vdwg.mxu0
    %v707 = vadd.f32 %v651, %v665
    %v708 = vadd.f32 %v652, %v678
    %v709 = vadd.f32 %v653, %v691
    %v710 = vadd.f32 %v654, %v704
    %v711 = vmul.f32 %v707, 0.5
    %v712 = vtanh.pop %v711
    %v713 = vadd.f32 %v712, 1.0
    %v714 = vmul.f32 %v713, 0.5
    %v715 = vmul.f32 %v708, 0.5
    %v716 = vtanh.pop %v715
    %v717 = vadd.f32 %v716, 1.0
    %v718 = vmul.f32 %v717, 0.5
    %v719 = vtanh.pop %v709
    %v720 = vmul.f32 %v710, 0.5
    %v721 = vtanh.pop %v720
    %v722 = vadd.f32 %v721, 1.0
    %v723 = vmul.f32 %v722, 0.5
    %v724 = vmul.f32 %v718, %v642
    %v725 = vmul.f32 %v714, %v719
    %v726 = vadd.f32 %v724, %v725
    %v727 = vtanh.pop %v726
    %v728 = vmul.f32 %v723, %v727
    %v729 = vpack.c.bf16 %v728, %v728
    %s730 = scalar_lea.vmem %s2, 20
    %731 = vst [vmem:[%s730] sm:$0xf] %v729
    %s732 = scalar_lea.vmem %s0, 96
    %v733 = vld [vmem:[%s732] sm:$0xff]
    %v734 = vld [vmem:[%s732 + $0x8] sm:$0xff]
    %v735 = vunpack.c.l.bf16 %v733
    %v736 = vunpack.c.h.bf16 %v733
    %v737 = vunpack.c.l.bf16 %v734
    %v738 = vunpack.c.h.bf16 %v734
    %739 = vmatpush.bf16.msra.mxu0 %v200
    %740 = vmatpush.bf16.msra.mxu0 %v196
    %741 = vmatpush.bf16.msra.mxu0 %v192
    %742 = vmatpush.bf16.msra.mxu0 %v188
    %743 = vmatpush.bf16.msra.mxu0 %v184
    %744 = vmatpush.bf16.msra.mxu0 %v180
    %745 = vmatpush.bf16.msra.mxu0 %v176
    %746 = vmatpush.bf16.msra.mxu0 %v172
    %747 = vmatmul.bf16.gmra.mxu0 %v729
    %v748 = vpop.f32.mrf.mxu0
    %v749 = vadd.f32 0.0, %v748
    %v750 = vpop.f32.mrf.mxu0
    %751 = vdwg.mxu0
    %752 = vmatpush.bf16.msra.mxu0 %v201
    %753 = vmatpush.bf16.msra.mxu0 %v197
    %754 = vmatpush.bf16.msra.mxu0 %v193
    %755 = vmatpush.bf16.msra.mxu0 %v189
    %756 = vmatpush.bf16.msra.mxu0 %v185
    %757 = vmatpush.bf16.msra.mxu0 %v181
    %758 = vmatpush.bf16.msra.mxu0 %v177
    %759 = vmatpush.bf16.msra.mxu0 %v173
    %760 = vmatmul.bf16.gmra.mxu0 %v729
    %v761 = vpop.f32.mrf.mxu0
    %v762 = vadd.f32 0.0, %v761
    %v763 = vpop.f32.mrf.mxu0
    %764 = vdwg.mxu0
    %765 = vmatpush.bf16.msra.mxu0 %v202
    %766 = vmatpush.bf16.msra.mxu0 %v198
    %767 = vmatpush.bf16.msra.mxu0 %v194
    %768 = vmatpush.bf16.msra.mxu0 %v190
    %769 = vmatpush.bf16.msra.mxu0 %v186
    %770 = vmatpush.bf16.msra.mxu0 %v182
    %771 = vmatpush.bf16.msra.mxu0 %v178
    %772 = vmatpush.bf16.msra.mxu0 %v174
    %773 = vmatmul.bf16.gmra.mxu0 %v729
    %v774 = vpop.f32.mrf.mxu0
    %v775 = vadd.f32 0.0, %v774
    %v776 = vpop.f32.mrf.mxu0
    %777 = vdwg.mxu0
    %778 = vmatpush.bf16.msra.mxu0 %v203
    %779 = vmatpush.bf16.msra.mxu0 %v199
    %780 = vmatpush.bf16.msra.mxu0 %v195
    %781 = vmatpush.bf16.msra.mxu0 %v191
    %782 = vmatpush.bf16.msra.mxu0 %v187
    %783 = vmatpush.bf16.msra.mxu0 %v183
    %784 = vmatpush.bf16.msra.mxu0 %v179
    %785 = vmatpush.bf16.msra.mxu0 %v175
    %786 = vmatmul.bf16.gmra.mxu0 %v729
    %v787 = vpop.f32.mrf.mxu0
    %v788 = vadd.f32 0.0, %v787
    %v789 = vpop.f32.mrf.mxu0
    %790 = vdwg.mxu0
    %v791 = vadd.f32 %v735, %v749
    %v792 = vadd.f32 %v736, %v762
    %v793 = vadd.f32 %v737, %v775
    %v794 = vadd.f32 %v738, %v788
    %v795 = vmul.f32 %v791, 0.5
    %v796 = vtanh.pop %v795
    %v797 = vadd.f32 %v796, 1.0
    %v798 = vmul.f32 %v797, 0.5
    %v799 = vmul.f32 %v792, 0.5
    %v800 = vtanh.pop %v799
    %v801 = vadd.f32 %v800, 1.0
    %v802 = vmul.f32 %v801, 0.5
    %v803 = vtanh.pop %v793
    %v804 = vmul.f32 %v794, 0.5
    %v805 = vtanh.pop %v804
    %v806 = vadd.f32 %v805, 1.0
    %v807 = vmul.f32 %v806, 0.5
    %v808 = vmul.f32 %v802, %v726
    %v809 = vmul.f32 %v798, %v803
    %v810 = vadd.f32 %v808, %v809
    %v811 = vtanh.pop %v810
    %v812 = vmul.f32 %v807, %v811
    %v813 = vpack.c.bf16 %v812, %v812
    %s814 = scalar_lea.vmem %s2, 24
    %815 = vst [vmem:[%s814] sm:$0xf] %v813
    %s816 = scalar_lea.vmem %s0, 112
    %v817 = vld [vmem:[%s816] sm:$0xff]
    %v818 = vld [vmem:[%s816 + $0x8] sm:$0xff]
    %v819 = vunpack.c.l.bf16 %v817
    %v820 = vunpack.c.h.bf16 %v817
    %v821 = vunpack.c.l.bf16 %v818
    %v822 = vunpack.c.h.bf16 %v818
    %823 = vmatpush.bf16.msra.mxu0 %v200
    %824 = vmatpush.bf16.msra.mxu0 %v196
    %825 = vmatpush.bf16.msra.mxu0 %v192
    %826 = vmatpush.bf16.msra.mxu0 %v188
    %827 = vmatpush.bf16.msra.mxu0 %v184
    %828 = vmatpush.bf16.msra.mxu0 %v180
    %829 = vmatpush.bf16.msra.mxu0 %v176
    %830 = vmatpush.bf16.msra.mxu0 %v172
    %831 = vmatmul.bf16.gmra.mxu0 %v813
    %v832 = vpop.f32.mrf.mxu0
    %v833 = vadd.f32 0.0, %v832
    %v834 = vpop.f32.mrf.mxu0
    %835 = vdwg.mxu0
    %836 = vmatpush.bf16.msra.mxu0 %v201
    %837 = vmatpush.bf16.msra.mxu0 %v197
    %838 = vmatpush.bf16.msra.mxu0 %v193
    %839 = vmatpush.bf16.msra.mxu0 %v189
    %840 = vmatpush.bf16.msra.mxu0 %v185
    %841 = vmatpush.bf16.msra.mxu0 %v181
    %842 = vmatpush.bf16.msra.mxu0 %v177
    %843 = vmatpush.bf16.msra.mxu0 %v173
    %844 = vmatmul.bf16.gmra.mxu0 %v813
    %v845 = vpop.f32.mrf.mxu0
    %v846 = vadd.f32 0.0, %v845
    %v847 = vpop.f32.mrf.mxu0
    %848 = vdwg.mxu0
    %849 = vmatpush.bf16.msra.mxu0 %v202
    %850 = vmatpush.bf16.msra.mxu0 %v198
    %851 = vmatpush.bf16.msra.mxu0 %v194
    %852 = vmatpush.bf16.msra.mxu0 %v190
    %853 = vmatpush.bf16.msra.mxu0 %v186
    %854 = vmatpush.bf16.msra.mxu0 %v182
    %855 = vmatpush.bf16.msra.mxu0 %v178
    %856 = vmatpush.bf16.msra.mxu0 %v174
    %857 = vmatmul.bf16.gmra.mxu0 %v813
    %v858 = vpop.f32.mrf.mxu0
    %v859 = vadd.f32 0.0, %v858
    %v860 = vpop.f32.mrf.mxu0
    %861 = vdwg.mxu0
    %862 = vmatpush.bf16.msra.mxu0 %v203
    %863 = vmatpush.bf16.msra.mxu0 %v199
    %864 = vmatpush.bf16.msra.mxu0 %v195
    %865 = vmatpush.bf16.msra.mxu0 %v191
    %866 = vmatpush.bf16.msra.mxu0 %v187
    %867 = vmatpush.bf16.msra.mxu0 %v183
    %868 = vmatpush.bf16.msra.mxu0 %v179
    %869 = vmatpush.bf16.msra.mxu0 %v175
    %870 = vmatmul.bf16.gmra.mxu0 %v813
    %v871 = vpop.f32.mrf.mxu0
    %v872 = vadd.f32 0.0, %v871
    %v873 = vpop.f32.mrf.mxu0
    %874 = vdwg.mxu0
    %v875 = vadd.f32 %v819, %v833
    %v876 = vadd.f32 %v820, %v846
    %v877 = vadd.f32 %v821, %v859
    %v878 = vadd.f32 %v822, %v872
    %v879 = vmul.f32 %v875, 0.5
    %v880 = vtanh.pop %v879
    %v881 = vadd.f32 %v880, 1.0
    %v882 = vmul.f32 %v881, 0.5
    %v883 = vmul.f32 %v876, 0.5
    %v884 = vtanh.pop %v883
    %v885 = vadd.f32 %v884, 1.0
    %v886 = vmul.f32 %v885, 0.5
    %v887 = vtanh.pop %v877
    %v888 = vmul.f32 %v878, 0.5
    %v889 = vtanh.pop %v888
    %v890 = vadd.f32 %v889, 1.0
    %v891 = vmul.f32 %v890, 0.5
    %v892 = vmul.f32 %v886, %v810
    %v893 = vmul.f32 %v882, %v887
    %v894 = vadd.f32 %v892, %v893
    %v895 = vtanh.pop %v894
    %v896 = vmul.f32 %v891, %v895
    %v897 = vpack.c.bf16 %v896, %v896
    %s898 = scalar_lea.vmem %s2, 28
    %899 = vst [vmem:[%s898] sm:$0xf] %v897
    %900 = vst [vmem:[#allocation2] sm:$0xf] %v897
    %901 = vst [vmem:[#allocation3] sm:$0xff] %v894
    // Predicated region
    $region18: #{lstm_forward.6} parent=1 // pred_check
      %p902 = pneg %p30
    $region19: #{lstm_forward.6} parent=1 // pred_check_branch
      %904 = sbr.rel (%p902) target = $region21
    $region20: #{lstm_forward.6} parent=1 // pred_region
      %v905 = vunpack.c.l.bf16 %v897
      %906 = vst [vmem:[%s3] sm:$0xff] %v905
    $region21: #{lstm_forward.6} parent=1 // pred_fallthru
      _
    // Predicated region
    $region22: #{lstm_forward.6} parent=1 // pred_check
      _
    $region23: #{lstm_forward.6} parent=1 // pred_check_branch
      %908 = sbr.rel (0) target = $region25
    $region24: #{lstm_forward.6} parent=1 // pred_region
      _
    $region25: #{lstm_forward.6} parent=1 // pred_fallthru
      _
    // Predicated region
    $region26: #{lstm_forward.6} parent=1 // pred_check
      _
    $region27: #{lstm_forward.6} parent=1 // pred_check_branch
      %910 = sbr.rel (0) target = $region29
    $region28: #{lstm_forward.6} parent=1 // pred_region
      _
    $region29: #{lstm_forward.6} parent=1 // pred_fallthru
      _
    // Predicated region
    $region30: #{lstm_forward.6} parent=1 // pred_check
      _
    $region31: #{lstm_forward.6} parent=1 // pred_check_branch
      %912 = sbr.rel (0) target = $region33
    $region32: #{lstm_forward.6} parent=1 // pred_region
      _
    $region33: #{lstm_forward.6} parent=1 // pred_fallthru
      _
    // Predicated region
    $region34: #{lstm_forward.6} parent=1 // pred_check
      _
    $region35: #{lstm_forward.6} parent=1 // pred_check_branch
      %914 = sbr.rel (0) target = $region37
    $region36: #{lstm_forward.6} parent=1 // pred_region
      _
    $region37: #{lstm_forward.6} parent=1 // pred_fallthru
      _
    %915 = vsyncpa [#allocation5], 1

</llo_original>
